<compile_context>
chip_gen: v6e
topology: v6e:2x2x1
jax: 0.10.0
libtpu: 0.0.40
codegen_flags: <defaults>
</compile_context>

<pallas_src>
import jax
import jax.numpy as jnp
import numpy as np
from jax.experimental import pallas as pl
from jax.experimental.pallas import tpu as pltpu

# ---- small, forward-consistent config -------------------------------------
BATCH = 2
BAR = 8          # DATA_CONFIG['bar']              (sequence length)
FEATURE = 32     # DATA_CONFIG['feature_size']
HIDDEN = 32      # MODEL_CONFIG['vae']['encoder']['hidden_m']


# ---------------------------------------------------------------------------
# Kernel
# ---------------------------------------------------------------------------
def vae_forward_kernel(
    mp_ref,                 # (T*B, 2F)  paired inputs: row block s = [x_s | x_{T-1-s}]
    eps_ref, y_ref,         # (B, H), (B, 1)
    enc_ref,                # (2F+2H+2, 8H)  [W_ix_pair ; W_hh_blockdiag ; b_enc ; b_out_tiled]
    mv_ref,                 # (2TH+1, 2H)    [hid2mean‖hid2var ; bias]
    lat_ref,                # (H+2, H)       [w_lat ; w_laty ; b_lat]
    dec_ref,                # (H+2, 3H+F)    [W_dec|w_out ; b_rzn|0 ; b_hn|0]
    melody_ref, stats_ref,  # (B, T*F), (B, 4H)
    h1_ref, mel_ref,        # scratch: (B, 2*T*H), (B, T*F)
):
    B, H = eps_ref.shape
    TB, F2 = mp_ref.shape
    T = TB // B
    F = F2 // 2
    f32 = jnp.float32

    # ---- encoder: fused bidirectional GRU, one chained matmul per step ----
    # Joint gate column layout (8H lanes): [r_f r_b | z_f z_b | xn_f xn_b | hn_f hn_b]
    w_ix = enc_ref[0:2 * F, :]                       # x-side weights, both directions
    w_hh = enc_ref[2 * F:2 * F + 2 * H, :]           # block-diagonal hidden weights
    b_enc = enc_ref[2 * F + 2 * H:2 * F + 2 * H + 1, :]

    # All x-side pre-activations in ONE off-chain matmul.
    gx = jnp.dot(mp_ref[...], w_ix, preferred_element_type=f32) + b_enc   # (T*B, 8H)

    h = jnp.zeros((B, 2 * H), f32)                   # joint hidden [h_f | h_b]
    for s in range(T):
        # the only chained ops per step: one matmul, one sigmoid, one tanh
        g = gx[s * B:(s + 1) * B, :] + jnp.dot(h, w_hh, preferred_element_type=f32)
        sg = jax.nn.sigmoid(g[:, 0:4 * H])
        r, zg = sg[:, 0:2 * H], sg[:, 2 * H:4 * H]
        n = jnp.tanh(g[:, 4 * H:6 * H] + r * g[:, 6 * H:8 * H])
        h = (1.0 - zg) * n + zg * h
        # scatter into the flattened bi-GRU slab [f0,b0,f1,b1,...] while the chain runs
        tb = T - 1 - s
        h1_ref[:, (2 * s) * H:(2 * s + 1) * H] = h[:, 0:H]              # fwd out, step s
        h1_ref[:, (2 * tb + 1) * H:(2 * tb + 2) * H] = h[:, H:2 * H]    # bwd out, step T-1-s

    # ---- hid2mean / hid2var as ONE (B, 2TH) x (2TH, 2H) matmul ----
    kmv = 2 * T * H
    muvar = (jnp.dot(h1_ref[...], mv_ref[0:kmv, :], preferred_element_type=f32)
             + mv_ref[kmv:kmv + 1, :])
    mu = muvar[:, 0:H]
    logvar = muvar[:, H:2 * H]

    # ---- reparameterize:  z = eps * exp(0.5 * logvar) + mu ----
    z = eps_ref[...] * jnp.exp(0.5 * logvar) + mu

    # ---- lat2hidm on label_z = [z | y]  (y row handled as a rank-1 outer add) ----
    md = (jnp.dot(z, lat_ref[0:H, :], preferred_element_type=f32)
          + y_ref[...] * lat_ref[H:H + 1, :] + lat_ref[H + 1:H + 2, :])

    # ---- decode: fresh single-step GRU with h0 = 0 each bar ----
    # h0 == 0  =>  hidden-side matmuls vanish (only bhn survives), h_new = (1-z)*n.
    # rhs = [W_ir | W_iz | W_in | w_out]: the chained matmul at step i also yields
    # outm(md_i) = melody row i-1 in lanes 3H:3H+F (discarded at i == 0).
    w_dec = dec_ref[0:H, :]                                    # (H, 3H+F)
    b_dec = jnp.broadcast_to(dec_ref[H:H + 1, :], (B, 3 * H + F))      # zeros on out lanes
    b_hn = jnp.broadcast_to(dec_ref[H + 1:H + 2, 0:H], (B, H))
    for i in range(T):
        gfull = jnp.dot(md, w_dec, preferred_element_type=f32) + b_dec
        if i >= 1:
            mel_ref[:, (i - 1) * F:i * F] = gfull[:, 3 * H:3 * H + F]
        sg = jax.nn.sigmoid(gfull[:, 0:2 * H])
        r, zg = sg[:, 0:H], sg[:, H:2 * H]
        n = jnp.tanh(gfull[:, 2 * H:3 * H] + r * b_hn)
        md = (1.0 - zg) * n
    gfin = jnp.dot(md, w_dec, preferred_element_type=f32)      # trailing outm for last bar
    mel_ref[:, (T - 1) * F:T * F] = gfin[:, 3 * H:3 * H + F]

    # ---- lane-dense output stores ----
    b_out = jnp.broadcast_to(enc_ref[2 * F + 2 * H + 1:2 * F + 2 * H + 2, :], (B, T * F))
    melody_ref[...] = jax.nn.sigmoid(mel_ref[...] + b_out)
    stats_ref[...] = jnp.concatenate(
        [mu, logvar, z, jnp.zeros((B, H), f32)], axis=1)       # padded to 4H = 128 lanes


# ---------------------------------------------------------------------------
# Host-side parameter packing (layout plumbing only)
# ---------------------------------------------------------------------------
def pack_params(p, bar=BAR, feature=FEATURE, hidden=HIDDEN):
    f32 = jnp.float32
    H, F, T = hidden, feature, bar
    assert 8 * H == T * F, "enc slab assumes 8*hidden == bar*feature lanes"

    def Z(r, c):
        return jnp.zeros((r, c), f32)

    wih_f, whh_f, bih_f, bhh_f = p["wih_f"], p["whh_f"], p["bih_f"], p["bhh_f"]
    wih_b, whh_b, bih_b, bhh_b = p["wih_b"], p["whh_b"], p["bih_b"], p["bhh_b"]

    # joint gate layout: [r_f r_b | z_f z_b | xn_f xn_b | hn_f hn_b]
    zF, zH = Z(F, H), Z(H, H)
    w_ix_pair = jnp.concatenate([
        jnp.concatenate([wih_f[0], zF, wih_f[1], zF, wih_f[2], zF, zF, zF], axis=1),
        jnp.concatenate([zF, wih_b[0], zF, wih_b[1], zF, wih_b[2], zF, zF], axis=1),
    ], axis=0)                                                           # (2F, 8H)
    w_hh_blk = jnp.concatenate([
        jnp.concatenate([whh_f[0], zH, whh_f[1], zH, zH, zH, whh_f[2], zH], axis=1),
        jnp.concatenate([zH, whh_b[0], zH, whh_b[1], zH, zH, zH, whh_b[2]], axis=1),
    ], axis=0)                                                           # (2H, 8H)
    b_enc = jnp.concatenate([bih_f[0] + bhh_f[0], bih_b[0] + bhh_b[0],
                             bih_f[1] + bhh_f[1], bih_b[1] + bhh_b[1],
                             bih_f[2], bih_b[2], bhh_f[2], bhh_b[2]], axis=1)   # (1, 8H)
    b_out_tiled = jnp.tile(p["bout"], (1, T))                            # (1, T*F)

    pp = {}
    pp["enc"] = jnp.concatenate([w_ix_pair, w_hh_blk, b_enc, b_out_tiled], axis=0)

    w_mv = jnp.concatenate([p["wmu"].reshape(2 * T * H, H),
                            p["wvar"].reshape(2 * T * H, H)], axis=1)    # (2TH, 2H)
    b_mv = jnp.concatenate([p["bmu"], p["bvar"]], axis=1)
    pp["mv"] = jnp.concatenate([w_mv, b_mv], axis=0)                     # (2TH+1, 2H)

    pp["lat"] = jnp.concatenate([p["wlat"], p["wlaty"], p["blat"]], axis=0)   # (H+2, H)

    w_dec_out = jnp.concatenate([p["wih_d"][0], p["wih_d"][1], p["wih_d"][2],
                                 p["wout"]], axis=1)                     # (H, 3H+F)
    b_dec = jnp.concatenate([p["bih_d"][0] + p["bhh_d"][0],
                             p["bih_d"][1] + p["bhh_d"][1],
                             p["bih_d"][2], Z(1, F)], axis=1)            # (1, 3H+F)
    b_hn = jnp.concatenate([p["bhh_d"][2], Z(1, 2 * H + F)], axis=1)     # (1, 3H+F)
    pp["dec"] = jnp.concatenate([w_dec_out, b_dec, b_hn], axis=0)        # (H+2, 3H+F)
    return pp


def vae_jazz_forward(m, eps, y, pp):
    """Returns (melody_sigmoid, mu, logvar, label_z) like the PyTorch forward."""
    B, T, F = m.shape
    H = eps.shape[1]
    # pair x_s (forward input) with x_{T-1-s} (backward input) for each fused step
    m_pair = jnp.concatenate([m, m[:, ::-1, :]], axis=-1)                # (B, T, 2F)
    m_pair = jnp.transpose(m_pair, (1, 0, 2)).reshape(T * B, 2 * F)      # (T*B, 2F)

    vmem = pl.BlockSpec(memory_space=pltpu.MemorySpace.VMEM)
    inputs = (m_pair, eps, y, pp["enc"], pp["mv"], pp["lat"], pp["dec"])
    melody_flat, stats = pl.pallas_call(
        vae_forward_kernel,
        out_shape=(jax.ShapeDtypeStruct((B, T * F), jnp.float32),
                   jax.ShapeDtypeStruct((B, 4 * H), jnp.float32)),
        in_specs=[vmem] * len(inputs),
        out_specs=(vmem, vmem),
        scratch_shapes=[pltpu.VMEM((B, 2 * T * H), jnp.float32),   # flattened bi-GRU outputs
                        pltpu.VMEM((B, T * F), jnp.float32)],      # pre-sigmoid melody slab
    )(*inputs)
    melody = melody_flat.reshape(B, T, F)
    mu = stats[:, 0:H]
    logvar = stats[:, H:2 * H]
    z = stats[:, 2 * H:3 * H]
    label_z = jnp.concatenate([z, y], axis=1)   # PyTorch forward returns label_z as `z`
    return melody, mu, logvar, label_z


def init_params(key, bar=BAR, feature=FEATURE, hidden=HIDDEN):
    """Deterministic synthetic parameters (unpacked, PyTorch-gate layout)."""
    ks = jax.random.split(key, 24)
    s = 0.1
    f32 = jnp.float32

    def n(k, shape):
        return (s * jax.random.normal(k, shape)).astype(f32)

    p = {}
    # encoder GRU, forward / backward: per-gate (in, H) / (H, H), biases (1, H)
    p["wih_f"] = n(ks[0], (3, feature, hidden)); p["whh_f"] = n(ks[1], (3, hidden, hidden))
    p["bih_f"] = n(ks[2], (3, 1, hidden));       p["bhh_f"] = n(ks[3], (3, 1, hidden))
    p["wih_b"] = n(ks[4], (3, feature, hidden)); p["whh_b"] = n(ks[5], (3, hidden, hidden))
    p["bih_b"] = n(ks[6], (3, 1, hidden));       p["bhh_b"] = n(ks[7], (3, 1, hidden))
    # decoder GRU (input size == hidden_m since Bi_de == 1)
    p["wih_d"] = n(ks[8], (3, hidden, hidden));  p["whh_d"] = n(ks[9], (3, hidden, hidden))
    p["bih_d"] = n(ks[10], (3, 1, hidden));      p["bhh_d"] = n(ks[11], (3, 1, hidden))
    # hid2mean / hid2var as 2*bar (H, H)^T blocks (block 2t = fwd_t, 2t+1 = bwd_t)
    p["wmu"] = n(ks[12], (2 * bar, hidden, hidden)); p["bmu"] = n(ks[13], (1, hidden))
    p["wvar"] = n(ks[14], (2 * bar, hidden, hidden)); p["bvar"] = n(ks[15], (1, hidden))
    # lat2hidm: (hidden_m + 1) -> hidden_m, split into the z rows and the y row
    p["wlat"] = n(ks[16], (hidden, hidden))
    p["wlaty"] = n(ks[17], (1, hidden))
    p["blat"] = n(ks[18], (1, hidden))
    # outm (pre-transposed)
    p["wout"] = n(ks[19], (hidden, feature));    p["bout"] = n(ks[20], (1, feature))
    return p


# ---------------------------------------------------------------------------
# Pure-JAX reference (unfused math, XLA path) for a correctness cross-check
# ---------------------------------------------------------------------------
def reference_forward(m, eps, y, p):
    B, T, F = m.shape
    H = eps.shape[1]

    def gru(x, h, wih, whh, bih, bhh):
        r = jax.nn.sigmoid(x @ wih[0] + bih[0] + h @ whh[0] + bhh[0])
        zg = jax.nn.sigmoid(x @ wih[1] + bih[1] + h @ whh[1] + bhh[1])
        n = jnp.tanh(x @ wih[2] + bih[2] + r * (h @ whh[2] + bhh[2]))
        return (1.0 - zg) * n + zg * h

    h = jnp.zeros((B, H)); outs_f = []
    for t in range(T):
        h = gru(m[:, t, :], h, p["wih_f"], p["whh_f"], p["bih_f"], p["bhh_f"])
        outs_f.append(h)
    h = jnp.zeros((B, H)); outs_b = [None] * T
    for t in range(T - 1, -1, -1):
        h = gru(m[:, t, :], h, p["wih_b"], p["whh_b"], p["bih_b"], p["bhh_b"])
        outs_b[t] = h

    mu = jnp.zeros((B, H)) + p["bmu"]
    logvar = jnp.zeros((B, H)) + p["bvar"]
    for t in range(T):
        mu = mu + outs_f[t] @ p["wmu"][2 * t] + outs_b[t] @ p["wmu"][2 * t + 1]
        logvar = logvar + outs_f[t] @ p["wvar"][2 * t] + outs_b[t] @ p["wvar"][2 * t + 1]

    z = eps * jnp.exp(0.5 * logvar) + mu
    label_z = jnp.concatenate([z, y], axis=1)
    wlat_full = jnp.concatenate([p["wlat"], p["wlaty"]], axis=0)   # (H+1, H)
    md = label_z @ wlat_full + p["blat"]
    rows = []
    for _ in range(T):
        md = gru(md, jnp.zeros((B, H)), p["wih_d"], p["whh_d"], p["bih_d"], p["bhh_d"])
        rows.append(jax.nn.sigmoid(md @ p["wout"] + p["bout"]))
    melody = jnp.stack(rows, axis=1)
    return melody, mu, logvar, label_z


# ---------------------------------------------------------------------------
if __name__ == "__main__":
    key = jax.random.PRNGKey(0)
    k_m, k_eps, k_y, k_p = jax.random.split(key, 4)

    m = jax.random.uniform(k_m, (BATCH, BAR, FEATURE), dtype=jnp.float32)
    eps = jax.random.normal(k_eps, (BATCH, HIDDEN), dtype=jnp.float32)
    y = jax.random.uniform(k_y, (BATCH, 1), dtype=jnp.float32)   # condition label
    params = init_params(k_p)
    packed = pack_params(params)

    fwd = jax.jit(vae_jazz_forward)
    melody, mu, logvar, label_z = fwd(m, eps, y, packed)
    jax.block_until_ready((melody, mu, logvar, label_z))

    # cross-check against the plain-JAX (unfused) reference
    ref = reference_forward(m, eps, y, params)
    for got, want in zip((melody, mu, logvar, label_z), ref):
        np.testing.assert_allclose(np.asarray(got), np.asarray(want),
                                   rtol=2e-3, atol=2e-3)

    assert melody.shape == (BATCH, BAR, FEATURE)
    assert mu.shape == (BATCH, HIDDEN) and logvar.shape == (BATCH, HIDDEN)
    assert label_z.shape == (BATCH, HIDDEN + 1)
    print("KERNEL_OK")
</pallas_src>

<mosaic_0001>
module attributes {stable_mosaic.version = 11 : i64} {
  func.func @vae_forward_kernel(%arg0: memref<16x64xf32, #tpu.memory_space<vmem>>, %arg1: memref<2x32xf32, #tpu.memory_space<vmem>>, %arg2: memref<2x1xf32, #tpu.memory_space<vmem>>, %arg3: memref<130x256xf32, #tpu.memory_space<vmem>>, %arg4: memref<513x64xf32, #tpu.memory_space<vmem>>, %arg5: memref<34x32xf32, #tpu.memory_space<vmem>>, %arg6: memref<34x128xf32, #tpu.memory_space<vmem>>, %arg7: memref<2x256xf32, #tpu.memory_space<vmem>>, %arg8: memref<2x128xf32, #tpu.memory_space<vmem>>, %arg9: memref<2x512xf32, #tpu.memory_space<vmem>>, %arg10: memref<2x256xf32, #tpu.memory_space<vmem>>) attributes {dimension_semantics = [], scalar_prefetch = 0 : i64, scratch_operands = 2 : i64, tpu.core_type = #tpu.core_type<tc>} {
    %c0 = arith.constant 0 : index
    %c0_0 = arith.constant 0 : index
    %0 = vector.load %arg3[%c0, %c0_0] : memref<130x256xf32, #tpu.memory_space<vmem>>, vector<64x256xf32>
    %c64 = arith.constant 64 : index
    %c0_1 = arith.constant 0 : index
    %1 = vector.load %arg3[%c64, %c0_1] : memref<130x256xf32, #tpu.memory_space<vmem>>, vector<64x256xf32>
    %c128 = arith.constant 128 : index
    %c0_2 = arith.constant 0 : index
    %2 = vector.load %arg3[%c128, %c0_2] : memref<130x256xf32, #tpu.memory_space<vmem>>, vector<1x256xf32>
    %c0_3 = arith.constant 0 : index
    %c0_4 = arith.constant 0 : index
    %3 = vector.load %arg0[%c0_3, %c0_4] : memref<16x64xf32, #tpu.memory_space<vmem>>, vector<16x64xf32>
    %cst = arith.constant dense<0.000000e+00> : vector<16x256xf32>
    %4 = tpu.matmul %3, %0, %cst {dimension_numbers = #tpu.dot_dimension_numbers<[1], [0], [0], [1], [0, 0, 1, 1], [], []>} : vector<16x64xf32>, vector<64x256xf32>, vector<16x256xf32> -> vector<16x256xf32>
    %5 = vector.broadcast %2 : vector<1x256xf32> to vector<16x256xf32>
    %6 = arith.addf %4, %5 : vector<16x256xf32>
    %cst_5 = arith.constant 0.000000e+00 : f32
    %7 = vector.broadcast %cst_5 : f32 to vector<2x64xf32>
    %8 = vector.extract_strided_slice %6 {offsets = [0, 0], sizes = [2, 256], strides = [1, 1]} : vector<16x256xf32> to vector<2x256xf32>
    %cst_6 = arith.constant dense<0.000000e+00> : vector<2x256xf32>
    %9 = tpu.matmul %7, %1, %cst_6 {dimension_numbers = #tpu.dot_dimension_numbers<[1], [0], [0], [1], [0, 0, 1, 1], [], []>} : vector<2x64xf32>, vector<64x256xf32>, vector<2x256xf32> -> vector<2x256xf32>
    %10 = arith.addf %8, %9 : vector<2x256xf32>
    %11 = vector.extract_strided_slice %10 {offsets = [0, 0], sizes = [2, 128], strides = [1, 1]} : vector<2x256xf32> to vector<2x128xf32>
    %12 = arith.negf %11 : vector<2x128xf32>
    %13 = math.exp %12 : vector<2x128xf32>
    %cst_7 = arith.constant 1.000000e+00 : f32
    %14 = vector.broadcast %cst_7 : f32 to vector<2x128xf32>
    %15 = arith.addf %14, %13 : vector<2x128xf32>
    %16 = arith.divf %14, %15 : vector<2x128xf32>
    %17 = vector.extract_strided_slice %16 {offsets = [0, 0], sizes = [2, 64], strides = [1, 1]} : vector<2x128xf32> to vector<2x64xf32>
    %18 = vector.extract_strided_slice %16 {offsets = [0, 64], sizes = [2, 64], strides = [1, 1]} : vector<2x128xf32> to vector<2x64xf32>
    %19 = vector.extract_strided_slice %10 {offsets = [0, 128], sizes = [2, 64], strides = [1, 1]} : vector<2x256xf32> to vector<2x64xf32>
    %20 = vector.extract_strided_slice %10 {offsets = [0, 192], sizes = [2, 64], strides = [1, 1]} : vector<2x256xf32> to vector<2x64xf32>
    %21 = arith.mulf %17, %20 : vector<2x64xf32>
    %22 = arith.addf %19, %21 : vector<2x64xf32>
    %23 = math.tanh %22 : vector<2x64xf32>
    %cst_8 = arith.constant 1.000000e+00 : f32
    %24 = vector.broadcast %cst_8 : f32 to vector<2x64xf32>
    %25 = arith.subf %24, %18 : vector<2x64xf32>
    %26 = arith.mulf %25, %23 : vector<2x64xf32>
    %27 = arith.mulf %18, %7 : vector<2x64xf32>
    %28 = arith.addf %26, %27 : vector<2x64xf32>
    %29 = vector.extract_strided_slice %28 {offsets = [0, 0], sizes = [2, 32], strides = [1, 1]} : vector<2x64xf32> to vector<2x32xf32>
    %c0_9 = arith.constant 0 : index
    %c0_10 = arith.constant 0 : index
    %30 = vector.load %arg9[%c0_9, %c0_10] : memref<2x512xf32, #tpu.memory_space<vmem>>, vector<2x32xf32>
    tpu.vector_store %arg9[%c0_9, %c0_10], %29 {strides = array<i32>} : memref<2x512xf32, #tpu.memory_space<vmem>>, vector<2x32xf32>,
    %31 = vector.extract_strided_slice %28 {offsets = [0, 32], sizes = [2, 32], strides = [1, 1]} : vector<2x64xf32> to vector<2x32xf32>
    %c0_11 = arith.constant 0 : index
    %c480 = arith.constant 480 : index
    %32 = vector.load %arg9[%c0_11, %c480] : memref<2x512xf32, #tpu.memory_space<vmem>>, vector<2x32xf32>
    tpu.vector_store %arg9[%c0_11, %c480], %31 {strides = array<i32>} : memref<2x512xf32, #tpu.memory_space<vmem>>, vector<2x32xf32>,
    %33 = vector.extract_strided_slice %6 {offsets = [2, 0], sizes = [2, 256], strides = [1, 1]} : vector<16x256xf32> to vector<2x256xf32>
    %cst_12 = arith.constant dense<0.000000e+00> : vector<2x256xf32>
    %34 = tpu.matmul %28, %1, %cst_12 {dimension_numbers = #tpu.dot_dimension_numbers<[1], [0], [0], [1], [0, 0, 1, 1], [], []>} : vector<2x64xf32>, vector<64x256xf32>, vector<2x256xf32> -> vector<2x256xf32>
    %35 = arith.addf %33, %34 : vector<2x256xf32>
    %36 = vector.extract_strided_slice %35 {offsets = [0, 0], sizes = [2, 128], strides = [1, 1]} : vector<2x256xf32> to vector<2x128xf32>
    %37 = arith.negf %36 : vector<2x128xf32>
    %38 = math.exp %37 : vector<2x128xf32>
    %cst_13 = arith.constant 1.000000e+00 : f32
    %39 = vector.broadcast %cst_13 : f32 to vector<2x128xf32>
    %40 = arith.addf %39, %38 : vector<2x128xf32>
    %41 = arith.divf %39, %40 : vector<2x128xf32>
    %42 = vector.extract_strided_slice %41 {offsets = [0, 0], sizes = [2, 64], strides = [1, 1]} : vector<2x128xf32> to vector<2x64xf32>
    %43 = vector.extract_strided_slice %41 {offsets = [0, 64], sizes = [2, 64], strides = [1, 1]} : vector<2x128xf32> to vector<2x64xf32>
    %44 = vector.extract_strided_slice %35 {offsets = [0, 128], sizes = [2, 64], strides = [1, 1]} : vector<2x256xf32> to vector<2x64xf32>
    %45 = vector.extract_strided_slice %35 {offsets = [0, 192], sizes = [2, 64], strides = [1, 1]} : vector<2x256xf32> to vector<2x64xf32>
    %46 = arith.mulf %42, %45 : vector<2x64xf32>
    %47 = arith.addf %44, %46 : vector<2x64xf32>
    %48 = math.tanh %47 : vector<2x64xf32>
    %cst_14 = arith.constant 1.000000e+00 : f32
    %49 = vector.broadcast %cst_14 : f32 to vector<2x64xf32>
    %50 = arith.subf %49, %43 : vector<2x64xf32>
    %51 = arith.mulf %50, %48 : vector<2x64xf32>
    %52 = arith.mulf %43, %28 : vector<2x64xf32>
    %53 = arith.addf %51, %52 : vector<2x64xf32>
    %54 = vector.extract_strided_slice %53 {offsets = [0, 0], sizes = [2, 32], strides = [1, 1]} : vector<2x64xf32> to vector<2x32xf32>
    %c0_15 = arith.constant 0 : index
    %c64_16 = arith.constant 64 : index
    %55 = vector.load %arg9[%c0_15, %c64_16] : memref<2x512xf32, #tpu.memory_space<vmem>>, vector<2x32xf32>
    tpu.vector_store %arg9[%c0_15, %c64_16], %54 {strides = array<i32>} : memref<2x512xf32, #tpu.memory_space<vmem>>, vector<2x32xf32>,
    %56 = vector.extract_strided_slice %53 {offsets = [0, 32], sizes = [2, 32], strides = [1, 1]} : vector<2x64xf32> to vector<2x32xf32>
    %c0_17 = arith.constant 0 : index
    %c416 = arith.constant 416 : index
    %57 = vector.load %arg9[%c0_17, %c416] : memref<2x512xf32, #tpu.memory_space<vmem>>, vector<2x32xf32>
    tpu.vector_store %arg9[%c0_17, %c416], %56 {strides = array<i32>} : memref<2x512xf32, #tpu.memory_space<vmem>>, vector<2x32xf32>,
    %58 = vector.extract_strided_slice %6 {offsets = [4, 0], sizes = [2, 256], strides = [1, 1]} : vector<16x256xf32> to vector<2x256xf32>
    %cst_18 = arith.constant dense<0.000000e+00> : vector<2x256xf32>
    %59 = tpu.matmul %53, %1, %cst_18 {dimension_numbers = #tpu.dot_dimension_numbers<[1], [0], [0], [1], [0, 0, 1, 1], [], []>} : vector<2x64xf32>, vector<64x256xf32>, vector<2x256xf32> -> vector<2x256xf32>
    %60 = arith.addf %58, %59 : vector<2x256xf32>
    %61 = vector.extract_strided_slice %60 {offsets = [0, 0], sizes = [2, 128], strides = [1, 1]} : vector<2x256xf32> to vector<2x128xf32>
    %62 = arith.negf %61 : vector<2x128xf32>
    %63 = math.exp %62 : vector<2x128xf32>
    %cst_19 = arith.constant 1.000000e+00 : f32
    %64 = vector.broadcast %cst_19 : f32 to vector<2x128xf32>
    %65 = arith.addf %64, %63 : vector<2x128xf32>
    %66 = arith.divf %64, %65 : vector<2x128xf32>
    %67 = vector.extract_strided_slice %66 {offsets = [0, 0], sizes = [2, 64], strides = [1, 1]} : vector<2x128xf32> to vector<2x64xf32>
    %68 = vector.extract_strided_slice %66 {offsets = [0, 64], sizes = [2, 64], strides = [1, 1]} : vector<2x128xf32> to vector<2x64xf32>
    %69 = vector.extract_strided_slice %60 {offsets = [0, 128], sizes = [2, 64], strides = [1, 1]} : vector<2x256xf32> to vector<2x64xf32>
    %70 = vector.extract_strided_slice %60 {offsets = [0, 192], sizes = [2, 64], strides = [1, 1]} : vector<2x256xf32> to vector<2x64xf32>
    %71 = arith.mulf %67, %70 : vector<2x64xf32>
    %72 = arith.addf %69, %71 : vector<2x64xf32>
    %73 = math.tanh %72 : vector<2x64xf32>
    %cst_20 = arith.constant 1.000000e+00 : f32
    %74 = vector.broadcast %cst_20 : f32 to vector<2x64xf32>
    %75 = arith.subf %74, %68 : vector<2x64xf32>
    %76 = arith.mulf %75, %73 : vector<2x64xf32>
    %77 = arith.mulf %68, %53 : vector<2x64xf32>
    %78 = arith.addf %76, %77 : vector<2x64xf32>
    %79 = vector.extract_strided_slice %78 {offsets = [0, 0], sizes = [2, 32], strides = [1, 1]} : vector<2x64xf32> to vector<2x32xf32>
    %c0_21 = arith.constant 0 : index
    %c128_22 = arith.constant 128 : index
    %80 = vector.load %arg9[%c0_21, %c128_22] : memref<2x512xf32, #tpu.memory_space<vmem>>, vector<2x32xf32>
    tpu.vector_store %arg9[%c0_21, %c128_22], %79 {strides = array<i32>} : memref<2x512xf32, #tpu.memory_space<vmem>>, vector<2x32xf32>,
    %81 = vector.extract_strided_slice %78 {offsets = [0, 32], sizes = [2, 32], strides = [1, 1]} : vector<2x64xf32> to vector<2x32xf32>
    %c0_23 = arith.constant 0 : index
    %c352 = arith.constant 352 : index
    %82 = vector.load %arg9[%c0_23, %c352] : memref<2x512xf32, #tpu.memory_space<vmem>>, vector<2x32xf32>
    tpu.vector_store %arg9[%c0_23, %c352], %81 {strides = array<i32>} : memref<2x512xf32, #tpu.memory_space<vmem>>, vector<2x32xf32>,
    %83 = vector.extract_strided_slice %6 {offsets = [6, 0], sizes = [2, 256], strides = [1, 1]} : vector<16x256xf32> to vector<2x256xf32>
    %cst_24 = arith.constant dense<0.000000e+00> : vector<2x256xf32>
    %84 = tpu.matmul %78, %1, %cst_24 {dimension_numbers = #tpu.dot_dimension_numbers<[1], [0], [0], [1], [0, 0, 1, 1], [], []>} : vector<2x64xf32>, vector<64x256xf32>, vector<2x256xf32> -> vector<2x256xf32>
    %85 = arith.addf %83, %84 : vector<2x256xf32>
    %86 = vector.extract_strided_slice %85 {offsets = [0, 0], sizes = [2, 128], strides = [1, 1]} : vector<2x256xf32> to vector<2x128xf32>
    %87 = arith.negf %86 : vector<2x128xf32>
    %88 = math.exp %87 : vector<2x128xf32>
    %cst_25 = arith.constant 1.000000e+00 : f32
    %89 = vector.broadcast %cst_25 : f32 to vector<2x128xf32>
    %90 = arith.addf %89, %88 : vector<2x128xf32>
    %91 = arith.divf %89, %90 : vector<2x128xf32>
    %92 = vector.extract_strided_slice %91 {offsets = [0, 0], sizes = [2, 64], strides = [1, 1]} : vector<2x128xf32> to vector<2x64xf32>
    %93 = vector.extract_strided_slice %91 {offsets = [0, 64], sizes = [2, 64], strides = [1, 1]} : vector<2x128xf32> to vector<2x64xf32>
    %94 = vector.extract_strided_slice %85 {offsets = [0, 128], sizes = [2, 64], strides = [1, 1]} : vector<2x256xf32> to vector<2x64xf32>
    %95 = vector.extract_strided_slice %85 {offsets = [0, 192], sizes = [2, 64], strides = [1, 1]} : vector<2x256xf32> to vector<2x64xf32>
    %96 = arith.mulf %92, %95 : vector<2x64xf32>
    %97 = arith.addf %94, %96 : vector<2x64xf32>
    %98 = math.tanh %97 : vector<2x64xf32>
    %cst_26 = arith.constant 1.000000e+00 : f32
    %99 = vector.broadcast %cst_26 : f32 to vector<2x64xf32>
    %100 = arith.subf %99, %93 : vector<2x64xf32>
    %101 = arith.mulf %100, %98 : vector<2x64xf32>
    %102 = arith.mulf %93, %78 : vector<2x64xf32>
    %103 = arith.addf %101, %102 : vector<2x64xf32>
    %104 = vector.extract_strided_slice %103 {offsets = [0, 0], sizes = [2, 32], strides = [1, 1]} : vector<2x64xf32> to vector<2x32xf32>
    %c0_27 = arith.constant 0 : index
    %c192 = arith.constant 192 : index
    %105 = vector.load %arg9[%c0_27, %c192] : memref<2x512xf32, #tpu.memory_space<vmem>>, vector<2x32xf32>
    tpu.vector_store %arg9[%c0_27, %c192], %104 {strides = array<i32>} : memref<2x512xf32, #tpu.memory_space<vmem>>, vector<2x32xf32>,
    %106 = vector.extract_strided_slice %103 {offsets = [0, 32], sizes = [2, 32], strides = [1, 1]} : vector<2x64xf32> to vector<2x32xf32>
    %c0_28 = arith.constant 0 : index
    %c288 = arith.constant 288 : index
    %107 = vector.load %arg9[%c0_28, %c288] : memref<2x512xf32, #tpu.memory_space<vmem>>, vector<2x32xf32>
    tpu.vector_store %arg9[%c0_28, %c288], %106 {strides = array<i32>} : memref<2x512xf32, #tpu.memory_space<vmem>>, vector<2x32xf32>,
    %108 = vector.extract_strided_slice %6 {offsets = [8, 0], sizes = [2, 256], strides = [1, 1]} : vector<16x256xf32> to vector<2x256xf32>
    %cst_29 = arith.constant dense<0.000000e+00> : vector<2x256xf32>
    %109 = tpu.matmul %103, %1, %cst_29 {dimension_numbers = #tpu.dot_dimension_numbers<[1], [0], [0], [1], [0, 0, 1, 1], [], []>} : vector<2x64xf32>, vector<64x256xf32>, vector<2x256xf32> -> vector<2x256xf32>
    %110 = arith.addf %108, %109 : vector<2x256xf32>
    %111 = vector.extract_strided_slice %110 {offsets = [0, 0], sizes = [2, 128], strides = [1, 1]} : vector<2x256xf32> to vector<2x128xf32>
    %112 = arith.negf %111 : vector<2x128xf32>
    %113 = math.exp %112 : vector<2x128xf32>
    %cst_30 = arith.constant 1.000000e+00 : f32
    %114 = vector.broadcast %cst_30 : f32 to vector<2x128xf32>
    %115 = arith.addf %114, %113 : vector<2x128xf32>
    %116 = arith.divf %114, %115 : vector<2x128xf32>
    %117 = vector.extract_strided_slice %116 {offsets = [0, 0], sizes = [2, 64], strides = [1, 1]} : vector<2x128xf32> to vector<2x64xf32>
    %118 = vector.extract_strided_slice %116 {offsets = [0, 64], sizes = [2, 64], strides = [1, 1]} : vector<2x128xf32> to vector<2x64xf32>
    %119 = vector.extract_strided_slice %110 {offsets = [0, 128], sizes = [2, 64], strides = [1, 1]} : vector<2x256xf32> to vector<2x64xf32>
    %120 = vector.extract_strided_slice %110 {offsets = [0, 192], sizes = [2, 64], strides = [1, 1]} : vector<2x256xf32> to vector<2x64xf32>
    %121 = arith.mulf %117, %120 : vector<2x64xf32>
    %122 = arith.addf %119, %121 : vector<2x64xf32>
    %123 = math.tanh %122 : vector<2x64xf32>
    %cst_31 = arith.constant 1.000000e+00 : f32
    %124 = vector.broadcast %cst_31 : f32 to vector<2x64xf32>
    %125 = arith.subf %124, %118 : vector<2x64xf32>
    %126 = arith.mulf %125, %123 : vector<2x64xf32>
    %127 = arith.mulf %118, %103 : vector<2x64xf32>
    %128 = arith.addf %126, %127 : vector<2x64xf32>
    %129 = vector.extract_strided_slice %128 {offsets = [0, 0], sizes = [2, 32], strides = [1, 1]} : vector<2x64xf32> to vector<2x32xf32>
    %c0_32 = arith.constant 0 : index
    %c256 = arith.constant 256 : index
    %130 = vector.load %arg9[%c0_32, %c256] : memref<2x512xf32, #tpu.memory_space<vmem>>, vector<2x32xf32>
    tpu.vector_store %arg9[%c0_32, %c256], %129 {strides = array<i32>} : memref<2x512xf32, #tpu.memory_space<vmem>>, vector<2x32xf32>,
    %131 = vector.extract_strided_slice %128 {offsets = [0, 32], sizes = [2, 32], strides = [1, 1]} : vector<2x64xf32> to vector<2x32xf32>
    %c0_33 = arith.constant 0 : index
    %c224 = arith.constant 224 : index
    %132 = vector.load %arg9[%c0_33, %c224] : memref<2x512xf32, #tpu.memory_space<vmem>>, vector<2x32xf32>
    tpu.vector_store %arg9[%c0_33, %c224], %131 {strides = array<i32>} : memref<2x512xf32, #tpu.memory_space<vmem>>, vector<2x32xf32>,
    %133 = vector.extract_strided_slice %6 {offsets = [10, 0], sizes = [2, 256], strides = [1, 1]} : vector<16x256xf32> to vector<2x256xf32>
    %cst_34 = arith.constant dense<0.000000e+00> : vector<2x256xf32>
    %134 = tpu.matmul %128, %1, %cst_34 {dimension_numbers = #tpu.dot_dimension_numbers<[1], [0], [0], [1], [0, 0, 1, 1], [], []>} : vector<2x64xf32>, vector<64x256xf32>, vector<2x256xf32> -> vector<2x256xf32>
    %135 = arith.addf %133, %134 : vector<2x256xf32>
    %136 = vector.extract_strided_slice %135 {offsets = [0, 0], sizes = [2, 128], strides = [1, 1]} : vector<2x256xf32> to vector<2x128xf32>
    %137 = arith.negf %136 : vector<2x128xf32>
    %138 = math.exp %137 : vector<2x128xf32>
    %cst_35 = arith.constant 1.000000e+00 : f32
    %139 = vector.broadcast %cst_35 : f32 to vector<2x128xf32>
    %140 = arith.addf %139, %138 : vector<2x128xf32>
    %141 = arith.divf %139, %140 : vector<2x128xf32>
    %142 = vector.extract_strided_slice %141 {offsets = [0, 0], sizes = [2, 64], strides = [1, 1]} : vector<2x128xf32> to vector<2x64xf32>
    %143 = vector.extract_strided_slice %141 {offsets = [0, 64], sizes = [2, 64], strides = [1, 1]} : vector<2x128xf32> to vector<2x64xf32>
    %144 = vector.extract_strided_slice %135 {offsets = [0, 128], sizes = [2, 64], strides = [1, 1]} : vector<2x256xf32> to vector<2x64xf32>
    %145 = vector.extract_strided_slice %135 {offsets = [0, 192], sizes = [2, 64], strides = [1, 1]} : vector<2x256xf32> to vector<2x64xf32>
    %146 = arith.mulf %142, %145 : vector<2x64xf32>
    %147 = arith.addf %144, %146 : vector<2x64xf32>
    %148 = math.tanh %147 : vector<2x64xf32>
    %cst_36 = arith.constant 1.000000e+00 : f32
    %149 = vector.broadcast %cst_36 : f32 to vector<2x64xf32>
    %150 = arith.subf %149, %143 : vector<2x64xf32>
    %151 = arith.mulf %150, %148 : vector<2x64xf32>
    %152 = arith.mulf %143, %128 : vector<2x64xf32>
    %153 = arith.addf %151, %152 : vector<2x64xf32>
    %154 = vector.extract_strided_slice %153 {offsets = [0, 0], sizes = [2, 32], strides = [1, 1]} : vector<2x64xf32> to vector<2x32xf32>
    %c0_37 = arith.constant 0 : index
    %c320 = arith.constant 320 : index
    %155 = vector.load %arg9[%c0_37, %c320] : memref<2x512xf32, #tpu.memory_space<vmem>>, vector<2x32xf32>
    tpu.vector_store %arg9[%c0_37, %c320], %154 {strides = array<i32>} : memref<2x512xf32, #tpu.memory_space<vmem>>, vector<2x32xf32>,
    %156 = vector.extract_strided_slice %153 {offsets = [0, 32], sizes = [2, 32], strides = [1, 1]} : vector<2x64xf32> to vector<2x32xf32>
    %c0_38 = arith.constant 0 : index
    %c160 = arith.constant 160 : index
    %157 = vector.load %arg9[%c0_38, %c160] : memref<2x512xf32, #tpu.memory_space<vmem>>, vector<2x32xf32>
    tpu.vector_store %arg9[%c0_38, %c160], %156 {strides = array<i32>} : memref<2x512xf32, #tpu.memory_space<vmem>>, vector<2x32xf32>,
    %158 = vector.extract_strided_slice %6 {offsets = [12, 0], sizes = [2, 256], strides = [1, 1]} : vector<16x256xf32> to vector<2x256xf32>
    %cst_39 = arith.constant dense<0.000000e+00> : vector<2x256xf32>
    %159 = tpu.matmul %153, %1, %cst_39 {dimension_numbers = #tpu.dot_dimension_numbers<[1], [0], [0], [1], [0, 0, 1, 1], [], []>} : vector<2x64xf32>, vector<64x256xf32>, vector<2x256xf32> -> vector<2x256xf32>
    %160 = arith.addf %158, %159 : vector<2x256xf32>
    %161 = vector.extract_strided_slice %160 {offsets = [0, 0], sizes = [2, 128], strides = [1, 1]} : vector<2x256xf32> to vector<2x128xf32>
    %162 = arith.negf %161 : vector<2x128xf32>
    %163 = math.exp %162 : vector<2x128xf32>
    %cst_40 = arith.constant 1.000000e+00 : f32
    %164 = vector.broadcast %cst_40 : f32 to vector<2x128xf32>
    %165 = arith.addf %164, %163 : vector<2x128xf32>
    %166 = arith.divf %164, %165 : vector<2x128xf32>
    %167 = vector.extract_strided_slice %166 {offsets = [0, 0], sizes = [2, 64], strides = [1, 1]} : vector<2x128xf32> to vector<2x64xf32>
    %168 = vector.extract_strided_slice %166 {offsets = [0, 64], sizes = [2, 64], strides = [1, 1]} : vector<2x128xf32> to vector<2x64xf32>
    %169 = vector.extract_strided_slice %160 {offsets = [0, 128], sizes = [2, 64], strides = [1, 1]} : vector<2x256xf32> to vector<2x64xf32>
    %170 = vector.extract_strided_slice %160 {offsets = [0, 192], sizes = [2, 64], strides = [1, 1]} : vector<2x256xf32> to vector<2x64xf32>
    %171 = arith.mulf %167, %170 : vector<2x64xf32>
    %172 = arith.addf %169, %171 : vector<2x64xf32>
    %173 = math.tanh %172 : vector<2x64xf32>
    %cst_41 = arith.constant 1.000000e+00 : f32
    %174 = vector.broadcast %cst_41 : f32 to vector<2x64xf32>
    %175 = arith.subf %174, %168 : vector<2x64xf32>
    %176 = arith.mulf %175, %173 : vector<2x64xf32>
    %177 = arith.mulf %168, %153 : vector<2x64xf32>
    %178 = arith.addf %176, %177 : vector<2x64xf32>
    %179 = vector.extract_strided_slice %178 {offsets = [0, 0], sizes = [2, 32], strides = [1, 1]} : vector<2x64xf32> to vector<2x32xf32>
    %c0_42 = arith.constant 0 : index
    %c384 = arith.constant 384 : index
    %180 = vector.load %arg9[%c0_42, %c384] : memref<2x512xf32, #tpu.memory_space<vmem>>, vector<2x32xf32>
    tpu.vector_store %arg9[%c0_42, %c384], %179 {strides = array<i32>} : memref<2x512xf32, #tpu.memory_space<vmem>>, vector<2x32xf32>,
    %181 = vector.extract_strided_slice %178 {offsets = [0, 32], sizes = [2, 32], strides = [1, 1]} : vector<2x64xf32> to vector<2x32xf32>
    %c0_43 = arith.constant 0 : index
    %c96 = arith.constant 96 : index
    %182 = vector.load %arg9[%c0_43, %c96] : memref<2x512xf32, #tpu.memory_space<vmem>>, vector<2x32xf32>
    tpu.vector_store %arg9[%c0_43, %c96], %181 {strides = array<i32>} : memref<2x512xf32, #tpu.memory_space<vmem>>, vector<2x32xf32>,
    %183 = vector.extract_strided_slice %6 {offsets = [14, 0], sizes = [2, 256], strides = [1, 1]} : vector<16x256xf32> to vector<2x256xf32>
    %cst_44 = arith.constant dense<0.000000e+00> : vector<2x256xf32>
    %184 = tpu.matmul %178, %1, %cst_44 {dimension_numbers = #tpu.dot_dimension_numbers<[1], [0], [0], [1], [0, 0, 1, 1], [], []>} : vector<2x64xf32>, vector<64x256xf32>, vector<2x256xf32> -> vector<2x256xf32>
    %185 = arith.addf %183, %184 : vector<2x256xf32>
    %186 = vector.extract_strided_slice %185 {offsets = [0, 0], sizes = [2, 128], strides = [1, 1]} : vector<2x256xf32> to vector<2x128xf32>
    %187 = arith.negf %186 : vector<2x128xf32>
    %188 = math.exp %187 : vector<2x128xf32>
    %cst_45 = arith.constant 1.000000e+00 : f32
    %189 = vector.broadcast %cst_45 : f32 to vector<2x128xf32>
    %190 = arith.addf %189, %188 : vector<2x128xf32>
    %191 = arith.divf %189, %190 : vector<2x128xf32>
    %192 = vector.extract_strided_slice %191 {offsets = [0, 0], sizes = [2, 64], strides = [1, 1]} : vector<2x128xf32> to vector<2x64xf32>
    %193 = vector.extract_strided_slice %191 {offsets = [0, 64], sizes = [2, 64], strides = [1, 1]} : vector<2x128xf32> to vector<2x64xf32>
    %194 = vector.extract_strided_slice %185 {offsets = [0, 128], sizes = [2, 64], strides = [1, 1]} : vector<2x256xf32> to vector<2x64xf32>
    %195 = vector.extract_strided_slice %185 {offsets = [0, 192], sizes = [2, 64], strides = [1, 1]} : vector<2x256xf32> to vector<2x64xf32>
    %196 = arith.mulf %192, %195 : vector<2x64xf32>
    %197 = arith.addf %194, %196 : vector<2x64xf32>
    %198 = math.tanh %197 : vector<2x64xf32>
    %cst_46 = arith.constant 1.000000e+00 : f32
    %199 = vector.broadcast %cst_46 : f32 to vector<2x64xf32>
    %200 = arith.subf %199, %193 : vector<2x64xf32>
    %201 = arith.mulf %200, %198 : vector<2x64xf32>
    %202 = arith.mulf %193, %178 : vector<2x64xf32>
    %203 = arith.addf %201, %202 : vector<2x64xf32>
    %204 = vector.extract_strided_slice %203 {offsets = [0, 0], sizes = [2, 32], strides = [1, 1]} : vector<2x64xf32> to vector<2x32xf32>
    %c0_47 = arith.constant 0 : index
    %c448 = arith.constant 448 : index
    %205 = vector.load %arg9[%c0_47, %c448] : memref<2x512xf32, #tpu.memory_space<vmem>>, vector<2x32xf32>
    tpu.vector_store %arg9[%c0_47, %c448], %204 {strides = array<i32>} : memref<2x512xf32, #tpu.memory_space<vmem>>, vector<2x32xf32>,
    %206 = vector.extract_strided_slice %203 {offsets = [0, 32], sizes = [2, 32], strides = [1, 1]} : vector<2x64xf32> to vector<2x32xf32>
    %c0_48 = arith.constant 0 : index
    %c32 = arith.constant 32 : index
    %207 = vector.load %arg9[%c0_48, %c32] : memref<2x512xf32, #tpu.memory_space<vmem>>, vector<2x32xf32>
    tpu.vector_store %arg9[%c0_48, %c32], %206 {strides = array<i32>} : memref<2x512xf32, #tpu.memory_space<vmem>>, vector<2x32xf32>,
    %c0_49 = arith.constant 0 : index
    %c0_50 = arith.constant 0 : index
    %208 = vector.load %arg9[%c0_49, %c0_50] : memref<2x512xf32, #tpu.memory_space<vmem>>, vector<2x512xf32>
    %c0_51 = arith.constant 0 : index
    %c0_52 = arith.constant 0 : index
    %209 = vector.load %arg4[%c0_51, %c0_52] : memref<513x64xf32, #tpu.memory_space<vmem>>, vector<512x64xf32>
    %cst_53 = arith.constant dense<0.000000e+00> : vector<2x64xf32>
    %210 = tpu.matmul %208, %209, %cst_53 {dimension_numbers = #tpu.dot_dimension_numbers<[1], [0], [0], [1], [0, 0, 1, 1], [], []>} : vector<2x512xf32>, vector<512x64xf32>, vector<2x64xf32> -> vector<2x64xf32>
    %c512 = arith.constant 512 : index
    %c0_54 = arith.constant 0 : index
    %211 = vector.load %arg4[%c512, %c0_54] : memref<513x64xf32, #tpu.memory_space<vmem>>, vector<1x64xf32>
    %212 = vector.broadcast %211 : vector<1x64xf32> to vector<2x64xf32>
    %213 = arith.addf %210, %212 : vector<2x64xf32>
    %214 = vector.extract_strided_slice %213 {offsets = [0, 0], sizes = [2, 32], strides = [1, 1]} : vector<2x64xf32> to vector<2x32xf32>
    %215 = vector.extract_strided_slice %213 {offsets = [0, 32], sizes = [2, 32], strides = [1, 1]} : vector<2x64xf32> to vector<2x32xf32>
    %c0_55 = arith.constant 0 : index
    %c0_56 = arith.constant 0 : index
    %216 = vector.load %arg1[%c0_55, %c0_56] : memref<2x32xf32, #tpu.memory_space<vmem>>, vector<2x32xf32>
    %cst_57 = arith.constant 5.000000e-01 : f32
    %217 = vector.broadcast %cst_57 : f32 to vector<2x32xf32>
    %218 = arith.mulf %217, %215 : vector<2x32xf32>
    %219 = math.exp %218 : vector<2x32xf32>
    %220 = arith.mulf %216, %219 : vector<2x32xf32>
    %221 = arith.addf %220, %214 : vector<2x32xf32>
    %c0_58 = arith.constant 0 : index
    %c0_59 = arith.constant 0 : index
    %222 = vector.load %arg5[%c0_58, %c0_59] : memref<34x32xf32, #tpu.memory_space<vmem>>, vector<32x32xf32>
    %cst_60 = arith.constant dense<0.000000e+00> : vector<2x32xf32>
    %223 = tpu.matmul %221, %222, %cst_60 {dimension_numbers = #tpu.dot_dimension_numbers<[1], [0], [0], [1], [0, 0, 1, 1], [], []>} : vector<2x32xf32>, vector<32x32xf32>, vector<2x32xf32> -> vector<2x32xf32>
    %c0_61 = arith.constant 0 : index
    %c0_62 = arith.constant 0 : index
    %224 = vector.load %arg2[%c0_61, %c0_62] : memref<2x1xf32, #tpu.memory_space<vmem>>, vector<2x1xf32>
    %c32_63 = arith.constant 32 : index
    %c0_64 = arith.constant 0 : index
    %225 = vector.load %arg5[%c32_63, %c0_64] : memref<34x32xf32, #tpu.memory_space<vmem>>, vector<1x32xf32>
    %226 = vector.broadcast %224 : vector<2x1xf32> to vector<2x32xf32>
    %227 = vector.broadcast %225 : vector<1x32xf32> to vector<2x32xf32>
    %228 = arith.mulf %226, %227 : vector<2x32xf32>
    %229 = arith.addf %223, %228 : vector<2x32xf32>
    %c33 = arith.constant 33 : index
    %c0_65 = arith.constant 0 : index
    %230 = vector.load %arg5[%c33, %c0_65] : memref<34x32xf32, #tpu.memory_space<vmem>>, vector<1x32xf32>
    %231 = vector.broadcast %230 : vector<1x32xf32> to vector<2x32xf32>
    %232 = arith.addf %229, %231 : vector<2x32xf32>
    %c0_66 = arith.constant 0 : index
    %c0_67 = arith.constant 0 : index
    %233 = vector.load %arg6[%c0_66, %c0_67] : memref<34x128xf32, #tpu.memory_space<vmem>>, vector<32x128xf32>
    %c32_68 = arith.constant 32 : index
    %c0_69 = arith.constant 0 : index
    %234 = vector.load %arg6[%c32_68, %c0_69] : memref<34x128xf32, #tpu.memory_space<vmem>>, vector<1x128xf32>
    %235 = vector.shape_cast %234 : vector<1x128xf32> to vector<1x128xf32>
    %236 = vector.broadcast %235 : vector<1x128xf32> to vector<2x128xf32>
    %c33_70 = arith.constant 33 : index
    %c0_71 = arith.constant 0 : index
    %237 = vector.load %arg6[%c33_70, %c0_71] : memref<34x128xf32, #tpu.memory_space<vmem>>, vector<1x32xf32>
    %238 = vector.shape_cast %237 : vector<1x32xf32> to vector<1x32xf32>
    %239 = vector.broadcast %238 : vector<1x32xf32> to vector<2x32xf32>
    %cst_72 = arith.constant dense<0.000000e+00> : vector<2x128xf32>
    %240 = tpu.matmul %232, %233, %cst_72 {dimension_numbers = #tpu.dot_dimension_numbers<[1], [0], [0], [1], [0, 0, 1, 1], [], []>} : vector<2x32xf32>, vector<32x128xf32>, vector<2x128xf32> -> vector<2x128xf32>
    %241 = arith.addf %240, %236 : vector<2x128xf32>
    %242 = vector.extract_strided_slice %241 {offsets = [0, 0], sizes = [2, 64], strides = [1, 1]} : vector<2x128xf32> to vector<2x64xf32>
    %243 = arith.negf %242 : vector<2x64xf32>
    %244 = math.exp %243 : vector<2x64xf32>
    %cst_73 = arith.constant 1.000000e+00 : f32
    %245 = vector.broadcast %cst_73 : f32 to vector<2x64xf32>
    %246 = arith.addf %245, %244 : vector<2x64xf32>
    %247 = arith.divf %245, %246 : vector<2x64xf32>
    %248 = vector.extract_strided_slice %247 {offsets = [0, 0], sizes = [2, 32], strides = [1, 1]} : vector<2x64xf32> to vector<2x32xf32>
    %249 = vector.extract_strided_slice %247 {offsets = [0, 32], sizes = [2, 32], strides = [1, 1]} : vector<2x64xf32> to vector<2x32xf32>
    %250 = vector.extract_strided_slice %241 {offsets = [0, 64], sizes = [2, 32], strides = [1, 1]} : vector<2x128xf32> to vector<2x32xf32>
    %251 = arith.mulf %248, %239 : vector<2x32xf32>
    %252 = arith.addf %250, %251 : vector<2x32xf32>
    %253 = math.tanh %252 : vector<2x32xf32>
    %cst_74 = arith.constant 1.000000e+00 : f32
    %254 = vector.broadcast %cst_74 : f32 to vector<2x32xf32>
    %255 = arith.subf %254, %249 : vector<2x32xf32>
    %256 = arith.mulf %255, %253 : vector<2x32xf32>
    %cst_75 = arith.constant dense<0.000000e+00> : vector<2x128xf32>
    %257 = tpu.matmul %256, %233, %cst_75 {dimension_numbers = #tpu.dot_dimension_numbers<[1], [0], [0], [1], [0, 0, 1, 1], [], []>} : vector<2x32xf32>, vector<32x128xf32>, vector<2x128xf32> -> vector<2x128xf32>
    %258 = arith.addf %257, %236 : vector<2x128xf32>
    %259 = vector.extract_strided_slice %258 {offsets = [0, 96], sizes = [2, 32], strides = [1, 1]} : vector<2x128xf32> to vector<2x32xf32>
    %c0_76 = arith.constant 0 : index
    %c0_77 = arith.constant 0 : index
    %260 = vector.load %arg10[%c0_76, %c0_77] : memref<2x256xf32, #tpu.memory_space<vmem>>, vector<2x32xf32>
    tpu.vector_store %arg10[%c0_76, %c0_77], %259 {strides = array<i32>} : memref<2x256xf32, #tpu.memory_space<vmem>>, vector<2x32xf32>,
    %261 = vector.extract_strided_slice %258 {offsets = [0, 0], sizes = [2, 64], strides = [1, 1]} : vector<2x128xf32> to vector<2x64xf32>
    %262 = arith.negf %261 : vector<2x64xf32>
    %263 = math.exp %262 : vector<2x64xf32>
    %cst_78 = arith.constant 1.000000e+00 : f32
    %264 = vector.broadcast %cst_78 : f32 to vector<2x64xf32>
    %265 = arith.addf %264, %263 : vector<2x64xf32>
    %266 = arith.divf %264, %265 : vector<2x64xf32>
    %267 = vector.extract_strided_slice %266 {offsets = [0, 0], sizes = [2, 32], strides = [1, 1]} : vector<2x64xf32> to vector<2x32xf32>
    %268 = vector.extract_strided_slice %266 {offsets = [0, 32], sizes = [2, 32], strides = [1, 1]} : vector<2x64xf32> to vector<2x32xf32>
    %269 = vector.extract_strided_slice %258 {offsets = [0, 64], sizes = [2, 32], strides = [1, 1]} : vector<2x128xf32> to vector<2x32xf32>
    %270 = arith.mulf %267, %239 : vector<2x32xf32>
    %271 = arith.addf %269, %270 : vector<2x32xf32>
    %272 = math.tanh %271 : vector<2x32xf32>
    %cst_79 = arith.constant 1.000000e+00 : f32
    %273 = vector.broadcast %cst_79 : f32 to vector<2x32xf32>
    %274 = arith.subf %273, %268 : vector<2x32xf32>
    %275 = arith.mulf %274, %272 : vector<2x32xf32>
    %cst_80 = arith.constant dense<0.000000e+00> : vector<2x128xf32>
    %276 = tpu.matmul %275, %233, %cst_80 {dimension_numbers = #tpu.dot_dimension_numbers<[1], [0], [0], [1], [0, 0, 1, 1], [], []>} : vector<2x32xf32>, vector<32x128xf32>, vector<2x128xf32> -> vector<2x128xf32>
    %277 = arith.addf %276, %236 : vector<2x128xf32>
    %278 = vector.extract_strided_slice %277 {offsets = [0, 96], sizes = [2, 32], strides = [1, 1]} : vector<2x128xf32> to vector<2x32xf32>
    %c0_81 = arith.constant 0 : index
    %c32_82 = arith.constant 32 : index
    %279 = vector.load %arg10[%c0_81, %c32_82] : memref<2x256xf32, #tpu.memory_space<vmem>>, vector<2x32xf32>
    tpu.vector_store %arg10[%c0_81, %c32_82], %278 {strides = array<i32>} : memref<2x256xf32, #tpu.memory_space<vmem>>, vector<2x32xf32>,
    %280 = vector.extract_strided_slice %277 {offsets = [0, 0], sizes = [2, 64], strides = [1, 1]} : vector<2x128xf32> to vector<2x64xf32>
    %281 = arith.negf %280 : vector<2x64xf32>
    %282 = math.exp %281 : vector<2x64xf32>
    %cst_83 = arith.constant 1.000000e+00 : f32
    %283 = vector.broadcast %cst_83 : f32 to vector<2x64xf32>
    %284 = arith.addf %283, %282 : vector<2x64xf32>
    %285 = arith.divf %283, %284 : vector<2x64xf32>
    %286 = vector.extract_strided_slice %285 {offsets = [0, 0], sizes = [2, 32], strides = [1, 1]} : vector<2x64xf32> to vector<2x32xf32>
    %287 = vector.extract_strided_slice %285 {offsets = [0, 32], sizes = [2, 32], strides = [1, 1]} : vector<2x64xf32> to vector<2x32xf32>
    %288 = vector.extract_strided_slice %277 {offsets = [0, 64], sizes = [2, 32], strides = [1, 1]} : vector<2x128xf32> to vector<2x32xf32>
    %289 = arith.mulf %286, %239 : vector<2x32xf32>
    %290 = arith.addf %288, %289 : vector<2x32xf32>
    %291 = math.tanh %290 : vector<2x32xf32>
    %cst_84 = arith.constant 1.000000e+00 : f32
    %292 = vector.broadcast %cst_84 : f32 to vector<2x32xf32>
    %293 = arith.subf %292, %287 : vector<2x32xf32>
    %294 = arith.mulf %293, %291 : vector<2x32xf32>
    %cst_85 = arith.constant dense<0.000000e+00> : vector<2x128xf32>
    %295 = tpu.matmul %294, %233, %cst_85 {dimension_numbers = #tpu.dot_dimension_numbers<[1], [0], [0], [1], [0, 0, 1, 1], [], []>} : vector<2x32xf32>, vector<32x128xf32>, vector<2x128xf32> -> vector<2x128xf32>
    %296 = arith.addf %295, %236 : vector<2x128xf32>
    %297 = vector.extract_strided_slice %296 {offsets = [0, 96], sizes = [2, 32], strides = [1, 1]} : vector<2x128xf32> to vector<2x32xf32>
    %c0_86 = arith.constant 0 : index
    %c64_87 = arith.constant 64 : index
    %298 = vector.load %arg10[%c0_86, %c64_87] : memref<2x256xf32, #tpu.memory_space<vmem>>, vector<2x32xf32>
    tpu.vector_store %arg10[%c0_86, %c64_87], %297 {strides = array<i32>} : memref<2x256xf32, #tpu.memory_space<vmem>>, vector<2x32xf32>,
    %299 = vector.extract_strided_slice %296 {offsets = [0, 0], sizes = [2, 64], strides = [1, 1]} : vector<2x128xf32> to vector<2x64xf32>
    %300 = arith.negf %299 : vector<2x64xf32>
    %301 = math.exp %300 : vector<2x64xf32>
    %cst_88 = arith.constant 1.000000e+00 : f32
    %302 = vector.broadcast %cst_88 : f32 to vector<2x64xf32>
    %303 = arith.addf %302, %301 : vector<2x64xf32>
    %304 = arith.divf %302, %303 : vector<2x64xf32>
    %305 = vector.extract_strided_slice %304 {offsets = [0, 0], sizes = [2, 32], strides = [1, 1]} : vector<2x64xf32> to vector<2x32xf32>
    %306 = vector.extract_strided_slice %304 {offsets = [0, 32], sizes = [2, 32], strides = [1, 1]} : vector<2x64xf32> to vector<2x32xf32>
    %307 = vector.extract_strided_slice %296 {offsets = [0, 64], sizes = [2, 32], strides = [1, 1]} : vector<2x128xf32> to vector<2x32xf32>
    %308 = arith.mulf %305, %239 : vector<2x32xf32>
    %309 = arith.addf %307, %308 : vector<2x32xf32>
    %310 = math.tanh %309 : vector<2x32xf32>
    %cst_89 = arith.constant 1.000000e+00 : f32
    %311 = vector.broadcast %cst_89 : f32 to vector<2x32xf32>
    %312 = arith.subf %311, %306 : vector<2x32xf32>
    %313 = arith.mulf %312, %310 : vector<2x32xf32>
    %cst_90 = arith.constant dense<0.000000e+00> : vector<2x128xf32>
    %314 = tpu.matmul %313, %233, %cst_90 {dimension_numbers = #tpu.dot_dimension_numbers<[1], [0], [0], [1], [0, 0, 1, 1], [], []>} : vector<2x32xf32>, vector<32x128xf32>, vector<2x128xf32> -> vector<2x128xf32>
    %315 = arith.addf %314, %236 : vector<2x128xf32>
    %316 = vector.extract_strided_slice %315 {offsets = [0, 96], sizes = [2, 32], strides = [1, 1]} : vector<2x128xf32> to vector<2x32xf32>
    %c0_91 = arith.constant 0 : index
    %c96_92 = arith.constant 96 : index
    %317 = vector.load %arg10[%c0_91, %c96_92] : memref<2x256xf32, #tpu.memory_space<vmem>>, vector<2x32xf32>
    tpu.vector_store %arg10[%c0_91, %c96_92], %316 {strides = array<i32>} : memref<2x256xf32, #tpu.memory_space<vmem>>, vector<2x32xf32>,
    %318 = vector.extract_strided_slice %315 {offsets = [0, 0], sizes = [2, 64], strides = [1, 1]} : vector<2x128xf32> to vector<2x64xf32>
    %319 = arith.negf %318 : vector<2x64xf32>
    %320 = math.exp %319 : vector<2x64xf32>
    %cst_93 = arith.constant 1.000000e+00 : f32
    %321 = vector.broadcast %cst_93 : f32 to vector<2x64xf32>
    %322 = arith.addf %321, %320 : vector<2x64xf32>
    %323 = arith.divf %321, %322 : vector<2x64xf32>
    %324 = vector.extract_strided_slice %323 {offsets = [0, 0], sizes = [2, 32], strides = [1, 1]} : vector<2x64xf32> to vector<2x32xf32>
    %325 = vector.extract_strided_slice %323 {offsets = [0, 32], sizes = [2, 32], strides = [1, 1]} : vector<2x64xf32> to vector<2x32xf32>
    %326 = vector.extract_strided_slice %315 {offsets = [0, 64], sizes = [2, 32], strides = [1, 1]} : vector<2x128xf32> to vector<2x32xf32>
    %327 = arith.mulf %324, %239 : vector<2x32xf32>
    %328 = arith.addf %326, %327 : vector<2x32xf32>
    %329 = math.tanh %328 : vector<2x32xf32>
    %cst_94 = arith.constant 1.000000e+00 : f32
    %330 = vector.broadcast %cst_94 : f32 to vector<2x32xf32>
    %331 = arith.subf %330, %325 : vector<2x32xf32>
    %332 = arith.mulf %331, %329 : vector<2x32xf32>
    %cst_95 = arith.constant dense<0.000000e+00> : vector<2x128xf32>
    %333 = tpu.matmul %332, %233, %cst_95 {dimension_numbers = #tpu.dot_dimension_numbers<[1], [0], [0], [1], [0, 0, 1, 1], [], []>} : vector<2x32xf32>, vector<32x128xf32>, vector<2x128xf32> -> vector<2x128xf32>
    %334 = arith.addf %333, %236 : vector<2x128xf32>
    %335 = vector.extract_strided_slice %334 {offsets = [0, 96], sizes = [2, 32], strides = [1, 1]} : vector<2x128xf32> to vector<2x32xf32>
    %c0_96 = arith.constant 0 : index
    %c128_97 = arith.constant 128 : index
    %336 = vector.load %arg10[%c0_96, %c128_97] : memref<2x256xf32, #tpu.memory_space<vmem>>, vector<2x32xf32>
    tpu.vector_store %arg10[%c0_96, %c128_97], %335 {strides = array<i32>} : memref<2x256xf32, #tpu.memory_space<vmem>>, vector<2x32xf32>,
    %337 = vector.extract_strided_slice %334 {offsets = [0, 0], sizes = [2, 64], strides = [1, 1]} : vector<2x128xf32> to vector<2x64xf32>
    %338 = arith.negf %337 : vector<2x64xf32>
    %339 = math.exp %338 : vector<2x64xf32>
    %cst_98 = arith.constant 1.000000e+00 : f32
    %340 = vector.broadcast %cst_98 : f32 to vector<2x64xf32>
    %341 = arith.addf %340, %339 : vector<2x64xf32>
    %342 = arith.divf %340, %341 : vector<2x64xf32>
    %343 = vector.extract_strided_slice %342 {offsets = [0, 0], sizes = [2, 32], strides = [1, 1]} : vector<2x64xf32> to vector<2x32xf32>
    %344 = vector.extract_strided_slice %342 {offsets = [0, 32], sizes = [2, 32], strides = [1, 1]} : vector<2x64xf32> to vector<2x32xf32>
    %345 = vector.extract_strided_slice %334 {offsets = [0, 64], sizes = [2, 32], strides = [1, 1]} : vector<2x128xf32> to vector<2x32xf32>
    %346 = arith.mulf %343, %239 : vector<2x32xf32>
    %347 = arith.addf %345, %346 : vector<2x32xf32>
    %348 = math.tanh %347 : vector<2x32xf32>
    %cst_99 = arith.constant 1.000000e+00 : f32
    %349 = vector.broadcast %cst_99 : f32 to vector<2x32xf32>
    %350 = arith.subf %349, %344 : vector<2x32xf32>
    %351 = arith.mulf %350, %348 : vector<2x32xf32>
    %cst_100 = arith.constant dense<0.000000e+00> : vector<2x128xf32>
    %352 = tpu.matmul %351, %233, %cst_100 {dimension_numbers = #tpu.dot_dimension_numbers<[1], [0], [0], [1], [0, 0, 1, 1], [], []>} : vector<2x32xf32>, vector<32x128xf32>, vector<2x128xf32> -> vector<2x128xf32>
    %353 = arith.addf %352, %236 : vector<2x128xf32>
    %354 = vector.extract_strided_slice %353 {offsets = [0, 96], sizes = [2, 32], strides = [1, 1]} : vector<2x128xf32> to vector<2x32xf32>
    %c0_101 = arith.constant 0 : index
    %c160_102 = arith.constant 160 : index
    %355 = vector.load %arg10[%c0_101, %c160_102] : memref<2x256xf32, #tpu.memory_space<vmem>>, vector<2x32xf32>
    tpu.vector_store %arg10[%c0_101, %c160_102], %354 {strides = array<i32>} : memref<2x256xf32, #tpu.memory_space<vmem>>, vector<2x32xf32>,
    %356 = vector.extract_strided_slice %353 {offsets = [0, 0], sizes = [2, 64], strides = [1, 1]} : vector<2x128xf32> to vector<2x64xf32>
    %357 = arith.negf %356 : vector<2x64xf32>
    %358 = math.exp %357 : vector<2x64xf32>
    %cst_103 = arith.constant 1.000000e+00 : f32
    %359 = vector.broadcast %cst_103 : f32 to vector<2x64xf32>
    %360 = arith.addf %359, %358 : vector<2x64xf32>
    %361 = arith.divf %359, %360 : vector<2x64xf32>
    %362 = vector.extract_strided_slice %361 {offsets = [0, 0], sizes = [2, 32], strides = [1, 1]} : vector<2x64xf32> to vector<2x32xf32>
    %363 = vector.extract_strided_slice %361 {offsets = [0, 32], sizes = [2, 32], strides = [1, 1]} : vector<2x64xf32> to vector<2x32xf32>
    %364 = vector.extract_strided_slice %353 {offsets = [0, 64], sizes = [2, 32], strides = [1, 1]} : vector<2x128xf32> to vector<2x32xf32>
    %365 = arith.mulf %362, %239 : vector<2x32xf32>
    %366 = arith.addf %364, %365 : vector<2x32xf32>
    %367 = math.tanh %366 : vector<2x32xf32>
    %cst_104 = arith.constant 1.000000e+00 : f32
    %368 = vector.broadcast %cst_104 : f32 to vector<2x32xf32>
    %369 = arith.subf %368, %363 : vector<2x32xf32>
    %370 = arith.mulf %369, %367 : vector<2x32xf32>
    %cst_105 = arith.constant dense<0.000000e+00> : vector<2x128xf32>
    %371 = tpu.matmul %370, %233, %cst_105 {dimension_numbers = #tpu.dot_dimension_numbers<[1], [0], [0], [1], [0, 0, 1, 1], [], []>} : vector<2x32xf32>, vector<32x128xf32>, vector<2x128xf32> -> vector<2x128xf32>
    %372 = arith.addf %371, %236 : vector<2x128xf32>
    %373 = vector.extract_strided_slice %372 {offsets = [0, 96], sizes = [2, 32], strides = [1, 1]} : vector<2x128xf32> to vector<2x32xf32>
    %c0_106 = arith.constant 0 : index
    %c192_107 = arith.constant 192 : index
    %374 = vector.load %arg10[%c0_106, %c192_107] : memref<2x256xf32, #tpu.memory_space<vmem>>, vector<2x32xf32>
    tpu.vector_store %arg10[%c0_106, %c192_107], %373 {strides = array<i32>} : memref<2x256xf32, #tpu.memory_space<vmem>>, vector<2x32xf32>,
    %375 = vector.extract_strided_slice %372 {offsets = [0, 0], sizes = [2, 64], strides = [1, 1]} : vector<2x128xf32> to vector<2x64xf32>
    %376 = arith.negf %375 : vector<2x64xf32>
    %377 = math.exp %376 : vector<2x64xf32>
    %cst_108 = arith.constant 1.000000e+00 : f32
    %378 = vector.broadcast %cst_108 : f32 to vector<2x64xf32>
    %379 = arith.addf %378, %377 : vector<2x64xf32>
    %380 = arith.divf %378, %379 : vector<2x64xf32>
    %381 = vector.extract_strided_slice %380 {offsets = [0, 0], sizes = [2, 32], strides = [1, 1]} : vector<2x64xf32> to vector<2x32xf32>
    %382 = vector.extract_strided_slice %380 {offsets = [0, 32], sizes = [2, 32], strides = [1, 1]} : vector<2x64xf32> to vector<2x32xf32>
    %383 = vector.extract_strided_slice %372 {offsets = [0, 64], sizes = [2, 32], strides = [1, 1]} : vector<2x128xf32> to vector<2x32xf32>
    %384 = arith.mulf %381, %239 : vector<2x32xf32>
    %385 = arith.addf %383, %384 : vector<2x32xf32>
    %386 = math.tanh %385 : vector<2x32xf32>
    %cst_109 = arith.constant 1.000000e+00 : f32
    %387 = vector.broadcast %cst_109 : f32 to vector<2x32xf32>
    %388 = arith.subf %387, %382 : vector<2x32xf32>
    %389 = arith.mulf %388, %386 : vector<2x32xf32>
    %cst_110 = arith.constant dense<0.000000e+00> : vector<2x128xf32>
    %390 = tpu.matmul %389, %233, %cst_110 {dimension_numbers = #tpu.dot_dimension_numbers<[1], [0], [0], [1], [0, 0, 1, 1], [], []>} : vector<2x32xf32>, vector<32x128xf32>, vector<2x128xf32> -> vector<2x128xf32>
    %391 = vector.extract_strided_slice %390 {offsets = [0, 96], sizes = [2, 32], strides = [1, 1]} : vector<2x128xf32> to vector<2x32xf32>
    %c0_111 = arith.constant 0 : index
    %c224_112 = arith.constant 224 : index
    %392 = vector.load %arg10[%c0_111, %c224_112] : memref<2x256xf32, #tpu.memory_space<vmem>>, vector<2x32xf32>
    tpu.vector_store %arg10[%c0_111, %c224_112], %391 {strides = array<i32>} : memref<2x256xf32, #tpu.memory_space<vmem>>, vector<2x32xf32>,
    %c129 = arith.constant 129 : index
    %c0_113 = arith.constant 0 : index
    %393 = vector.load %arg3[%c129, %c0_113] : memref<130x256xf32, #tpu.memory_space<vmem>>, vector<1x256xf32>
    %394 = vector.shape_cast %393 : vector<1x256xf32> to vector<1x256xf32>
    %395 = vector.broadcast %394 : vector<1x256xf32> to vector<2x256xf32>
    %c0_114 = arith.constant 0 : index
    %c0_115 = arith.constant 0 : index
    %396 = vector.load %arg10[%c0_114, %c0_115] : memref<2x256xf32, #tpu.memory_space<vmem>>, vector<2x256xf32>
    %397 = arith.addf %396, %395 : vector<2x256xf32>
    %398 = arith.negf %397 : vector<2x256xf32>
    %399 = math.exp %398 : vector<2x256xf32>
    %cst_116 = arith.constant 1.000000e+00 : f32
    %400 = vector.broadcast %cst_116 : f32 to vector<2x256xf32>
    %401 = arith.addf %400, %399 : vector<2x256xf32>
    %402 = arith.divf %400, %401 : vector<2x256xf32>
    %c0_117 = arith.constant 0 : index
    %c0_118 = arith.constant 0 : index
    %403 = vector.load %arg7[%c0_117, %c0_118] : memref<2x256xf32, #tpu.memory_space<vmem>>, vector<2x256xf32>
    tpu.vector_store %arg7[%c0_117, %c0_118], %402 {strides = array<i32>} : memref<2x256xf32, #tpu.memory_space<vmem>>, vector<2x256xf32>,
    %cst_119 = arith.constant 0.000000e+00 : f32
    %404 = vector.broadcast %cst_119 : f32 to vector<2x32xf32>
    %405 = tpu.concatenate %214, %215, %221, %404 in 1 : vector<2x32xf32>, vector<2x32xf32>, vector<2x32xf32>, vector<2x32xf32> -> vector<2x128xf32>
    %c0_120 = arith.constant 0 : index
    %c0_121 = arith.constant 0 : index
    %406 = vector.load %arg8[%c0_120, %c0_121] : memref<2x128xf32, #tpu.memory_space<vmem>>, vector<2x128xf32>
    tpu.vector_store %arg8[%c0_120, %c0_121], %405 {strides = array<i32>} : memref<2x128xf32, #tpu.memory_space<vmem>>, vector<2x128xf32>,
    return
  }
}

</mosaic_0001>

<llo_original>
// kernel: vae_jazz_forward.1
$region0: #{vae_jazz_forward.1}
  #allocation0 [shape = 'u32[]', space=smem, size = 0x4, offset = 0x4, fixed_abs, tag = 'smem constant byte address 0x4 - core index']
  #allocation1 [shape = 'u32[144,128]{1,0:T(1,128)}', space=vmem, size = 0x12000, scoped, tag = 'internal scratch']
  #allocation2 [shape = 'f32[2,512]{1,0:T(2,128)}', space=vmem, size = 0x1000, scoped, tag = 'scratch operand']
  #allocation3 [shape = 'f32[2,256]{1,0:T(2,128)}', space=vmem, size = 0x800, scoped, tag = 'scratch operand']
  %s0 = inlined_call_operand.vmem [shape: f32[16,64], index: 0, kind: input, shape index: {}]
  %s1 = inlined_call_operand.vmem [shape: f32[2,32], index: 1, kind: input, shape index: {}]
  %s2 = inlined_call_operand.vmem [shape: f32[2,1], index: 2, kind: input, shape index: {}]
  %s3 = inlined_call_operand.vmem [shape: f32[130,256], index: 3, kind: input, shape index: {}]
  %s4 = inlined_call_operand.vmem [shape: f32[513,64], index: 4, kind: input, shape index: {}]
  %s5 = inlined_call_operand.vmem [shape: f32[34,32], index: 5, kind: input, shape index: {}]
  %s6 = inlined_call_operand.vmem [shape: f32[34,128], index: 6, kind: input, shape index: {}]
  %s7 = inlined_call_operand.vmem [shape: f32[2,256], index: 7, kind: output, shape index: {0}]
  %s8 = inlined_call_operand.vmem [shape: f32[2,128], index: 8, kind: output, shape index: {1}]
  %9 = xla_tuple %s7, %s8
  %s10 = sld [smem:[#allocation0]]
  $region46: #{vae_jazz_forward.1} parent=0
    _
  %s12 = ssub.s32 1, %s10
  %s13 = scalar_select 0, %s12, %s10
  // Predicated region
  $region2: #{vae_jazz_forward.1} parent=0 // pred_check
    _
  $region3: #{vae_jazz_forward.1} parent=0 // pred_check_branch
    %15 = sbr.rel (0) target = $region5
  $region4: #{vae_jazz_forward.1} parent=0 // pred_region
    _
  $region5: #{vae_jazz_forward.1} parent=0 // pred_fallthru
    _
  // Predicated region
  $region6: #{vae_jazz_forward.1} parent=0 // pred_check
    _
  $region7: #{vae_jazz_forward.1} parent=0 // pred_check_branch
    %17 = sbr.rel (0) target = $region9
  $region8: #{vae_jazz_forward.1} parent=0 // pred_region
    _
  $region9: #{vae_jazz_forward.1} parent=0 // pred_fallthru
    _
  // Predicated region
  $region10: #{vae_jazz_forward.1} parent=0 // pred_check
    _
  $region11: #{vae_jazz_forward.1} parent=0 // pred_check_branch
    %19 = sbr.rel (0) target = $region13
  $region12: #{vae_jazz_forward.1} parent=0 // pred_region
    _
  $region13: #{vae_jazz_forward.1} parent=0 // pred_fallthru
    _
  // Predicated region
  $region14: #{vae_jazz_forward.1} parent=0 // pred_check
    _
  $region15: #{vae_jazz_forward.1} parent=0 // pred_check_branch
    %21 = sbr.rel (0) target = $region17
  $region16: #{vae_jazz_forward.1} parent=0 // pred_region
    _
  $region17: #{vae_jazz_forward.1} parent=0 // pred_fallthru
    _
  // Predicated region
  $region18: #{vae_jazz_forward.1} parent=0 // pred_check
    _
  $region19: #{vae_jazz_forward.1} parent=0 // pred_check_branch
    %23 = sbr.rel (0) target = $region21
  $region20: #{vae_jazz_forward.1} parent=0 // pred_region
    _
  $region21: #{vae_jazz_forward.1} parent=0 // pred_fallthru
    _
  // Predicated region
  $region22: #{vae_jazz_forward.1} parent=0 // pred_check
    _
  $region23: #{vae_jazz_forward.1} parent=0 // pred_check_branch
    %25 = sbr.rel (0) target = $region25
  $region24: #{vae_jazz_forward.1} parent=0 // pred_region
    _
  $region25: #{vae_jazz_forward.1} parent=0 // pred_fallthru
    _
  // Predicated region
  $region26: #{vae_jazz_forward.1} parent=0 // pred_check
    _
  $region27: #{vae_jazz_forward.1} parent=0 // pred_check_branch
    %27 = sbr.rel (0) target = $region29
  $region28: #{vae_jazz_forward.1} parent=0 // pred_region
    _
  $region29: #{vae_jazz_forward.1} parent=0 // pred_fallthru
    _
  %v28 = vld [vmem:[%s3] sm:$0xff]
  %v29 = vld [vmem:[%s3 + $0x8] sm:$0xff]
  %v30 = vld [vmem:[%s3 + $0x10] sm:$0xff]
  %v31 = vld [vmem:[%s3 + $0x18] sm:$0xff]
  %v32 = vld [vmem:[%s3 + $0x20] sm:$0xff]
  %v33 = vld [vmem:[%s3 + $0x28] sm:$0xff]
  %v34 = vld [vmem:[%s3 + $0x30] sm:$0xff]
  %v35 = vld [vmem:[%s3 + $0x38] sm:$0xff]
  %v36 = vld [vmem:[%s3 + $0x40] sm:$0xff]
  %v37 = vld [vmem:[%s3 + $0x48] sm:$0xff]
  %v38 = vld [vmem:[%s3 + $0x50] sm:$0xff]
  %v39 = vld [vmem:[%s3 + $0x58] sm:$0xff]
  %v40 = vld [vmem:[%s3 + $0x60] sm:$0xff]
  %v41 = vld [vmem:[%s3 + $0x68] sm:$0xff]
  %v42 = vld [vmem:[%s3 + $0x70] sm:$0xff]
  %v43 = vld [vmem:[%s3 + $0x78] sm:$0xff]
  %v44 = vld [vmem:[%s3 + $0x80] sm:$0xff]
  %v45 = vld [vmem:[%s3 + $0x88] sm:$0xff]
  %v46 = vld [vmem:[%s3 + $0x90] sm:$0xff]
  %v47 = vld [vmem:[%s3 + $0x98] sm:$0xff]
  %v48 = vld [vmem:[%s3 + $0xa0] sm:$0xff]
  %v49 = vld [vmem:[%s3 + $0xa8] sm:$0xff]
  %v50 = vld [vmem:[%s3 + $0xb0] sm:$0xff]
  %v51 = vld [vmem:[%s3 + $0xb8] sm:$0xff]
  %v52 = vld [vmem:[%s3 + $0xc0] sm:$0xff]
  %v53 = vld [vmem:[%s3 + $0xc8] sm:$0xff]
  %v54 = vld [vmem:[%s3 + $0xd0] sm:$0xff]
  %v55 = vld [vmem:[%s3 + $0xd8] sm:$0xff]
  %v56 = vld [vmem:[%s3 + $0xe0] sm:$0xff]
  %v57 = vld [vmem:[%s3 + $0xe8] sm:$0xff]
  %v58 = vld [vmem:[%s3 + $0xf0] sm:$0xff]
  %v59 = vld [vmem:[%s3 + $0xf8] sm:$0xff]
  %s60 = scalar_lea.vmem %s3, 256
  %v61 = vld [vmem:[%s60] ss:$8 sm:$0x3]
  %v62 = vld [vmem:[%s0] sm:$0xff]
  %v63 = vld [vmem:[%s0 + $0x8] sm:$0xff]
  %v65 = vlaneseq
  %v66 = vshrl.u32 %v65, 7
  %v67 = vsub.s32 0, %v66
  %v68 = vrot.slane %v61, %v67
  %v69 = vlaneseq
  %v70 = vshrl.u32 %v69, 7
  %v71 = vsub.s32 1, %v70
  %v72 = vrot.slane %v61, %v71
  %vm75 = vcmask 523264
  %v77 = vsel %vm75, %v62, 0
  %v80 = vsel %vm75, %v63, 0
  %82 = vmatprep.subr.mxu0 0.0
  %83 = vmatpush1.msra.mxu0 0.0
  %84 = vmatprep.subr.mxu0 0.0
  %85 = vmatpush1.msra.mxu0 0.0
  %86 = vmatprep.subr.mxu0 0.0
  %87 = vmatpush1.msra.mxu0 0.0
  %88 = vmatprep.subr.mxu0 0.0
  %89 = vmatpush1.msra.mxu0 0.0
  %90 = vmatprep.subr.mxu0 0.0
  %91 = vmatpush1.msra.mxu0 0.0
  %92 = vmatprep.subr.mxu0 0.0
  %93 = vmatpush1.msra.mxu0 0.0
  %94 = vmatprep.subr.mxu0 0.0
  %95 = vmatpush1.msra.mxu0 0.0
  %96 = vmatprep.subr.mxu0 0.0
  %97 = vmatpush1.msra.mxu0 0.0
  %98 = vmatprep.subr.mxu0 %v43
  %99 = vmatpush1.msra.mxu0 %v42
  %100 = vmatprep.subr.mxu0 %v41
  %101 = vmatpush1.msra.mxu0 %v40
  %102 = vmatprep.subr.mxu0 %v39
  %103 = vmatpush1.msra.mxu0 %v38
  %104 = vmatprep.subr.mxu0 %v37
  %105 = vmatpush1.msra.mxu0 %v36
  %106 = vmatprep.subr.mxu0 %v35
  %107 = vmatpush1.msra.mxu0 %v34
  %108 = vmatprep.subr.mxu0 %v33
  %109 = vmatpush1.msra.mxu0 %v32
  %110 = vmatprep.subr.mxu0 %v31
  %111 = vmatpush1.msra.mxu0 %v30
  %112 = vmatprep.subr.mxu0 %v29
  %113 = vmatpush1.msra.mxu0 %v28
  %114 = vmatprep.subr.mxu0 0.0
  %115 = vmatpush2.msra.mxu0 0.0
  %116 = vmatprep.subr.mxu0 0.0
  %117 = vmatpush2.msra.mxu0 0.0
  %118 = vmatprep.subr.mxu0 0.0
  %119 = vmatpush2.msra.mxu0 0.0
  %120 = vmatprep.subr.mxu0 0.0
  %121 = vmatpush2.msra.mxu0 0.0
  %122 = vmatprep.subr.mxu0 0.0
  %123 = vmatpush2.msra.mxu0 0.0
  %124 = vmatprep.subr.mxu0 0.0
  %125 = vmatpush2.msra.mxu0 0.0
  %126 = vmatprep.subr.mxu0 0.0
  %127 = vmatpush2.msra.mxu0 0.0
  %128 = vmatprep.subr.mxu0 0.0
  %129 = vmatpush2.msra.mxu0 0.0
  %130 = vmatprep.subr.mxu0 0.0
  %131 = vmatpush2.msra.mxu0 0.0
  %132 = vmatprep.subr.mxu0 0.0
  %133 = vmatpush2.msra.mxu0 0.0
  %134 = vmatprep.subr.mxu0 0.0
  %135 = vmatpush2.msra.mxu0 0.0
  %136 = vmatprep.subr.mxu0 0.0
  %137 = vmatpush2.msra.mxu0 0.0
  %138 = vmatprep.subr.mxu0 0.0
  %139 = vmatpush2.msra.mxu0 0.0
  %140 = vmatprep.subr.mxu0 0.0
  %141 = vmatpush2.msra.mxu0 0.0
  %142 = vmatprep.subr.mxu0 0.0
  %143 = vmatpush2.msra.mxu0 0.0
  %144 = vmatprep.subr.mxu0 0.0
  %145 = vmatpush2.msra.mxu0 0.0
  %146 = vmatprep.mubr.f32.mxu0 0.0
  %147 = vmatmul.mubr.f32.gmra.mxu0 %v77
  %v148 = vpop.f32.mrf.mxu0
  %v149 = vadd.f32 %v68, %v148
  %v150 = vpop.f32.mrf.mxu0
  %v151 = vadd.f32 %v72, %v150
  %152 = vmatprep.mubr.f32.mxu0 0.0
  %153 = vmatmul.mubr.f32.gmra.mxu0 %v80
  %v154 = vpop.f32.mrf.mxu0
  %v155 = vadd.f32 %v68, %v154
  %v156 = vpop.f32.mrf.mxu0
  %v157 = vadd.f32 %v72, %v156
  %158 = vdwg.mxu0
  %v160 = vsel %vm75, 0.0, 0
  %162 = vmatprep.subr.mxu0 0.0
  %163 = vmatpush1.msra.mxu0 0.0
  %164 = vmatprep.subr.mxu0 0.0
  %165 = vmatpush1.msra.mxu0 0.0
  %166 = vmatprep.subr.mxu0 0.0
  %167 = vmatpush1.msra.mxu0 0.0
  %168 = vmatprep.subr.mxu0 0.0
  %169 = vmatpush1.msra.mxu0 0.0
  %170 = vmatprep.subr.mxu0 0.0
  %171 = vmatpush1.msra.mxu0 0.0
  %172 = vmatprep.subr.mxu0 0.0
  %173 = vmatpush1.msra.mxu0 0.0
  %174 = vmatprep.subr.mxu0 0.0
  %175 = vmatpush1.msra.mxu0 0.0
  %176 = vmatprep.subr.mxu0 0.0
  %177 = vmatpush1.msra.mxu0 0.0
  %178 = vmatprep.subr.mxu0 %v59
  %179 = vmatpush1.msra.mxu0 %v58
  %180 = vmatprep.subr.mxu0 %v57
  %181 = vmatpush1.msra.mxu0 %v56
  %182 = vmatprep.subr.mxu0 %v55
  %183 = vmatpush1.msra.mxu0 %v54
  %184 = vmatprep.subr.mxu0 %v53
  %185 = vmatpush1.msra.mxu0 %v52
  %186 = vmatprep.subr.mxu0 %v51
  %187 = vmatpush1.msra.mxu0 %v50
  %188 = vmatprep.subr.mxu0 %v49
  %189 = vmatpush1.msra.mxu0 %v48
  %190 = vmatprep.subr.mxu0 %v47
  %191 = vmatpush1.msra.mxu0 %v46
  %192 = vmatprep.subr.mxu0 %v45
  %193 = vmatpush1.msra.mxu0 %v44
  %194 = vmatprep.subr.mxu0 0.0
  %195 = vmatpush2.msra.mxu0 0.0
  %196 = vmatprep.subr.mxu0 0.0
  %197 = vmatpush2.msra.mxu0 0.0
  %198 = vmatprep.subr.mxu0 0.0
  %199 = vmatpush2.msra.mxu0 0.0
  %200 = vmatprep.subr.mxu0 0.0
  %201 = vmatpush2.msra.mxu0 0.0
  %202 = vmatprep.subr.mxu0 0.0
  %203 = vmatpush2.msra.mxu0 0.0
  %204 = vmatprep.subr.mxu0 0.0
  %205 = vmatpush2.msra.mxu0 0.0
  %206 = vmatprep.subr.mxu0 0.0
  %207 = vmatpush2.msra.mxu0 0.0
  %208 = vmatprep.subr.mxu0 0.0
  %209 = vmatpush2.msra.mxu0 0.0
  %210 = vmatprep.subr.mxu0 0.0
  %211 = vmatpush2.msra.mxu0 0.0
  %212 = vmatprep.subr.mxu0 0.0
  %213 = vmatpush2.msra.mxu0 0.0
  %214 = vmatprep.subr.mxu0 0.0
  %215 = vmatpush2.msra.mxu0 0.0
  %216 = vmatprep.subr.mxu0 0.0
  %217 = vmatpush2.msra.mxu0 0.0
  %218 = vmatprep.subr.mxu0 0.0
  %219 = vmatpush2.msra.mxu0 0.0
  %220 = vmatprep.subr.mxu0 0.0
  %221 = vmatpush2.msra.mxu0 0.0
  %222 = vmatprep.subr.mxu0 0.0
  %223 = vmatpush2.msra.mxu0 0.0
  %224 = vmatprep.subr.mxu0 0.0
  %225 = vmatpush2.msra.mxu0 0.0
  %226 = vmatprep.mubr.f32.mxu0 0.0
  %227 = vmatmul.mubr.f32.gmra.mxu0 %v160
  %v228 = vpop.f32.mrf.mxu0
  %v229 = vadd.f32 0.0, %v228
  %v230 = vpop.f32.mrf.mxu0
  %v231 = vadd.f32 0.0, %v230
  %232 = vdwg.mxu0
  %v233 = vadd.f32 %v149, %v229
  %v234 = vadd.f32 %v151, %v231
  %v235 = vxor.u32 %v233, 2147483648
  %v236 = vmul.f32 %v235, 1.442695
  %v237 = vpow.pop %v236
  %v238 = vadd.f32 %v237, 1.0
  %v239 = vrcp.pop %v238
  %v240 = vmul.f32 1.0, %v239
  %242 = vrot.lane.b32.xlu0 %v234, 64
  %v243 = vpop.permute.xlu0 %242
  %v245 = vmul.f32 %v240, %v243
  %v246 = vadd.f32 %v234, %v245
  %v247 = vtanh.pop %v246
  %v248 = vsub.f32 1.0, %v240
  %250 = vrot.lane.b32.xlu0 %v247, 64
  %v251 = vpop.permute.xlu0 %250
  %v253 = vmul.f32 %v248, %v251
  %v254 = vmul.f32 %v240, 0.0
  %v255 = vadd.f32 %v253, %v254
  %v258 = vunpack.c.l.s4 1983009808
  %v259 = vunpack.c.0.s8 %v258
  %v260 = vlaneseq
  %v261 = vshrl.u32 %v260, 7
  %v262 = vsub.s32 %v259, %v261
  %v263 = vrot.slane %v255, %v262
  %264 = vrot.lane.b32.xlu0 %v263, 64
  %v265 = vpop.permute.xlu0 %264
  %vm267 = vcmask 254976
  %268 = vst.msk [vmem:[#allocation2] sm:$0x3] %vm267, %v265
  %vm269 = vcmask 1042176
  %270 = vst.msk [vmem:[#allocation2 + $0x6] sm:$0x3] %vm269, %v255
  %271 = vrot.lane.b32.xlu0 %v255, 64
  %v272 = vpop.permute.xlu0 %271
  %v273 = vsel %vm75, %v272, 0
  %275 = vmatprep.subr.mxu0 0.0
  %276 = vmatpush1.msra.mxu0 0.0
  %277 = vmatprep.subr.mxu0 0.0
  %278 = vmatpush1.msra.mxu0 0.0
  %279 = vmatprep.subr.mxu0 0.0
  %280 = vmatpush1.msra.mxu0 0.0
  %281 = vmatprep.subr.mxu0 0.0
  %282 = vmatpush1.msra.mxu0 0.0
  %283 = vmatprep.subr.mxu0 0.0
  %284 = vmatpush1.msra.mxu0 0.0
  %285 = vmatprep.subr.mxu0 0.0
  %286 = vmatpush1.msra.mxu0 0.0
  %287 = vmatprep.subr.mxu0 0.0
  %288 = vmatpush1.msra.mxu0 0.0
  %289 = vmatprep.subr.mxu0 0.0
  %290 = vmatpush1.msra.mxu0 0.0
  %291 = vmatprep.subr.mxu0 %v59
  %292 = vmatpush1.msra.mxu0 %v58
  %293 = vmatprep.subr.mxu0 %v57
  %294 = vmatpush1.msra.mxu0 %v56
  %295 = vmatprep.subr.mxu0 %v55
  %296 = vmatpush1.msra.mxu0 %v54
  %297 = vmatprep.subr.mxu0 %v53
  %298 = vmatpush1.msra.mxu0 %v52
  %299 = vmatprep.subr.mxu0 %v51
  %300 = vmatpush1.msra.mxu0 %v50
  %301 = vmatprep.subr.mxu0 %v49
  %302 = vmatpush1.msra.mxu0 %v48
  %303 = vmatprep.subr.mxu0 %v47
  %304 = vmatpush1.msra.mxu0 %v46
  %305 = vmatprep.subr.mxu0 %v45
  %306 = vmatpush1.msra.mxu0 %v44
  %307 = vmatprep.subr.mxu0 0.0
  %308 = vmatpush2.msra.mxu0 0.0
  %309 = vmatprep.subr.mxu0 0.0
  %310 = vmatpush2.msra.mxu0 0.0
  %311 = vmatprep.subr.mxu0 0.0
  %312 = vmatpush2.msra.mxu0 0.0
  %313 = vmatprep.subr.mxu0 0.0
  %314 = vmatpush2.msra.mxu0 0.0
  %315 = vmatprep.subr.mxu0 0.0
  %316 = vmatpush2.msra.mxu0 0.0
  %317 = vmatprep.subr.mxu0 0.0
  %318 = vmatpush2.msra.mxu0 0.0
  %319 = vmatprep.subr.mxu0 0.0
  %320 = vmatpush2.msra.mxu0 0.0
  %321 = vmatprep.subr.mxu0 0.0
  %322 = vmatpush2.msra.mxu0 0.0
  %323 = vmatprep.subr.mxu0 0.0
  %324 = vmatpush2.msra.mxu0 0.0
  %325 = vmatprep.subr.mxu0 0.0
  %326 = vmatpush2.msra.mxu0 0.0
  %327 = vmatprep.subr.mxu0 0.0
  %328 = vmatpush2.msra.mxu0 0.0
  %329 = vmatprep.subr.mxu0 0.0
  %330 = vmatpush2.msra.mxu0 0.0
  %331 = vmatprep.subr.mxu0 0.0
  %332 = vmatpush2.msra.mxu0 0.0
  %333 = vmatprep.subr.mxu0 0.0
  %334 = vmatpush2.msra.mxu0 0.0
  %335 = vmatprep.subr.mxu0 0.0
  %336 = vmatpush2.msra.mxu0 0.0
  %337 = vmatprep.subr.mxu0 0.0
  %338 = vmatpush2.msra.mxu0 0.0
  %339 = vmatprep.mubr.f32.mxu0 0.0
  %340 = vmatmul.mubr.f32.gmra.mxu0 %v273
  %v341 = vpop.f32.mrf.mxu0
  %v342 = vadd.f32 0.0, %v341
  %v343 = vpop.f32.mrf.mxu0
  %v344 = vadd.f32 0.0, %v343
  %345 = vdwg.mxu0
  %v348 = vrot.slane %v342, 6
  %v349 = vrot.slane %v344, 6
  %v352 = vadd.f32 %v149, %v348
  %v353 = vadd.f32 %v151, %v349
  %v354 = vxor.u32 %v352, 2147483648
  %v355 = vmul.f32 %v354, 1.442695
  %v356 = vpow.pop %v355
  %v357 = vadd.f32 %v356, 1.0
  %v358 = vrcp.pop %v357
  %v359 = vmul.f32 1.0, %v358
  %361 = vrot.lane.b32.xlu0 %v353, 64
  %v362 = vpop.permute.xlu0 %361
  %v364 = vmul.f32 %v359, %v362
  %v365 = vadd.f32 %v353, %v364
  %v366 = vtanh.pop %v365
  %v367 = vsub.f32 1.0, %v359
  %369 = vrot.lane.b32.xlu0 %v366, 64
  %v370 = vpop.permute.xlu0 %369
  %v372 = vmul.f32 %v367, %v370
  %v373 = vrot.slane %v255, 6
  %v375 = vmul.f32 %v359, %v373
  %v376 = vadd.f32 %v372, %v375
  %v379 = vunpack.c.l.s4 1983009808
  %v380 = vunpack.c.0.s8 %v379
  %v381 = vlaneseq
  %v382 = vshrl.u32 %v381, 7
  %v383 = vsub.s32 %v380, %v382
  %v384 = vrot.slane %v376, %v383
  %v385 = vcombine.high %v384, %v384
  %vm387 = vcmask 779776
  %388 = vst.msk [vmem:[#allocation2] sm:$0x3] %vm387, %v385
  %389 = vrot.lane.b32.xlu0 %v385, 64
  %v390 = vpop.permute.xlu0 %389
  %vm392 = vcmask 517376
  %393 = vst.msk [vmem:[#allocation2 + $0x6] sm:$0x3] %vm392, %v390
  %v394 = vrot.slane %v376, 2
  %395 = vrot.lane.b32.xlu0 %v394, 64
  %v396 = vpop.permute.xlu0 %395
  %v397 = vsel %vm75, %v396, 0
  %399 = vmatprep.subr.mxu0 0.0
  %400 = vmatpush1.msra.mxu0 0.0
  %401 = vmatprep.subr.mxu0 0.0
  %402 = vmatpush1.msra.mxu0 0.0
  %403 = vmatprep.subr.mxu0 0.0
  %404 = vmatpush1.msra.mxu0 0.0
  %405 = vmatprep.subr.mxu0 0.0
  %406 = vmatpush1.msra.mxu0 0.0
  %407 = vmatprep.subr.mxu0 0.0
  %408 = vmatpush1.msra.mxu0 0.0
  %409 = vmatprep.subr.mxu0 0.0
  %410 = vmatpush1.msra.mxu0 0.0
  %411 = vmatprep.subr.mxu0 0.0
  %412 = vmatpush1.msra.mxu0 0.0
  %413 = vmatprep.subr.mxu0 0.0
  %414 = vmatpush1.msra.mxu0 0.0
  %415 = vmatprep.subr.mxu0 %v59
  %416 = vmatpush1.msra.mxu0 %v58
  %417 = vmatprep.subr.mxu0 %v57
  %418 = vmatpush1.msra.mxu0 %v56
  %419 = vmatprep.subr.mxu0 %v55
  %420 = vmatpush1.msra.mxu0 %v54
  %421 = vmatprep.subr.mxu0 %v53
  %422 = vmatpush1.msra.mxu0 %v52
  %423 = vmatprep.subr.mxu0 %v51
  %424 = vmatpush1.msra.mxu0 %v50
  %425 = vmatprep.subr.mxu0 %v49
  %426 = vmatpush1.msra.mxu0 %v48
  %427 = vmatprep.subr.mxu0 %v47
  %428 = vmatpush1.msra.mxu0 %v46
  %429 = vmatprep.subr.mxu0 %v45
  %430 = vmatpush1.msra.mxu0 %v44
  %431 = vmatprep.subr.mxu0 0.0
  %432 = vmatpush2.msra.mxu0 0.0
  %433 = vmatprep.subr.mxu0 0.0
  %434 = vmatpush2.msra.mxu0 0.0
  %435 = vmatprep.subr.mxu0 0.0
  %436 = vmatpush2.msra.mxu0 0.0
  %437 = vmatprep.subr.mxu0 0.0
  %438 = vmatpush2.msra.mxu0 0.0
  %439 = vmatprep.subr.mxu0 0.0
  %440 = vmatpush2.msra.mxu0 0.0
  %441 = vmatprep.subr.mxu0 0.0
  %442 = vmatpush2.msra.mxu0 0.0
  %443 = vmatprep.subr.mxu0 0.0
  %444 = vmatpush2.msra.mxu0 0.0
  %445 = vmatprep.subr.mxu0 0.0
  %446 = vmatpush2.msra.mxu0 0.0
  %447 = vmatprep.subr.mxu0 0.0
  %448 = vmatpush2.msra.mxu0 0.0
  %449 = vmatprep.subr.mxu0 0.0
  %450 = vmatpush2.msra.mxu0 0.0
  %451 = vmatprep.subr.mxu0 0.0
  %452 = vmatpush2.msra.mxu0 0.0
  %453 = vmatprep.subr.mxu0 0.0
  %454 = vmatpush2.msra.mxu0 0.0
  %455 = vmatprep.subr.mxu0 0.0
  %456 = vmatpush2.msra.mxu0 0.0
  %457 = vmatprep.subr.mxu0 0.0
  %458 = vmatpush2.msra.mxu0 0.0
  %459 = vmatprep.subr.mxu0 0.0
  %460 = vmatpush2.msra.mxu0 0.0
  %461 = vmatprep.subr.mxu0 0.0
  %462 = vmatpush2.msra.mxu0 0.0
  %463 = vmatprep.mubr.f32.mxu0 0.0
  %464 = vmatmul.mubr.f32.gmra.mxu0 %v397
  %v465 = vpop.f32.mrf.mxu0
  %v466 = vadd.f32 0.0, %v465
  %v467 = vpop.f32.mrf.mxu0
  %v468 = vadd.f32 0.0, %v467
  %469 = vdwg.mxu0
  %v472 = vrot.slane %v466, 4
  %v473 = vrot.slane %v468, 4
  %v476 = vadd.f32 %v149, %v472
  %v477 = vadd.f32 %v151, %v473
  %v478 = vxor.u32 %v476, 2147483648
  %v479 = vmul.f32 %v478, 1.442695
  %v480 = vpow.pop %v479
  %v481 = vadd.f32 %v480, 1.0
  %v482 = vrcp.pop %v481
  %v483 = vmul.f32 1.0, %v482
  %485 = vrot.lane.b32.xlu0 %v477, 64
  %v486 = vpop.permute.xlu0 %485
  %v488 = vmul.f32 %v483, %v486
  %v489 = vadd.f32 %v477, %v488
  %v490 = vtanh.pop %v489
  %v491 = vsub.f32 1.0, %v483
  %493 = vrot.lane.b32.xlu0 %v490, 64
  %v494 = vpop.permute.xlu0 %493
  %v496 = vmul.f32 %v491, %v494
  %v497 = vrot.slane %v376, 6
  %v499 = vmul.f32 %v483, %v497
  %v500 = vadd.f32 %v496, %v499
  %v502 = vcombine.high %v500, %v500
  %v504 = vunpack.c.l.s4 1983009808
  %v505 = vunpack.c.0.s8 %v504
  %v506 = vlaneseq
  %v507 = vshrl.u32 %v506, 7
  %v508 = vsub.s32 %v505, %v507
  %v509 = vrot.slane %v502, %v508
  %510 = vrot.lane.b32.xlu0 %v509, 64
  %v511 = vpop.permute.xlu0 %510
  %513 = vst.msk [vmem:[#allocation2 + $0x2] sm:$0x3] %vm267, %v511
  %515 = vst.msk [vmem:[#allocation2 + $0x4] sm:$0x3] %vm269, %v509
  %v516 = vrot.slane %v500, 4
  %517 = vrot.lane.b32.xlu0 %v516, 64
  %v518 = vpop.permute.xlu0 %517
  %v519 = vsel %vm75, %v518, 0
  %521 = vmatprep.subr.mxu0 0.0
  %522 = vmatpush1.msra.mxu0 0.0
  %523 = vmatprep.subr.mxu0 0.0
  %524 = vmatpush1.msra.mxu0 0.0
  %525 = vmatprep.subr.mxu0 0.0
  %526 = vmatpush1.msra.mxu0 0.0
  %527 = vmatprep.subr.mxu0 0.0
  %528 = vmatpush1.msra.mxu0 0.0
  %529 = vmatprep.subr.mxu0 0.0
  %530 = vmatpush1.msra.mxu0 0.0
  %531 = vmatprep.subr.mxu0 0.0
  %532 = vmatpush1.msra.mxu0 0.0
  %533 = vmatprep.subr.mxu0 0.0
  %534 = vmatpush1.msra.mxu0 0.0
  %535 = vmatprep.subr.mxu0 0.0
  %536 = vmatpush1.msra.mxu0 0.0
  %537 = vmatprep.subr.mxu0 %v59
  %538 = vmatpush1.msra.mxu0 %v58
  %539 = vmatprep.subr.mxu0 %v57
  %540 = vmatpush1.msra.mxu0 %v56
  %541 = vmatprep.subr.mxu0 %v55
  %542 = vmatpush1.msra.mxu0 %v54
  %543 = vmatprep.subr.mxu0 %v53
  %544 = vmatpush1.msra.mxu0 %v52
  %545 = vmatprep.subr.mxu0 %v51
  %546 = vmatpush1.msra.mxu0 %v50
  %547 = vmatprep.subr.mxu0 %v49
  %548 = vmatpush1.msra.mxu0 %v48
  %549 = vmatprep.subr.mxu0 %v47
  %550 = vmatpush1.msra.mxu0 %v46
  %551 = vmatprep.subr.mxu0 %v45
  %552 = vmatpush1.msra.mxu0 %v44
  %553 = vmatprep.subr.mxu0 0.0
  %554 = vmatpush2.msra.mxu0 0.0
  %555 = vmatprep.subr.mxu0 0.0
  %556 = vmatpush2.msra.mxu0 0.0
  %557 = vmatprep.subr.mxu0 0.0
  %558 = vmatpush2.msra.mxu0 0.0
  %559 = vmatprep.subr.mxu0 0.0
  %560 = vmatpush2.msra.mxu0 0.0
  %561 = vmatprep.subr.mxu0 0.0
  %562 = vmatpush2.msra.mxu0 0.0
  %563 = vmatprep.subr.mxu0 0.0
  %564 = vmatpush2.msra.mxu0 0.0
  %565 = vmatprep.subr.mxu0 0.0
  %566 = vmatpush2.msra.mxu0 0.0
  %567 = vmatprep.subr.mxu0 0.0
  %568 = vmatpush2.msra.mxu0 0.0
  %569 = vmatprep.subr.mxu0 0.0
  %570 = vmatpush2.msra.mxu0 0.0
  %571 = vmatprep.subr.mxu0 0.0
  %572 = vmatpush2.msra.mxu0 0.0
  %573 = vmatprep.subr.mxu0 0.0
  %574 = vmatpush2.msra.mxu0 0.0
  %575 = vmatprep.subr.mxu0 0.0
  %576 = vmatpush2.msra.mxu0 0.0
  %577 = vmatprep.subr.mxu0 0.0
  %578 = vmatpush2.msra.mxu0 0.0
  %579 = vmatprep.subr.mxu0 0.0
  %580 = vmatpush2.msra.mxu0 0.0
  %581 = vmatprep.subr.mxu0 0.0
  %582 = vmatpush2.msra.mxu0 0.0
  %583 = vmatprep.subr.mxu0 0.0
  %584 = vmatpush2.msra.mxu0 0.0
  %585 = vmatprep.mubr.f32.mxu0 0.0
  %586 = vmatmul.mubr.f32.gmra.mxu0 %v519
  %v587 = vpop.f32.mrf.mxu0
  %v588 = vadd.f32 0.0, %v587
  %v589 = vpop.f32.mrf.mxu0
  %v590 = vadd.f32 0.0, %v589
  %591 = vdwg.mxu0
  %v594 = vrot.slane %v588, 2
  %v595 = vrot.slane %v590, 2
  %v598 = vadd.f32 %v149, %v594
  %v599 = vadd.f32 %v151, %v595
  %v600 = vxor.u32 %v598, 2147483648
  %v601 = vmul.f32 %v600, 1.442695
  %v602 = vpow.pop %v601
  %v603 = vadd.f32 %v602, 1.0
  %v604 = vrcp.pop %v603
  %v605 = vmul.f32 1.0, %v604
  %607 = vrot.lane.b32.xlu0 %v599, 64
  %v608 = vpop.permute.xlu0 %607
  %v610 = vmul.f32 %v605, %v608
  %v611 = vadd.f32 %v599, %v610
  %v612 = vtanh.pop %v611
  %v613 = vsub.f32 1.0, %v605
  %615 = vrot.lane.b32.xlu0 %v612, 64
  %v616 = vpop.permute.xlu0 %615
  %v618 = vmul.f32 %v613, %v616
  %v619 = vrot.slane %v500, 6
  %v621 = vmul.f32 %v605, %v619
  %v622 = vadd.f32 %v618, %v621
  %v624 = vcombine.high %v622, %v622
  %v626 = vunpack.c.l.s4 1983009808
  %v627 = vunpack.c.0.s8 %v626
  %v628 = vlaneseq
  %v629 = vshrl.u32 %v628, 7
  %v630 = vsub.s32 %v627, %v629
  %v631 = vrot.slane %v624, %v630
  %v632 = vcombine.high %v631, %v631
  %634 = vst.msk [vmem:[#allocation2 + $0x2] sm:$0x3] %vm387, %v632
  %635 = vrot.lane.b32.xlu0 %v632, 64
  %v636 = vpop.permute.xlu0 %635
  %638 = vst.msk [vmem:[#allocation2 + $0x4] sm:$0x3] %vm392, %v636
  %v639 = vrot.slane %v622, 6
  %640 = vrot.lane.b32.xlu0 %v639, 64
  %v641 = vpop.permute.xlu0 %640
  %v642 = vsel %vm75, %v641, 0
  %644 = vmatprep.subr.mxu0 0.0
  %645 = vmatpush1.msra.mxu0 0.0
  %646 = vmatprep.subr.mxu0 0.0
  %647 = vmatpush1.msra.mxu0 0.0
  %648 = vmatprep.subr.mxu0 0.0
  %649 = vmatpush1.msra.mxu0 0.0
  %650 = vmatprep.subr.mxu0 0.0
  %651 = vmatpush1.msra.mxu0 0.0
  %652 = vmatprep.subr.mxu0 0.0
  %653 = vmatpush1.msra.mxu0 0.0
  %654 = vmatprep.subr.mxu0 0.0
  %655 = vmatpush1.msra.mxu0 0.0
  %656 = vmatprep.subr.mxu0 0.0
  %657 = vmatpush1.msra.mxu0 0.0
  %658 = vmatprep.subr.mxu0 0.0
  %659 = vmatpush1.msra.mxu0 0.0
  %660 = vmatprep.subr.mxu0 %v59
  %661 = vmatpush1.msra.mxu0 %v58
  %662 = vmatprep.subr.mxu0 %v57
  %663 = vmatpush1.msra.mxu0 %v56
  %664 = vmatprep.subr.mxu0 %v55
  %665 = vmatpush1.msra.mxu0 %v54
  %666 = vmatprep.subr.mxu0 %v53
  %667 = vmatpush1.msra.mxu0 %v52
  %668 = vmatprep.subr.mxu0 %v51
  %669 = vmatpush1.msra.mxu0 %v50
  %670 = vmatprep.subr.mxu0 %v49
  %671 = vmatpush1.msra.mxu0 %v48
  %672 = vmatprep.subr.mxu0 %v47
  %673 = vmatpush1.msra.mxu0 %v46
  %674 = vmatprep.subr.mxu0 %v45
  %675 = vmatpush1.msra.mxu0 %v44
  %676 = vmatprep.subr.mxu0 0.0
  %677 = vmatpush2.msra.mxu0 0.0
  %678 = vmatprep.subr.mxu0 0.0
  %679 = vmatpush2.msra.mxu0 0.0
  %680 = vmatprep.subr.mxu0 0.0
  %681 = vmatpush2.msra.mxu0 0.0
  %682 = vmatprep.subr.mxu0 0.0
  %683 = vmatpush2.msra.mxu0 0.0
  %684 = vmatprep.subr.mxu0 0.0
  %685 = vmatpush2.msra.mxu0 0.0
  %686 = vmatprep.subr.mxu0 0.0
  %687 = vmatpush2.msra.mxu0 0.0
  %688 = vmatprep.subr.mxu0 0.0
  %689 = vmatpush2.msra.mxu0 0.0
  %690 = vmatprep.subr.mxu0 0.0
  %691 = vmatpush2.msra.mxu0 0.0
  %692 = vmatprep.subr.mxu0 0.0
  %693 = vmatpush2.msra.mxu0 0.0
  %694 = vmatprep.subr.mxu0 0.0
  %695 = vmatpush2.msra.mxu0 0.0
  %696 = vmatprep.subr.mxu0 0.0
  %697 = vmatpush2.msra.mxu0 0.0
  %698 = vmatprep.subr.mxu0 0.0
  %699 = vmatpush2.msra.mxu0 0.0
  %700 = vmatprep.subr.mxu0 0.0
  %701 = vmatpush2.msra.mxu0 0.0
  %702 = vmatprep.subr.mxu0 0.0
  %703 = vmatpush2.msra.mxu0 0.0
  %704 = vmatprep.subr.mxu0 0.0
  %705 = vmatpush2.msra.mxu0 0.0
  %706 = vmatprep.subr.mxu0 0.0
  %707 = vmatpush2.msra.mxu0 0.0
  %708 = vmatprep.mubr.f32.mxu0 0.0
  %709 = vmatmul.mubr.f32.gmra.mxu0 %v642
  %v710 = vpop.f32.mrf.mxu0
  %v711 = vadd.f32 0.0, %v710
  %v712 = vpop.f32.mrf.mxu0
  %v713 = vadd.f32 0.0, %v712
  %714 = vdwg.mxu0
  %v715 = vadd.f32 %v155, %v711
  %v716 = vadd.f32 %v157, %v713
  %v717 = vxor.u32 %v715, 2147483648
  %v718 = vmul.f32 %v717, 1.442695
  %v719 = vpow.pop %v718
  %v720 = vadd.f32 %v719, 1.0
  %v721 = vrcp.pop %v720
  %v722 = vmul.f32 1.0, %v721
  %724 = vrot.lane.b32.xlu0 %v716, 64
  %v725 = vpop.permute.xlu0 %724
  %v727 = vmul.f32 %v722, %v725
  %v728 = vadd.f32 %v716, %v727
  %v729 = vtanh.pop %v728
  %v730 = vsub.f32 1.0, %v722
  %732 = vrot.lane.b32.xlu0 %v729, 64
  %v733 = vpop.permute.xlu0 %732
  %v735 = vmul.f32 %v730, %v733
  %v737 = vmul.f32 %v722, %v639
  %v738 = vadd.f32 %v735, %v737
  %v741 = vunpack.c.l.s4 1983009808
  %v742 = vunpack.c.0.s8 %v741
  %v743 = vlaneseq
  %v744 = vshrl.u32 %v743, 7
  %v745 = vsub.s32 %v742, %v744
  %v746 = vrot.slane %v738, %v745
  %747 = vrot.lane.b32.xlu0 %v746, 64
  %v748 = vpop.permute.xlu0 %747
  %750 = vst.msk [vmem:[#allocation2 + $0x4] sm:$0x3] %vm267, %v748
  %751 = vst.msk [vmem:[#allocation2 + $0x2] sm:$0x3] %vm269, %v738
  %752 = vrot.lane.b32.xlu0 %v738, 64
  %v753 = vpop.permute.xlu0 %752
  %v754 = vsel %vm75, %v753, 0
  %756 = vmatprep.subr.mxu0 0.0
  %757 = vmatpush1.msra.mxu0 0.0
  %758 = vmatprep.subr.mxu0 0.0
  %759 = vmatpush1.msra.mxu0 0.0
  %760 = vmatprep.subr.mxu0 0.0
  %761 = vmatpush1.msra.mxu0 0.0
  %762 = vmatprep.subr.mxu0 0.0
  %763 = vmatpush1.msra.mxu0 0.0
  %764 = vmatprep.subr.mxu0 0.0
  %765 = vmatpush1.msra.mxu0 0.0
  %766 = vmatprep.subr.mxu0 0.0
  %767 = vmatpush1.msra.mxu0 0.0
  %768 = vmatprep.subr.mxu0 0.0
  %769 = vmatpush1.msra.mxu0 0.0
  %770 = vmatprep.subr.mxu0 0.0
  %771 = vmatpush1.msra.mxu0 0.0
  %772 = vmatprep.subr.mxu0 %v59
  %773 = vmatpush1.msra.mxu0 %v58
  %774 = vmatprep.subr.mxu0 %v57
  %775 = vmatpush1.msra.mxu0 %v56
  %776 = vmatprep.subr.mxu0 %v55
  %777 = vmatpush1.msra.mxu0 %v54
  %778 = vmatprep.subr.mxu0 %v53
  %779 = vmatpush1.msra.mxu0 %v52
  %780 = vmatprep.subr.mxu0 %v51
  %781 = vmatpush1.msra.mxu0 %v50
  %782 = vmatprep.subr.mxu0 %v49
  %783 = vmatpush1.msra.mxu0 %v48
  %784 = vmatprep.subr.mxu0 %v47
  %785 = vmatpush1.msra.mxu0 %v46
  %786 = vmatprep.subr.mxu0 %v45
  %787 = vmatpush1.msra.mxu0 %v44
  %788 = vmatprep.subr.mxu0 0.0
  %789 = vmatpush2.msra.mxu0 0.0
  %790 = vmatprep.subr.mxu0 0.0
  %791 = vmatpush2.msra.mxu0 0.0
  %792 = vmatprep.subr.mxu0 0.0
  %793 = vmatpush2.msra.mxu0 0.0
  %794 = vmatprep.subr.mxu0 0.0
  %795 = vmatpush2.msra.mxu0 0.0
  %796 = vmatprep.subr.mxu0 0.0
  %797 = vmatpush2.msra.mxu0 0.0
  %798 = vmatprep.subr.mxu0 0.0
  %799 = vmatpush2.msra.mxu0 0.0
  %800 = vmatprep.subr.mxu0 0.0
  %801 = vmatpush2.msra.mxu0 0.0
  %802 = vmatprep.subr.mxu0 0.0
  %803 = vmatpush2.msra.mxu0 0.0
  %804 = vmatprep.subr.mxu0 0.0
  %805 = vmatpush2.msra.mxu0 0.0
  %806 = vmatprep.subr.mxu0 0.0
  %807 = vmatpush2.msra.mxu0 0.0
  %808 = vmatprep.subr.mxu0 0.0
  %809 = vmatpush2.msra.mxu0 0.0
  %810 = vmatprep.subr.mxu0 0.0
  %811 = vmatpush2.msra.mxu0 0.0
  %812 = vmatprep.subr.mxu0 0.0
  %813 = vmatpush2.msra.mxu0 0.0
  %814 = vmatprep.subr.mxu0 0.0
  %815 = vmatpush2.msra.mxu0 0.0
  %816 = vmatprep.subr.mxu0 0.0
  %817 = vmatpush2.msra.mxu0 0.0
  %818 = vmatprep.subr.mxu0 0.0
  %819 = vmatpush2.msra.mxu0 0.0
  %820 = vmatprep.mubr.f32.mxu0 0.0
  %821 = vmatmul.mubr.f32.gmra.mxu0 %v754
  %v822 = vpop.f32.mrf.mxu0
  %v823 = vadd.f32 0.0, %v822
  %v824 = vpop.f32.mrf.mxu0
  %v825 = vadd.f32 0.0, %v824
  %826 = vdwg.mxu0
  %v829 = vrot.slane %v823, 6
  %v830 = vrot.slane %v825, 6
  %v833 = vadd.f32 %v155, %v829
  %v834 = vadd.f32 %v157, %v830
  %v835 = vxor.u32 %v833, 2147483648
  %v836 = vmul.f32 %v835, 1.442695
  %v837 = vpow.pop %v836
  %v838 = vadd.f32 %v837, 1.0
  %v839 = vrcp.pop %v838
  %v840 = vmul.f32 1.0, %v839
  %842 = vrot.lane.b32.xlu0 %v834, 64
  %v843 = vpop.permute.xlu0 %842
  %v845 = vmul.f32 %v840, %v843
  %v846 = vadd.f32 %v834, %v845
  %v847 = vtanh.pop %v846
  %v848 = vsub.f32 1.0, %v840
  %850 = vrot.lane.b32.xlu0 %v847, 64
  %v851 = vpop.permute.xlu0 %850
  %v853 = vmul.f32 %v848, %v851
  %v854 = vrot.slane %v738, 6
  %v856 = vmul.f32 %v840, %v854
  %v857 = vadd.f32 %v853, %v856
  %v860 = vunpack.c.l.s4 1983009808
  %v861 = vunpack.c.0.s8 %v860
  %v862 = vlaneseq
  %v863 = vshrl.u32 %v862, 7
  %v864 = vsub.s32 %v861, %v863
  %v865 = vrot.slane %v857, %v864
  %v866 = vcombine.high %v865, %v865
  %868 = vst.msk [vmem:[#allocation2 + $0x4] sm:$0x3] %vm387, %v866
  %869 = vrot.lane.b32.xlu0 %v866, 64
  %v870 = vpop.permute.xlu0 %869
  %872 = vst.msk [vmem:[#allocation2 + $0x2] sm:$0x3] %vm392, %v870
  %v873 = vrot.slane %v857, 2
  %874 = vrot.lane.b32.xlu0 %v873, 64
  %v875 = vpop.permute.xlu0 %874
  %v876 = vsel %vm75, %v875, 0
  %878 = vmatprep.subr.mxu0 0.0
  %879 = vmatpush1.msra.mxu0 0.0
  %880 = vmatprep.subr.mxu0 0.0
  %881 = vmatpush1.msra.mxu0 0.0
  %882 = vmatprep.subr.mxu0 0.0
  %883 = vmatpush1.msra.mxu0 0.0
  %884 = vmatprep.subr.mxu0 0.0
  %885 = vmatpush1.msra.mxu0 0.0
  %886 = vmatprep.subr.mxu0 0.0
  %887 = vmatpush1.msra.mxu0 0.0
  %888 = vmatprep.subr.mxu0 0.0
  %889 = vmatpush1.msra.mxu0 0.0
  %890 = vmatprep.subr.mxu0 0.0
  %891 = vmatpush1.msra.mxu0 0.0
  %892 = vmatprep.subr.mxu0 0.0
  %893 = vmatpush1.msra.mxu0 0.0
  %894 = vmatprep.subr.mxu0 %v59
  %895 = vmatpush1.msra.mxu0 %v58
  %896 = vmatprep.subr.mxu0 %v57
  %897 = vmatpush1.msra.mxu0 %v56
  %898 = vmatprep.subr.mxu0 %v55
  %899 = vmatpush1.msra.mxu0 %v54
  %900 = vmatprep.subr.mxu0 %v53
  %901 = vmatpush1.msra.mxu0 %v52
  %902 = vmatprep.subr.mxu0 %v51
  %903 = vmatpush1.msra.mxu0 %v50
  %904 = vmatprep.subr.mxu0 %v49
  %905 = vmatpush1.msra.mxu0 %v48
  %906 = vmatprep.subr.mxu0 %v47
  %907 = vmatpush1.msra.mxu0 %v46
  %908 = vmatprep.subr.mxu0 %v45
  %909 = vmatpush1.msra.mxu0 %v44
  %910 = vmatprep.subr.mxu0 0.0
  %911 = vmatpush2.msra.mxu0 0.0
  %912 = vmatprep.subr.mxu0 0.0
  %913 = vmatpush2.msra.mxu0 0.0
  %914 = vmatprep.subr.mxu0 0.0
  %915 = vmatpush2.msra.mxu0 0.0
  %916 = vmatprep.subr.mxu0 0.0
  %917 = vmatpush2.msra.mxu0 0.0
  %918 = vmatprep.subr.mxu0 0.0
  %919 = vmatpush2.msra.mxu0 0.0
  %920 = vmatprep.subr.mxu0 0.0
  %921 = vmatpush2.msra.mxu0 0.0
  %922 = vmatprep.subr.mxu0 0.0
  %923 = vmatpush2.msra.mxu0 0.0
  %924 = vmatprep.subr.mxu0 0.0
  %925 = vmatpush2.msra.mxu0 0.0
  %926 = vmatprep.subr.mxu0 0.0
  %927 = vmatpush2.msra.mxu0 0.0
  %928 = vmatprep.subr.mxu0 0.0
  %929 = vmatpush2.msra.mxu0 0.0
  %930 = vmatprep.subr.mxu0 0.0
  %931 = vmatpush2.msra.mxu0 0.0
  %932 = vmatprep.subr.mxu0 0.0
  %933 = vmatpush2.msra.mxu0 0.0
  %934 = vmatprep.subr.mxu0 0.0
  %935 = vmatpush2.msra.mxu0 0.0
  %936 = vmatprep.subr.mxu0 0.0
  %937 = vmatpush2.msra.mxu0 0.0
  %938 = vmatprep.subr.mxu0 0.0
  %939 = vmatpush2.msra.mxu0 0.0
  %940 = vmatprep.subr.mxu0 0.0
  %941 = vmatpush2.msra.mxu0 0.0
  %942 = vmatprep.mubr.f32.mxu0 0.0
  %943 = vmatmul.mubr.f32.gmra.mxu0 %v876
  %v944 = vpop.f32.mrf.mxu0
  %v945 = vadd.f32 0.0, %v944
  %v946 = vpop.f32.mrf.mxu0
  %v947 = vadd.f32 0.0, %v946
  %948 = vdwg.mxu0
  %v951 = vrot.slane %v945, 4
  %v952 = vrot.slane %v947, 4
  %v955 = vadd.f32 %v155, %v951
  %v956 = vadd.f32 %v157, %v952
  %v957 = vxor.u32 %v955, 2147483648
  %v958 = vmul.f32 %v957, 1.442695
  %v959 = vpow.pop %v958
  %v960 = vadd.f32 %v959, 1.0
  %v961 = vrcp.pop %v960
  %v962 = vmul.f32 1.0, %v961
  %964 = vrot.lane.b32.xlu0 %v956, 64
  %v965 = vpop.permute.xlu0 %964
  %v967 = vmul.f32 %v962, %v965
  %v968 = vadd.f32 %v956, %v967
  %v969 = vtanh.pop %v968
  %v970 = vsub.f32 1.0, %v962
  %972 = vrot.lane.b32.xlu0 %v969, 64
  %v973 = vpop.permute.xlu0 %972
  %v975 = vmul.f32 %v970, %v973
  %v976 = vrot.slane %v857, 6
  %v978 = vmul.f32 %v962, %v976
  %v979 = vadd.f32 %v975, %v978
  %v981 = vcombine.high %v979, %v979
  %v983 = vunpack.c.l.s4 1983009808
  %v984 = vunpack.c.0.s8 %v983
  %v985 = vlaneseq
  %v986 = vshrl.u32 %v985, 7
  %v987 = vsub.s32 %v984, %v986
  %v988 = vrot.slane %v981, %v987
  %989 = vrot.lane.b32.xlu0 %v988, 64
  %v990 = vpop.permute.xlu0 %989
  %992 = vst.msk [vmem:[#allocation2 + $0x6] sm:$0x3] %vm267, %v990
  %994 = vst.msk [vmem:[#allocation2] sm:$0x3] %vm269, %v988
  %v995 = vrot.slane %v979, 4
  %996 = vrot.lane.b32.xlu0 %v995, 64
  %v997 = vpop.permute.xlu0 %996
  %v998 = vsel %vm75, %v997, 0
  %1000 = vmatprep.subr.mxu0 0.0
  %1001 = vmatpush1.msra.mxu0 0.0
  %1002 = vmatprep.subr.mxu0 0.0
  %1003 = vmatpush1.msra.mxu0 0.0
  %1004 = vmatprep.subr.mxu0 0.0
  %1005 = vmatpush1.msra.mxu0 0.0
  %1006 = vmatprep.subr.mxu0 0.0
  %1007 = vmatpush1.msra.mxu0 0.0
  %1008 = vmatprep.subr.mxu0 0.0
  %1009 = vmatpush1.msra.mxu0 0.0
  %1010 = vmatprep.subr.mxu0 0.0
  %1011 = vmatpush1.msra.mxu0 0.0
  %1012 = vmatprep.subr.mxu0 0.0
  %1013 = vmatpush1.msra.mxu0 0.0
  %1014 = vmatprep.subr.mxu0 0.0
  %1015 = vmatpush1.msra.mxu0 0.0
  %1016 = vmatprep.subr.mxu0 %v59
  %1017 = vmatpush1.msra.mxu0 %v58
  %1018 = vmatprep.subr.mxu0 %v57
  %1019 = vmatpush1.msra.mxu0 %v56
  %1020 = vmatprep.subr.mxu0 %v55
  %1021 = vmatpush1.msra.mxu0 %v54
  %1022 = vmatprep.subr.mxu0 %v53
  %1023 = vmatpush1.msra.mxu0 %v52
  %1024 = vmatprep.subr.mxu0 %v51
  %1025 = vmatpush1.msra.mxu0 %v50
  %1026 = vmatprep.subr.mxu0 %v49
  %1027 = vmatpush1.msra.mxu0 %v48
  %1028 = vmatprep.subr.mxu0 %v47
  %1029 = vmatpush1.msra.mxu0 %v46
  %1030 = vmatprep.subr.mxu0 %v45
  %1031 = vmatpush1.msra.mxu0 %v44
  %1032 = vmatprep.subr.mxu0 0.0
  %1033 = vmatpush2.msra.mxu0 0.0
  %1034 = vmatprep.subr.mxu0 0.0
  %1035 = vmatpush2.msra.mxu0 0.0
  %1036 = vmatprep.subr.mxu0 0.0
  %1037 = vmatpush2.msra.mxu0 0.0
  %1038 = vmatprep.subr.mxu0 0.0
  %1039 = vmatpush2.msra.mxu0 0.0
  %1040 = vmatprep.subr.mxu0 0.0
  %1041 = vmatpush2.msra.mxu0 0.0
  %1042 = vmatprep.subr.mxu0 0.0
  %1043 = vmatpush2.msra.mxu0 0.0
  %1044 = vmatprep.subr.mxu0 0.0
  %1045 = vmatpush2.msra.mxu0 0.0
  %1046 = vmatprep.subr.mxu0 0.0
  %1047 = vmatpush2.msra.mxu0 0.0
  %1048 = vmatprep.subr.mxu0 0.0
  %1049 = vmatpush2.msra.mxu0 0.0
  %1050 = vmatprep.subr.mxu0 0.0
  %1051 = vmatpush2.msra.mxu0 0.0
  %1052 = vmatprep.subr.mxu0 0.0
  %1053 = vmatpush2.msra.mxu0 0.0
  %1054 = vmatprep.subr.mxu0 0.0
  %1055 = vmatpush2.msra.mxu0 0.0
  %1056 = vmatprep.subr.mxu0 0.0
  %1057 = vmatpush2.msra.mxu0 0.0
  %1058 = vmatprep.subr.mxu0 0.0
  %1059 = vmatpush2.msra.mxu0 0.0
  %1060 = vmatprep.subr.mxu0 0.0
  %1061 = vmatpush2.msra.mxu0 0.0
  %1062 = vmatprep.subr.mxu0 0.0
  %1063 = vmatpush2.msra.mxu0 0.0
  %1064 = vmatprep.mubr.f32.mxu0 0.0
  %1065 = vmatmul.mubr.f32.gmra.mxu0 %v998
  %v1066 = vpop.f32.mrf.mxu0
  %v1067 = vadd.f32 0.0, %v1066
  %v1068 = vpop.f32.mrf.mxu0
  %v1069 = vadd.f32 0.0, %v1068
  %1070 = vdwg.mxu0
  %v1073 = vrot.slane %v1067, 2
  %v1074 = vrot.slane %v1069, 2
  %v1077 = vadd.f32 %v155, %v1073
  %v1078 = vadd.f32 %v157, %v1074
  %v1079 = vxor.u32 %v1077, 2147483648
  %v1080 = vmul.f32 %v1079, 1.442695
  %v1081 = vpow.pop %v1080
  %v1082 = vadd.f32 %v1081, 1.0
  %v1083 = vrcp.pop %v1082
  %v1084 = vmul.f32 1.0, %v1083
  %1086 = vrot.lane.b32.xlu0 %v1078, 64
  %v1087 = vpop.permute.xlu0 %1086
  %v1089 = vmul.f32 %v1084, %v1087
  %v1090 = vadd.f32 %v1078, %v1089
  %v1091 = vtanh.pop %v1090
  %v1092 = vsub.f32 1.0, %v1084
  %1094 = vrot.lane.b32.xlu0 %v1091, 64
  %v1095 = vpop.permute.xlu0 %1094
  %v1097 = vmul.f32 %v1092, %v1095
  %v1098 = vrot.slane %v979, 6
  %v1100 = vmul.f32 %v1084, %v1098
  %v1101 = vadd.f32 %v1097, %v1100
  %v1103 = vcombine.high %v1101, %v1101
  %v1105 = vunpack.c.l.s4 1983009808
  %v1106 = vunpack.c.0.s8 %v1105
  %v1107 = vlaneseq
  %v1108 = vshrl.u32 %v1107, 7
  %v1109 = vsub.s32 %v1106, %v1108
  %v1110 = vrot.slane %v1103, %v1109
  %v1111 = vcombine.high %v1110, %v1110
  %1113 = vst.msk [vmem:[#allocation2 + $0x6] sm:$0x3] %vm387, %v1111
  %1114 = vrot.lane.b32.xlu0 %v1111, 64
  %v1115 = vpop.permute.xlu0 %1114
  %1117 = vst.msk [vmem:[#allocation2] sm:$0x3] %vm392, %v1115
  %v1118 = vld [vmem:[#allocation2] sm:$0xff]
  %v1119 = vld [vmem:[%s4] sm:$0xff]
  %v1120 = vld [vmem:[%s4 + $0x8] sm:$0xff]
  %v1121 = vld [vmem:[%s4 + $0x10] sm:$0xff]
  %v1122 = vld [vmem:[%s4 + $0x18] sm:$0xff]
  %v1123 = vld [vmem:[%s4 + $0x20] sm:$0xff]
  %v1124 = vld [vmem:[%s4 + $0x28] sm:$0xff]
  %v1125 = vld [vmem:[%s4 + $0x30] sm:$0xff]
  %v1126 = vld [vmem:[%s4 + $0x38] sm:$0xff]
  %v1127 = vld [vmem:[%s4 + $0x40] sm:$0xff]
  %v1128 = vld [vmem:[%s4 + $0x48] sm:$0xff]
  %v1129 = vld [vmem:[%s4 + $0x50] sm:$0xff]
  %v1130 = vld [vmem:[%s4 + $0x58] sm:$0xff]
  %v1131 = vld [vmem:[%s4 + $0x60] sm:$0xff]
  %v1132 = vld [vmem:[%s4 + $0x68] sm:$0xff]
  %v1133 = vld [vmem:[%s4 + $0x70] sm:$0xff]
  %v1134 = vld [vmem:[%s4 + $0x78] sm:$0xff]
  %v1135 = vld [vmem:[%s4 + $0x80] sm:$0xff]
  %v1136 = vld [vmem:[%s4 + $0x88] sm:$0xff]
  %v1137 = vld [vmem:[%s4 + $0x90] sm:$0xff]
  %v1138 = vld [vmem:[%s4 + $0x98] sm:$0xff]
  %v1139 = vld [vmem:[%s4 + $0xa0] sm:$0xff]
  %v1140 = vld [vmem:[%s4 + $0xa8] sm:$0xff]
  %v1141 = vld [vmem:[%s4 + $0xb0] sm:$0xff]
  %v1142 = vld [vmem:[%s4 + $0xb8] sm:$0xff]
  %v1143 = vld [vmem:[%s4 + $0xc0] sm:$0xff]
  %v1144 = vld [vmem:[%s4 + $0xc8] sm:$0xff]
  %v1145 = vld [vmem:[%s4 + $0xd0] sm:$0xff]
  %v1146 = vld [vmem:[%s4 + $0xd8] sm:$0xff]
  %v1147 = vld [vmem:[%s4 + $0xe0] sm:$0xff]
  %v1148 = vld [vmem:[%s4 + $0xe8] sm:$0xff]
  %v1149 = vld [vmem:[%s4 + $0xf0] sm:$0xff]
  %v1150 = vld [vmem:[%s4 + $0xf8] sm:$0xff]
  %v1151 = vld [vmem:[%s4 + $0x100] sm:$0xff]
  %v1152 = vld [vmem:[%s4 + $0x108] sm:$0xff]
  %v1153 = vld [vmem:[%s4 + $0x110] sm:$0xff]
  %v1154 = vld [vmem:[%s4 + $0x118] sm:$0xff]
  %v1155 = vld [vmem:[%s4 + $0x120] sm:$0xff]
  %v1156 = vld [vmem:[%s4 + $0x128] sm:$0xff]
  %v1157 = vld [vmem:[%s4 + $0x130] sm:$0xff]
  %v1158 = vld [vmem:[%s4 + $0x138] sm:$0xff]
  %v1159 = vld [vmem:[%s4 + $0x140] sm:$0xff]
  %v1160 = vld [vmem:[%s4 + $0x148] sm:$0xff]
  %v1161 = vld [vmem:[%s4 + $0x150] sm:$0xff]
  %v1162 = vld [vmem:[%s4 + $0x158] sm:$0xff]
  %v1163 = vld [vmem:[%s4 + $0x160] sm:$0xff]
  %v1164 = vld [vmem:[%s4 + $0x168] sm:$0xff]
  %v1165 = vld [vmem:[%s4 + $0x170] sm:$0xff]
  %v1166 = vld [vmem:[%s4 + $0x178] sm:$0xff]
  %v1167 = vld [vmem:[%s4 + $0x180] sm:$0xff]
  %v1168 = vld [vmem:[%s4 + $0x188] sm:$0xff]
  %v1169 = vld [vmem:[%s4 + $0x190] sm:$0xff]
  %v1170 = vld [vmem:[%s4 + $0x198] sm:$0xff]
  %v1171 = vld [vmem:[%s4 + $0x1a0] sm:$0xff]
  %v1172 = vld [vmem:[%s4 + $0x1a8] sm:$0xff]
  %v1173 = vld [vmem:[%s4 + $0x1b0] sm:$0xff]
  %v1174 = vld [vmem:[%s4 + $0x1b8] sm:$0xff]
  %v1175 = vld [vmem:[%s4 + $0x1c0] sm:$0xff]
  %v1176 = vld [vmem:[%s4 + $0x1c8] sm:$0xff]
  %v1177 = vld [vmem:[%s4 + $0x1d0] sm:$0xff]
  %v1178 = vld [vmem:[%s4 + $0x1d8] sm:$0xff]
  %v1179 = vld [vmem:[%s4 + $0x1e0] sm:$0xff]
  %v1180 = vld [vmem:[%s4 + $0x1e8] sm:$0xff]
  %v1181 = vld [vmem:[%s4 + $0x1f0] sm:$0xff]
  %v1182 = vld [vmem:[%s4 + $0x1f8] sm:$0xff]
  %v1183 = vld [vmem:[%s4 + $0x200] sm:$0x1]
  %v1184 = vlaneseq
  %v1185 = vshrl.u32 %v1184, 7
  %v1186 = vsub.s32 0, %v1185
  %v1187 = vrot.slane %v1183, %v1186
  %v1189 = vcombine.high %v1118, %v1118
  %v1191 = vunpack.c.l.s4 1983009808
  %v1192 = vunpack.c.0.s8 %v1191
  %v1193 = vlaneseq
  %v1194 = vshrl.u32 %v1193, 7
  %v1195 = vsub.s32 %v1192, %v1194
  %v1196 = vrot.slane %v1118, %v1195
  %v1198 = vunpack.c.l.s4 1983009808
  %v1199 = vunpack.c.0.s8 %v1198
  %v1200 = vlaneseq
  %v1201 = vshrl.u32 %v1200, 7
  %v1202 = vsub.s32 %v1199, %v1201
  %v1203 = vrot.slane %v1189, %v1202
  %v1204 = vcombine.high %v1196, %v1196
  %v1205 = vcombine.high %v1203, %v1203
  %1210 = vmatprep.subr.mxu0 0.0
  %1211 = vmatpush1.msra.mxu0 %v1134
  %1212 = vmatprep.subr.mxu0 0.0
  %1213 = vmatpush1.msra.mxu0 %v1133
  %1214 = vmatprep.subr.mxu0 0.0
  %1215 = vmatpush1.msra.mxu0 %v1132
  %1216 = vmatprep.subr.mxu0 0.0
  %1217 = vmatpush1.msra.mxu0 %v1131
  %1218 = vmatprep.subr.mxu0 0.0
  %1219 = vmatpush1.msra.mxu0 %v1130
  %1220 = vmatprep.subr.mxu0 0.0
  %1221 = vmatpush1.msra.mxu0 %v1129
  %1222 = vmatprep.subr.mxu0 0.0
  %1223 = vmatpush1.msra.mxu0 %v1128
  %1224 = vmatprep.subr.mxu0 0.0
  %1225 = vmatpush1.msra.mxu0 %v1127
  %1226 = vmatprep.subr.mxu0 0.0
  %1227 = vmatpush1.msra.mxu0 %v1126
  %1228 = vmatprep.subr.mxu0 0.0
  %1229 = vmatpush1.msra.mxu0 %v1125
  %1230 = vmatprep.subr.mxu0 0.0
  %1231 = vmatpush1.msra.mxu0 %v1124
  %1232 = vmatprep.subr.mxu0 0.0
  %1233 = vmatpush1.msra.mxu0 %v1123
  %1234 = vmatprep.subr.mxu0 0.0
  %1235 = vmatpush1.msra.mxu0 %v1122
  %1236 = vmatprep.subr.mxu0 0.0
  %1237 = vmatpush1.msra.mxu0 %v1121
  %1238 = vmatprep.subr.mxu0 0.0
  %1239 = vmatpush1.msra.mxu0 %v1120
  %1240 = vmatprep.subr.mxu0 0.0
  %1241 = vmatpush1.msra.mxu0 %v1119
  %1242 = vmatprep.subr.mxu0 0.0
  %1243 = vmatpush2.msra.mxu0 %v1150
  %1244 = vmatprep.subr.mxu0 0.0
  %1245 = vmatpush2.msra.mxu0 %v1149
  %1246 = vmatprep.subr.mxu0 0.0
  %1247 = vmatpush2.msra.mxu0 %v1148
  %1248 = vmatprep.subr.mxu0 0.0
  %1249 = vmatpush2.msra.mxu0 %v1147
  %1250 = vmatprep.subr.mxu0 0.0
  %1251 = vmatpush2.msra.mxu0 %v1146
  %1252 = vmatprep.subr.mxu0 0.0
  %1253 = vmatpush2.msra.mxu0 %v1145
  %1254 = vmatprep.subr.mxu0 0.0
  %1255 = vmatpush2.msra.mxu0 %v1144
  %1256 = vmatprep.subr.mxu0 0.0
  %1257 = vmatpush2.msra.mxu0 %v1143
  %1258 = vmatprep.subr.mxu0 0.0
  %1259 = vmatpush2.msra.mxu0 %v1142
  %1260 = vmatprep.subr.mxu0 0.0
  %1261 = vmatpush2.msra.mxu0 %v1141
  %1262 = vmatprep.subr.mxu0 0.0
  %1263 = vmatpush2.msra.mxu0 %v1140
  %1264 = vmatprep.subr.mxu0 0.0
  %1265 = vmatpush2.msra.mxu0 %v1139
  %1266 = vmatprep.subr.mxu0 0.0
  %1267 = vmatpush2.msra.mxu0 %v1138
  %1268 = vmatprep.subr.mxu0 0.0
  %1269 = vmatpush2.msra.mxu0 %v1137
  %1270 = vmatprep.subr.mxu0 0.0
  %1271 = vmatpush2.msra.mxu0 %v1136
  %1272 = vmatprep.subr.mxu0 0.0
  %1273 = vmatpush2.msra.mxu0 %v1135
  %1274 = vmatprep.mubr.f32.mxu0 %v1204
  %1275 = vmatmul.mubr.f32.gmra.mxu0 %v1196
  %v1276 = vpop.f32.mrf.mxu0
  %v1277 = vadd.f32 %v1187, %v1276
  %v1278 = vpop.f32.mrf.mxu0
  %1279 = vdwg.mxu0
  %1280 = vmatprep.subr.mxu0 0.0
  %1281 = vmatpush1.msra.mxu0 %v1166
  %1282 = vmatprep.subr.mxu0 0.0
  %1283 = vmatpush1.msra.mxu0 %v1165
  %1284 = vmatprep.subr.mxu0 0.0
  %1285 = vmatpush1.msra.mxu0 %v1164
  %1286 = vmatprep.subr.mxu0 0.0
  %1287 = vmatpush1.msra.mxu0 %v1163
  %1288 = vmatprep.subr.mxu0 0.0
  %1289 = vmatpush1.msra.mxu0 %v1162
  %1290 = vmatprep.subr.mxu0 0.0
  %1291 = vmatpush1.msra.mxu0 %v1161
  %1292 = vmatprep.subr.mxu0 0.0
  %1293 = vmatpush1.msra.mxu0 %v1160
  %1294 = vmatprep.subr.mxu0 0.0
  %1295 = vmatpush1.msra.mxu0 %v1159
  %1296 = vmatprep.subr.mxu0 0.0
  %1297 = vmatpush1.msra.mxu0 %v1158
  %1298 = vmatprep.subr.mxu0 0.0
  %1299 = vmatpush1.msra.mxu0 %v1157
  %1300 = vmatprep.subr.mxu0 0.0
  %1301 = vmatpush1.msra.mxu0 %v1156
  %1302 = vmatprep.subr.mxu0 0.0
  %1303 = vmatpush1.msra.mxu0 %v1155
  %1304 = vmatprep.subr.mxu0 0.0
  %1305 = vmatpush1.msra.mxu0 %v1154
  %1306 = vmatprep.subr.mxu0 0.0
  %1307 = vmatpush1.msra.mxu0 %v1153
  %1308 = vmatprep.subr.mxu0 0.0
  %1309 = vmatpush1.msra.mxu0 %v1152
  %1310 = vmatprep.subr.mxu0 0.0
  %1311 = vmatpush1.msra.mxu0 %v1151
  %1312 = vmatprep.subr.mxu0 0.0
  %1313 = vmatpush2.msra.mxu0 %v1182
  %1314 = vmatprep.subr.mxu0 0.0
  %1315 = vmatpush2.msra.mxu0 %v1181
  %1316 = vmatprep.subr.mxu0 0.0
  %1317 = vmatpush2.msra.mxu0 %v1180
  %1318 = vmatprep.subr.mxu0 0.0
  %1319 = vmatpush2.msra.mxu0 %v1179
  %1320 = vmatprep.subr.mxu0 0.0
  %1321 = vmatpush2.msra.mxu0 %v1178
  %1322 = vmatprep.subr.mxu0 0.0
  %1323 = vmatpush2.msra.mxu0 %v1177
  %1324 = vmatprep.subr.mxu0 0.0
  %1325 = vmatpush2.msra.mxu0 %v1176
  %1326 = vmatprep.subr.mxu0 0.0
  %1327 = vmatpush2.msra.mxu0 %v1175
  %1328 = vmatprep.subr.mxu0 0.0
  %1329 = vmatpush2.msra.mxu0 %v1174
  %1330 = vmatprep.subr.mxu0 0.0
  %1331 = vmatpush2.msra.mxu0 %v1173
  %1332 = vmatprep.subr.mxu0 0.0
  %1333 = vmatpush2.msra.mxu0 %v1172
  %1334 = vmatprep.subr.mxu0 0.0
  %1335 = vmatpush2.msra.mxu0 %v1171
  %1336 = vmatprep.subr.mxu0 0.0
  %1337 = vmatpush2.msra.mxu0 %v1170
  %1338 = vmatprep.subr.mxu0 0.0
  %1339 = vmatpush2.msra.mxu0 %v1169
  %1340 = vmatprep.subr.mxu0 0.0
  %1341 = vmatpush2.msra.mxu0 %v1168
  %1342 = vmatprep.subr.mxu0 0.0
  %1343 = vmatpush2.msra.mxu0 %v1167
  %1344 = vmatprep.mubr.f32.mxu0 %v1205
  %1345 = vmatmul.mubr.f32.gmra.mxu0 %v1203
  %v1346 = vpop.f32.mrf.mxu0
  %v1347 = vadd.f32 %v1277, %v1346
  %v1348 = vpop.f32.mrf.mxu0
  %1349 = vdwg.mxu0
  %v1350 = vld [vmem:[%s1] sm:$0x3]
  %v1351 = vmul.f32 %v1347, 0.5
  %v1352 = vmul.f32 %v1351, 1.442695
  %v1353 = vpow.pop %v1352
  %1355 = vrot.lane.b32.xlu0 %v1353, 96
  %v1356 = vpop.permute.xlu0 %1355
  %v1358 = vmul.f32 %v1350, %v1356
  %v1359 = vadd.f32 %v1358, %v1347
  %v1360 = vld [vmem:[%s5] sm:$0xff]
  %v1361 = vld [vmem:[%s5 + $0x8] sm:$0xff]
  %v1362 = vld [vmem:[%s5 + $0x10] sm:$0xff]
  %v1363 = vld [vmem:[%s5 + $0x18] sm:$0xff]
  %v1364 = vld [vmem:[%s2] sm:$0x3]
  %v1365 = vld [vmem:[%s5 + $0x20] sm:$0x1]
  %1367 = vset.pattern.permute.xlu0 0
  %1368 = vperm.xlu0 %1367, %v1364
  %v1369 = vpop.permute.xlu0 %1368
  %v1371 = vlaneseq
  %v1372 = vshrl.u32 %v1371, 7
  %v1373 = vsub.s32 0, %v1372
  %v1374 = vrot.slane %v1365, %v1373
  %v1375 = vmul.f32 %v1369, %v1374
  %vm1376 = vcmask 261120
  %v1378 = vsel %vm1376, %v1359, 0
  %1380 = vmatprep.subr.mxu0 0.0
  %1381 = vmatpush1.msra.mxu0 0.0
  %1382 = vmatprep.subr.mxu0 0.0
  %1383 = vmatpush1.msra.mxu0 0.0
  %1384 = vmatprep.subr.mxu0 0.0
  %1385 = vmatpush1.msra.mxu0 0.0
  %1386 = vmatprep.subr.mxu0 0.0
  %1387 = vmatpush1.msra.mxu0 0.0
  %1388 = vmatprep.subr.mxu0 0.0
  %1389 = vmatpush1.msra.mxu0 0.0
  %1390 = vmatprep.subr.mxu0 0.0
  %1391 = vmatpush1.msra.mxu0 0.0
  %1392 = vmatprep.subr.mxu0 0.0
  %1393 = vmatpush1.msra.mxu0 0.0
  %1394 = vmatprep.subr.mxu0 0.0
  %1395 = vmatpush1.msra.mxu0 0.0
  %1396 = vmatprep.subr.mxu0 0.0
  %1397 = vmatpush1.msra.mxu0 0.0
  %1398 = vmatprep.subr.mxu0 0.0
  %1399 = vmatpush1.msra.mxu0 0.0
  %1400 = vmatprep.subr.mxu0 0.0
  %1401 = vmatpush1.msra.mxu0 0.0
  %1402 = vmatprep.subr.mxu0 0.0
  %1403 = vmatpush1.msra.mxu0 0.0
  %1404 = vmatprep.subr.mxu0 0.0
  %1405 = vmatpush1.msra.mxu0 %v1363
  %1406 = vmatprep.subr.mxu0 0.0
  %1407 = vmatpush1.msra.mxu0 %v1362
  %1408 = vmatprep.subr.mxu0 0.0
  %1409 = vmatpush1.msra.mxu0 %v1361
  %1410 = vmatprep.subr.mxu0 0.0
  %1411 = vmatpush1.msra.mxu0 %v1360
  %1412 = vmatprep.subr.mxu0 0.0
  %1413 = vmatpush2.msra.mxu0 0.0
  %1414 = vmatprep.subr.mxu0 0.0
  %1415 = vmatpush2.msra.mxu0 0.0
  %1416 = vmatprep.subr.mxu0 0.0
  %1417 = vmatpush2.msra.mxu0 0.0
  %1418 = vmatprep.subr.mxu0 0.0
  %1419 = vmatpush2.msra.mxu0 0.0
  %1420 = vmatprep.subr.mxu0 0.0
  %1421 = vmatpush2.msra.mxu0 0.0
  %1422 = vmatprep.subr.mxu0 0.0
  %1423 = vmatpush2.msra.mxu0 0.0
  %1424 = vmatprep.subr.mxu0 0.0
  %1425 = vmatpush2.msra.mxu0 0.0
  %1426 = vmatprep.subr.mxu0 0.0
  %1427 = vmatpush2.msra.mxu0 0.0
  %1428 = vmatprep.subr.mxu0 0.0
  %1429 = vmatpush2.msra.mxu0 0.0
  %1430 = vmatprep.subr.mxu0 0.0
  %1431 = vmatpush2.msra.mxu0 0.0
  %1432 = vmatprep.subr.mxu0 0.0
  %1433 = vmatpush2.msra.mxu0 0.0
  %1434 = vmatprep.subr.mxu0 0.0
  %1435 = vmatpush2.msra.mxu0 0.0
  %1436 = vmatprep.subr.mxu0 0.0
  %1437 = vmatpush2.msra.mxu0 0.0
  %1438 = vmatprep.subr.mxu0 0.0
  %1439 = vmatpush2.msra.mxu0 0.0
  %1440 = vmatprep.subr.mxu0 0.0
  %1441 = vmatpush2.msra.mxu0 0.0
  %1442 = vmatprep.subr.mxu0 0.0
  %1443 = vmatpush2.msra.mxu0 0.0
  %1444 = vmatprep.mubr.f32.mxu0 0.0
  %1445 = vmatmul.mubr.f32.gmra.mxu0 %v1378
  %v1446 = vpop.f32.mrf.mxu0
  %v1447 = vadd.f32 %v1375, %v1446
  %v1448 = vpop.f32.mrf.mxu0
  %1449 = vdwg.mxu0
  %v1450 = vld [vmem:[%s5 + $0x21] sm:$0x1]
  %v1451 = vlaneseq
  %v1452 = vshrl.u32 %v1451, 7
  %v1453 = vsub.s32 0, %v1452
  %v1454 = vrot.slane %v1450, %v1453
  %v1455 = vadd.f32 %v1447, %v1454
  %v1456 = vld [vmem:[%s6] sm:$0xff]
  %v1457 = vld [vmem:[%s6 + $0x8] sm:$0xff]
  %v1458 = vld [vmem:[%s6 + $0x10] sm:$0xff]
  %v1459 = vld [vmem:[%s6 + $0x18] sm:$0xff]
  %v1460 = vld [vmem:[%s6 + $0x20] sm:$0x1]
  %v1461 = vlaneseq
  %v1462 = vshrl.u32 %v1461, 7
  %v1463 = vsub.s32 0, %v1462
  %v1464 = vrot.slane %v1460, %v1463
  %v1465 = vld [vmem:[%s6 + $0x21] sm:$0x1]
  %v1466 = vlaneseq
  %v1467 = vshrl.u32 %v1466, 7
  %v1468 = vsub.s32 0, %v1467
  %v1469 = vrot.slane %v1465, %v1468
  %v1471 = vsel %vm1376, %v1455, 0
  %1473 = vmatprep.subr.mxu0 0.0
  %1474 = vmatpush1.msra.mxu0 0.0
  %1475 = vmatprep.subr.mxu0 0.0
  %1476 = vmatpush1.msra.mxu0 0.0
  %1477 = vmatprep.subr.mxu0 0.0
  %1478 = vmatpush1.msra.mxu0 0.0
  %1479 = vmatprep.subr.mxu0 0.0
  %1480 = vmatpush1.msra.mxu0 0.0
  %1481 = vmatprep.subr.mxu0 0.0
  %1482 = vmatpush1.msra.mxu0 0.0
  %1483 = vmatprep.subr.mxu0 0.0
  %1484 = vmatpush1.msra.mxu0 0.0
  %1485 = vmatprep.subr.mxu0 0.0
  %1486 = vmatpush1.msra.mxu0 0.0
  %1487 = vmatprep.subr.mxu0 0.0
  %1488 = vmatpush1.msra.mxu0 0.0
  %1489 = vmatprep.subr.mxu0 0.0
  %1490 = vmatpush1.msra.mxu0 0.0
  %1491 = vmatprep.subr.mxu0 0.0
  %1492 = vmatpush1.msra.mxu0 0.0
  %1493 = vmatprep.subr.mxu0 0.0
  %1494 = vmatpush1.msra.mxu0 0.0
  %1495 = vmatprep.subr.mxu0 0.0
  %1496 = vmatpush1.msra.mxu0 0.0
  %1497 = vmatprep.subr.mxu0 0.0
  %1498 = vmatpush1.msra.mxu0 %v1459
  %1499 = vmatprep.subr.mxu0 0.0
  %1500 = vmatpush1.msra.mxu0 %v1458
  %1501 = vmatprep.subr.mxu0 0.0
  %1502 = vmatpush1.msra.mxu0 %v1457
  %1503 = vmatprep.subr.mxu0 0.0
  %1504 = vmatpush1.msra.mxu0 %v1456
  %1505 = vmatprep.subr.mxu0 0.0
  %1506 = vmatpush2.msra.mxu0 0.0
  %1507 = vmatprep.subr.mxu0 0.0
  %1508 = vmatpush2.msra.mxu0 0.0
  %1509 = vmatprep.subr.mxu0 0.0
  %1510 = vmatpush2.msra.mxu0 0.0
  %1511 = vmatprep.subr.mxu0 0.0
  %1512 = vmatpush2.msra.mxu0 0.0
  %1513 = vmatprep.subr.mxu0 0.0
  %1514 = vmatpush2.msra.mxu0 0.0
  %1515 = vmatprep.subr.mxu0 0.0
  %1516 = vmatpush2.msra.mxu0 0.0
  %1517 = vmatprep.subr.mxu0 0.0
  %1518 = vmatpush2.msra.mxu0 0.0
  %1519 = vmatprep.subr.mxu0 0.0
  %1520 = vmatpush2.msra.mxu0 0.0
  %1521 = vmatprep.subr.mxu0 0.0
  %1522 = vmatpush2.msra.mxu0 0.0
  %1523 = vmatprep.subr.mxu0 0.0
  %1524 = vmatpush2.msra.mxu0 0.0
  %1525 = vmatprep.subr.mxu0 0.0
  %1526 = vmatpush2.msra.mxu0 0.0
  %1527 = vmatprep.subr.mxu0 0.0
  %1528 = vmatpush2.msra.mxu0 0.0
  %1529 = vmatprep.subr.mxu0 0.0
  %1530 = vmatpush2.msra.mxu0 0.0
  %1531 = vmatprep.subr.mxu0 0.0
  %1532 = vmatpush2.msra.mxu0 0.0
  %1533 = vmatprep.subr.mxu0 0.0
  %1534 = vmatpush2.msra.mxu0 0.0
  %1535 = vmatprep.subr.mxu0 0.0
  %1536 = vmatpush2.msra.mxu0 0.0
  %1537 = vmatprep.mubr.f32.mxu0 0.0
  %1538 = vmatmul.mubr.f32.gmra.mxu0 %v1471
  %v1539 = vpop.f32.mrf.mxu0
  %v1540 = vadd.f32 %v1464, %v1539
  %v1541 = vpop.f32.mrf.mxu0
  %1542 = vdwg.mxu0
  %v1543 = vxor.u32 %v1540, 2147483648
  %v1544 = vmul.f32 %v1543, 1.442695
  %v1545 = vpow.pop %v1544
  %v1546 = vadd.f32 %v1545, 1.0
  %v1547 = vrcp.pop %v1546
  %v1548 = vmul.f32 1.0, %v1547
  %v1549 = vmul.f32 %v1548, %v1469
  %1551 = vrot.lane.b32.xlu0 %v1549, 64
  %v1552 = vpop.permute.xlu0 %1551
  %v1554 = vadd.f32 %v1540, %v1552
  %v1555 = vtanh.pop %v1554
  %v1556 = vsub.f32 1.0, %v1548
  %1558 = vrot.lane.b32.xlu0 %v1555, 96
  %v1559 = vpop.permute.xlu0 %1558
  %v1561 = vmul.f32 %v1556, %v1559
  %1563 = vrot.lane.b32.xlu0 %v1561, 96
  %v1564 = vpop.permute.xlu0 %1563
  %v1565 = vsel %vm1376, %v1564, 0
  %1567 = vmatprep.subr.mxu0 0.0
  %1568 = vmatpush1.msra.mxu0 0.0
  %1569 = vmatprep.subr.mxu0 0.0
  %1570 = vmatpush1.msra.mxu0 0.0
  %1571 = vmatprep.subr.mxu0 0.0
  %1572 = vmatpush1.msra.mxu0 0.0
  %1573 = vmatprep.subr.mxu0 0.0
  %1574 = vmatpush1.msra.mxu0 0.0
  %1575 = vmatprep.subr.mxu0 0.0
  %1576 = vmatpush1.msra.mxu0 0.0
  %1577 = vmatprep.subr.mxu0 0.0
  %1578 = vmatpush1.msra.mxu0 0.0
  %1579 = vmatprep.subr.mxu0 0.0
  %1580 = vmatpush1.msra.mxu0 0.0
  %1581 = vmatprep.subr.mxu0 0.0
  %1582 = vmatpush1.msra.mxu0 0.0
  %1583 = vmatprep.subr.mxu0 0.0
  %1584 = vmatpush1.msra.mxu0 0.0
  %1585 = vmatprep.subr.mxu0 0.0
  %1586 = vmatpush1.msra.mxu0 0.0
  %1587 = vmatprep.subr.mxu0 0.0
  %1588 = vmatpush1.msra.mxu0 0.0
  %1589 = vmatprep.subr.mxu0 0.0
  %1590 = vmatpush1.msra.mxu0 0.0
  %1591 = vmatprep.subr.mxu0 0.0
  %1592 = vmatpush1.msra.mxu0 %v1459
  %1593 = vmatprep.subr.mxu0 0.0
  %1594 = vmatpush1.msra.mxu0 %v1458
  %1595 = vmatprep.subr.mxu0 0.0
  %1596 = vmatpush1.msra.mxu0 %v1457
  %1597 = vmatprep.subr.mxu0 0.0
  %1598 = vmatpush1.msra.mxu0 %v1456
  %1599 = vmatprep.subr.mxu0 0.0
  %1600 = vmatpush2.msra.mxu0 0.0
  %1601 = vmatprep.subr.mxu0 0.0
  %1602 = vmatpush2.msra.mxu0 0.0
  %1603 = vmatprep.subr.mxu0 0.0
  %1604 = vmatpush2.msra.mxu0 0.0
  %1605 = vmatprep.subr.mxu0 0.0
  %1606 = vmatpush2.msra.mxu0 0.0
  %1607 = vmatprep.subr.mxu0 0.0
  %1608 = vmatpush2.msra.mxu0 0.0
  %1609 = vmatprep.subr.mxu0 0.0
  %1610 = vmatpush2.msra.mxu0 0.0
  %1611 = vmatprep.subr.mxu0 0.0
  %1612 = vmatpush2.msra.mxu0 0.0
  %1613 = vmatprep.subr.mxu0 0.0
  %1614 = vmatpush2.msra.mxu0 0.0
  %1615 = vmatprep.subr.mxu0 0.0
  %1616 = vmatpush2.msra.mxu0 0.0
  %1617 = vmatprep.subr.mxu0 0.0
  %1618 = vmatpush2.msra.mxu0 0.0
  %1619 = vmatprep.subr.mxu0 0.0
  %1620 = vmatpush2.msra.mxu0 0.0
  %1621 = vmatprep.subr.mxu0 0.0
  %1622 = vmatpush2.msra.mxu0 0.0
  %1623 = vmatprep.subr.mxu0 0.0
  %1624 = vmatpush2.msra.mxu0 0.0
  %1625 = vmatprep.subr.mxu0 0.0
  %1626 = vmatpush2.msra.mxu0 0.0
  %1627 = vmatprep.subr.mxu0 0.0
  %1628 = vmatpush2.msra.mxu0 0.0
  %1629 = vmatprep.subr.mxu0 0.0
  %1630 = vmatpush2.msra.mxu0 0.0
  %1631 = vmatprep.mubr.f32.mxu0 0.0
  %1632 = vmatmul.mubr.f32.gmra.mxu0 %v1565
  %v1633 = vpop.f32.mrf.mxu0
  %v1634 = vadd.f32 %v1464, %v1633
  %v1635 = vpop.f32.mrf.mxu0
  %1636 = vdwg.mxu0
  %v1639 = vunpack.c.l.s4 1983009808
  %v1640 = vunpack.c.0.s8 %v1639
  %v1641 = vlaneseq
  %v1642 = vshrl.u32 %v1641, 7
  %v1643 = vsub.s32 %v1640, %v1642
  %v1644 = vrot.slane %v1634, %v1643
  %1645 = vrot.lane.b32.xlu0 %v1644, 32
  %v1646 = vpop.permute.xlu0 %1645
  %1648 = vst.msk [vmem:[#allocation3] sm:$0x3] %vm267, %v1646
  %v1649 = vxor.u32 %v1634, 2147483648
  %v1650 = vmul.f32 %v1649, 1.442695
  %v1651 = vpow.pop %v1650
  %v1652 = vadd.f32 %v1651, 1.0
  %v1653 = vrcp.pop %v1652
  %v1654 = vmul.f32 1.0, %v1653
  %v1655 = vmul.f32 %v1654, %v1469
  %1657 = vrot.lane.b32.xlu0 %v1655, 64
  %v1658 = vpop.permute.xlu0 %1657
  %v1660 = vadd.f32 %v1634, %v1658
  %v1661 = vtanh.pop %v1660
  %v1662 = vsub.f32 1.0, %v1654
  %1664 = vrot.lane.b32.xlu0 %v1661, 96
  %v1665 = vpop.permute.xlu0 %1664
  %v1667 = vmul.f32 %v1662, %v1665
  %1669 = vrot.lane.b32.xlu0 %v1667, 96
  %v1670 = vpop.permute.xlu0 %1669
  %v1671 = vsel %vm1376, %v1670, 0
  %1673 = vmatprep.subr.mxu0 0.0
  %1674 = vmatpush1.msra.mxu0 0.0
  %1675 = vmatprep.subr.mxu0 0.0
  %1676 = vmatpush1.msra.mxu0 0.0
  %1677 = vmatprep.subr.mxu0 0.0
  %1678 = vmatpush1.msra.mxu0 0.0
  %1679 = vmatprep.subr.mxu0 0.0
  %1680 = vmatpush1.msra.mxu0 0.0
  %1681 = vmatprep.subr.mxu0 0.0
  %1682 = vmatpush1.msra.mxu0 0.0
  %1683 = vmatprep.subr.mxu0 0.0
  %1684 = vmatpush1.msra.mxu0 0.0
  %1685 = vmatprep.subr.mxu0 0.0
  %1686 = vmatpush1.msra.mxu0 0.0
  %1687 = vmatprep.subr.mxu0 0.0
  %1688 = vmatpush1.msra.mxu0 0.0
  %1689 = vmatprep.subr.mxu0 0.0
  %1690 = vmatpush1.msra.mxu0 0.0
  %1691 = vmatprep.subr.mxu0 0.0
  %1692 = vmatpush1.msra.mxu0 0.0
  %1693 = vmatprep.subr.mxu0 0.0
  %1694 = vmatpush1.msra.mxu0 0.0
  %1695 = vmatprep.subr.mxu0 0.0
  %1696 = vmatpush1.msra.mxu0 0.0
  %1697 = vmatprep.subr.mxu0 0.0
  %1698 = vmatpush1.msra.mxu0 %v1459
  %1699 = vmatprep.subr.mxu0 0.0
  %1700 = vmatpush1.msra.mxu0 %v1458
  %1701 = vmatprep.subr.mxu0 0.0
  %1702 = vmatpush1.msra.mxu0 %v1457
  %1703 = vmatprep.subr.mxu0 0.0
  %1704 = vmatpush1.msra.mxu0 %v1456
  %1705 = vmatprep.subr.mxu0 0.0
  %1706 = vmatpush2.msra.mxu0 0.0
  %1707 = vmatprep.subr.mxu0 0.0
  %1708 = vmatpush2.msra.mxu0 0.0
  %1709 = vmatprep.subr.mxu0 0.0
  %1710 = vmatpush2.msra.mxu0 0.0
  %1711 = vmatprep.subr.mxu0 0.0
  %1712 = vmatpush2.msra.mxu0 0.0
  %1713 = vmatprep.subr.mxu0 0.0
  %1714 = vmatpush2.msra.mxu0 0.0
  %1715 = vmatprep.subr.mxu0 0.0
  %1716 = vmatpush2.msra.mxu0 0.0
  %1717 = vmatprep.subr.mxu0 0.0
  %1718 = vmatpush2.msra.mxu0 0.0
  %1719 = vmatprep.subr.mxu0 0.0
  %1720 = vmatpush2.msra.mxu0 0.0
  %1721 = vmatprep.subr.mxu0 0.0
  %1722 = vmatpush2.msra.mxu0 0.0
  %1723 = vmatprep.subr.mxu0 0.0
  %1724 = vmatpush2.msra.mxu0 0.0
  %1725 = vmatprep.subr.mxu0 0.0
  %1726 = vmatpush2.msra.mxu0 0.0
  %1727 = vmatprep.subr.mxu0 0.0
  %1728 = vmatpush2.msra.mxu0 0.0
  %1729 = vmatprep.subr.mxu0 0.0
  %1730 = vmatpush2.msra.mxu0 0.0
  %1731 = vmatprep.subr.mxu0 0.0
  %1732 = vmatpush2.msra.mxu0 0.0
  %1733 = vmatprep.subr.mxu0 0.0
  %1734 = vmatpush2.msra.mxu0 0.0
  %1735 = vmatprep.subr.mxu0 0.0
  %1736 = vmatpush2.msra.mxu0 0.0
  %1737 = vmatprep.mubr.f32.mxu0 0.0
  %1738 = vmatmul.mubr.f32.gmra.mxu0 %v1671
  %v1739 = vpop.f32.mrf.mxu0
  %v1740 = vadd.f32 %v1464, %v1739
  %v1741 = vpop.f32.mrf.mxu0
  %1742 = vdwg.mxu0
  %v1745 = vunpack.c.l.s4 1983009808
  %v1746 = vunpack.c.0.s8 %v1745
  %v1747 = vlaneseq
  %v1748 = vshrl.u32 %v1747, 7
  %v1749 = vsub.s32 %v1746, %v1748
  %v1750 = vrot.slane %v1740, %v1749
  %1751 = vrot.lane.b32.xlu0 %v1750, 64
  %v1752 = vpop.permute.xlu0 %1751
  %1754 = vst.msk [vmem:[#allocation3] sm:$0x3] %vm392, %v1752
  %v1755 = vxor.u32 %v1740, 2147483648
  %v1756 = vmul.f32 %v1755, 1.442695
  %v1757 = vpow.pop %v1756
  %v1758 = vadd.f32 %v1757, 1.0
  %v1759 = vrcp.pop %v1758
  %v1760 = vmul.f32 1.0, %v1759
  %v1761 = vmul.f32 %v1760, %v1469
  %1763 = vrot.lane.b32.xlu0 %v1761, 64
  %v1764 = vpop.permute.xlu0 %1763
  %v1766 = vadd.f32 %v1740, %v1764
  %v1767 = vtanh.pop %v1766
  %v1768 = vsub.f32 1.0, %v1760
  %1770 = vrot.lane.b32.xlu0 %v1767, 96
  %v1771 = vpop.permute.xlu0 %1770
  %v1773 = vmul.f32 %v1768, %v1771
  %1775 = vrot.lane.b32.xlu0 %v1773, 96
  %v1776 = vpop.permute.xlu0 %1775
  %v1777 = vsel %vm1376, %v1776, 0
  %1779 = vmatprep.subr.mxu0 0.0
  %1780 = vmatpush1.msra.mxu0 0.0
  %1781 = vmatprep.subr.mxu0 0.0
  %1782 = vmatpush1.msra.mxu0 0.0
  %1783 = vmatprep.subr.mxu0 0.0
  %1784 = vmatpush1.msra.mxu0 0.0
  %1785 = vmatprep.subr.mxu0 0.0
  %1786 = vmatpush1.msra.mxu0 0.0
  %1787 = vmatprep.subr.mxu0 0.0
  %1788 = vmatpush1.msra.mxu0 0.0
  %1789 = vmatprep.subr.mxu0 0.0
  %1790 = vmatpush1.msra.mxu0 0.0
  %1791 = vmatprep.subr.mxu0 0.0
  %1792 = vmatpush1.msra.mxu0 0.0
  %1793 = vmatprep.subr.mxu0 0.0
  %1794 = vmatpush1.msra.mxu0 0.0
  %1795 = vmatprep.subr.mxu0 0.0
  %1796 = vmatpush1.msra.mxu0 0.0
  %1797 = vmatprep.subr.mxu0 0.0
  %1798 = vmatpush1.msra.mxu0 0.0
  %1799 = vmatprep.subr.mxu0 0.0
  %1800 = vmatpush1.msra.mxu0 0.0
  %1801 = vmatprep.subr.mxu0 0.0
  %1802 = vmatpush1.msra.mxu0 0.0
  %1803 = vmatprep.subr.mxu0 0.0
  %1804 = vmatpush1.msra.mxu0 %v1459
  %1805 = vmatprep.subr.mxu0 0.0
  %1806 = vmatpush1.msra.mxu0 %v1458
  %1807 = vmatprep.subr.mxu0 0.0
  %1808 = vmatpush1.msra.mxu0 %v1457
  %1809 = vmatprep.subr.mxu0 0.0
  %1810 = vmatpush1.msra.mxu0 %v1456
  %1811 = vmatprep.subr.mxu0 0.0
  %1812 = vmatpush2.msra.mxu0 0.0
  %1813 = vmatprep.subr.mxu0 0.0
  %1814 = vmatpush2.msra.mxu0 0.0
  %1815 = vmatprep.subr.mxu0 0.0
  %1816 = vmatpush2.msra.mxu0 0.0
  %1817 = vmatprep.subr.mxu0 0.0
  %1818 = vmatpush2.msra.mxu0 0.0
  %1819 = vmatprep.subr.mxu0 0.0
  %1820 = vmatpush2.msra.mxu0 0.0
  %1821 = vmatprep.subr.mxu0 0.0
  %1822 = vmatpush2.msra.mxu0 0.0
  %1823 = vmatprep.subr.mxu0 0.0
  %1824 = vmatpush2.msra.mxu0 0.0
  %1825 = vmatprep.subr.mxu0 0.0
  %1826 = vmatpush2.msra.mxu0 0.0
  %1827 = vmatprep.subr.mxu0 0.0
  %1828 = vmatpush2.msra.mxu0 0.0
  %1829 = vmatprep.subr.mxu0 0.0
  %1830 = vmatpush2.msra.mxu0 0.0
  %1831 = vmatprep.subr.mxu0 0.0
  %1832 = vmatpush2.msra.mxu0 0.0
  %1833 = vmatprep.subr.mxu0 0.0
  %1834 = vmatpush2.msra.mxu0 0.0
  %1835 = vmatprep.subr.mxu0 0.0
  %1836 = vmatpush2.msra.mxu0 0.0
  %1837 = vmatprep.subr.mxu0 0.0
  %1838 = vmatpush2.msra.mxu0 0.0
  %1839 = vmatprep.subr.mxu0 0.0
  %1840 = vmatpush2.msra.mxu0 0.0
  %1841 = vmatprep.subr.mxu0 0.0
  %1842 = vmatpush2.msra.mxu0 0.0
  %1843 = vmatprep.mubr.f32.mxu0 0.0
  %1844 = vmatmul.mubr.f32.gmra.mxu0 %v1777
  %v1845 = vpop.f32.mrf.mxu0
  %v1846 = vadd.f32 %v1464, %v1845
  %v1847 = vpop.f32.mrf.mxu0
  %1848 = vdwg.mxu0
  %v1851 = vunpack.c.l.s4 1983009808
  %v1852 = vunpack.c.0.s8 %v1851
  %v1853 = vlaneseq
  %v1854 = vshrl.u32 %v1853, 7
  %v1855 = vsub.s32 %v1852, %v1854
  %v1856 = vrot.slane %v1846, %v1855
  %1857 = vrot.lane.b32.xlu0 %v1856, 96
  %v1858 = vpop.permute.xlu0 %1857
  %1860 = vst.msk [vmem:[#allocation3] sm:$0x3] %vm387, %v1858
  %v1861 = vxor.u32 %v1846, 2147483648
  %v1862 = vmul.f32 %v1861, 1.442695
  %v1863 = vpow.pop %v1862
  %v1864 = vadd.f32 %v1863, 1.0
  %v1865 = vrcp.pop %v1864
  %v1866 = vmul.f32 1.0, %v1865
  %v1867 = vmul.f32 %v1866, %v1469
  %1869 = vrot.lane.b32.xlu0 %v1867, 64
  %v1870 = vpop.permute.xlu0 %1869
  %v1872 = vadd.f32 %v1846, %v1870
  %v1873 = vtanh.pop %v1872
  %v1874 = vsub.f32 1.0, %v1866
  %1876 = vrot.lane.b32.xlu0 %v1873, 96
  %v1877 = vpop.permute.xlu0 %1876
  %v1879 = vmul.f32 %v1874, %v1877
  %1881 = vrot.lane.b32.xlu0 %v1879, 96
  %v1882 = vpop.permute.xlu0 %1881
  %v1883 = vsel %vm1376, %v1882, 0
  %1885 = vmatprep.subr.mxu0 0.0
  %1886 = vmatpush1.msra.mxu0 0.0
  %1887 = vmatprep.subr.mxu0 0.0
  %1888 = vmatpush1.msra.mxu0 0.0
  %1889 = vmatprep.subr.mxu0 0.0
  %1890 = vmatpush1.msra.mxu0 0.0
  %1891 = vmatprep.subr.mxu0 0.0
  %1892 = vmatpush1.msra.mxu0 0.0
  %1893 = vmatprep.subr.mxu0 0.0
  %1894 = vmatpush1.msra.mxu0 0.0
  %1895 = vmatprep.subr.mxu0 0.0
  %1896 = vmatpush1.msra.mxu0 0.0
  %1897 = vmatprep.subr.mxu0 0.0
  %1898 = vmatpush1.msra.mxu0 0.0
  %1899 = vmatprep.subr.mxu0 0.0
  %1900 = vmatpush1.msra.mxu0 0.0
  %1901 = vmatprep.subr.mxu0 0.0
  %1902 = vmatpush1.msra.mxu0 0.0
  %1903 = vmatprep.subr.mxu0 0.0
  %1904 = vmatpush1.msra.mxu0 0.0
  %1905 = vmatprep.subr.mxu0 0.0
  %1906 = vmatpush1.msra.mxu0 0.0
  %1907 = vmatprep.subr.mxu0 0.0
  %1908 = vmatpush1.msra.mxu0 0.0
  %1909 = vmatprep.subr.mxu0 0.0
  %1910 = vmatpush1.msra.mxu0 %v1459
  %1911 = vmatprep.subr.mxu0 0.0
  %1912 = vmatpush1.msra.mxu0 %v1458
  %1913 = vmatprep.subr.mxu0 0.0
  %1914 = vmatpush1.msra.mxu0 %v1457
  %1915 = vmatprep.subr.mxu0 0.0
  %1916 = vmatpush1.msra.mxu0 %v1456
  %1917 = vmatprep.subr.mxu0 0.0
  %1918 = vmatpush2.msra.mxu0 0.0
  %1919 = vmatprep.subr.mxu0 0.0
  %1920 = vmatpush2.msra.mxu0 0.0
  %1921 = vmatprep.subr.mxu0 0.0
  %1922 = vmatpush2.msra.mxu0 0.0
  %1923 = vmatprep.subr.mxu0 0.0
  %1924 = vmatpush2.msra.mxu0 0.0
  %1925 = vmatprep.subr.mxu0 0.0
  %1926 = vmatpush2.msra.mxu0 0.0
  %1927 = vmatprep.subr.mxu0 0.0
  %1928 = vmatpush2.msra.mxu0 0.0
  %1929 = vmatprep.subr.mxu0 0.0
  %1930 = vmatpush2.msra.mxu0 0.0
  %1931 = vmatprep.subr.mxu0 0.0
  %1932 = vmatpush2.msra.mxu0 0.0
  %1933 = vmatprep.subr.mxu0 0.0
  %1934 = vmatpush2.msra.mxu0 0.0
  %1935 = vmatprep.subr.mxu0 0.0
  %1936 = vmatpush2.msra.mxu0 0.0
  %1937 = vmatprep.subr.mxu0 0.0
  %1938 = vmatpush2.msra.mxu0 0.0
  %1939 = vmatprep.subr.mxu0 0.0
  %1940 = vmatpush2.msra.mxu0 0.0
  %1941 = vmatprep.subr.mxu0 0.0
  %1942 = vmatpush2.msra.mxu0 0.0
  %1943 = vmatprep.subr.mxu0 0.0
  %1944 = vmatpush2.msra.mxu0 0.0
  %1945 = vmatprep.subr.mxu0 0.0
  %1946 = vmatpush2.msra.mxu0 0.0
  %1947 = vmatprep.subr.mxu0 0.0
  %1948 = vmatpush2.msra.mxu0 0.0
  %1949 = vmatprep.mubr.f32.mxu0 0.0
  %1950 = vmatmul.mubr.f32.gmra.mxu0 %v1883
  %v1951 = vpop.f32.mrf.mxu0
  %v1952 = vadd.f32 %v1464, %v1951
  %v1953 = vpop.f32.mrf.mxu0
  %1954 = vdwg.mxu0
  %1955 = vst.msk [vmem:[#allocation3] sm:$0x3] %vm269, %v1952
  %v1956 = vxor.u32 %v1952, 2147483648
  %v1957 = vmul.f32 %v1956, 1.442695
  %v1958 = vpow.pop %v1957
  %v1959 = vadd.f32 %v1958, 1.0
  %v1960 = vrcp.pop %v1959
  %v1961 = vmul.f32 1.0, %v1960
  %v1962 = vmul.f32 %v1961, %v1469
  %1964 = vrot.lane.b32.xlu0 %v1962, 64
  %v1965 = vpop.permute.xlu0 %1964
  %v1967 = vadd.f32 %v1952, %v1965
  %v1968 = vtanh.pop %v1967
  %v1969 = vsub.f32 1.0, %v1961
  %1971 = vrot.lane.b32.xlu0 %v1968, 96
  %v1972 = vpop.permute.xlu0 %1971
  %v1974 = vmul.f32 %v1969, %v1972
  %1976 = vrot.lane.b32.xlu0 %v1974, 96
  %v1977 = vpop.permute.xlu0 %1976
  %v1978 = vsel %vm1376, %v1977, 0
  %1980 = vmatprep.subr.mxu0 0.0
  %1981 = vmatpush1.msra.mxu0 0.0
  %1982 = vmatprep.subr.mxu0 0.0
  %1983 = vmatpush1.msra.mxu0 0.0
  %1984 = vmatprep.subr.mxu0 0.0
  %1985 = vmatpush1.msra.mxu0 0.0
  %1986 = vmatprep.subr.mxu0 0.0
  %1987 = vmatpush1.msra.mxu0 0.0
  %1988 = vmatprep.subr.mxu0 0.0
  %1989 = vmatpush1.msra.mxu0 0.0
  %1990 = vmatprep.subr.mxu0 0.0
  %1991 = vmatpush1.msra.mxu0 0.0
  %1992 = vmatprep.subr.mxu0 0.0
  %1993 = vmatpush1.msra.mxu0 0.0
  %1994 = vmatprep.subr.mxu0 0.0
  %1995 = vmatpush1.msra.mxu0 0.0
  %1996 = vmatprep.subr.mxu0 0.0
  %1997 = vmatpush1.msra.mxu0 0.0
  %1998 = vmatprep.subr.mxu0 0.0
  %1999 = vmatpush1.msra.mxu0 0.0
  %2000 = vmatprep.subr.mxu0 0.0
  %2001 = vmatpush1.msra.mxu0 0.0
  %2002 = vmatprep.subr.mxu0 0.0
  %2003 = vmatpush1.msra.mxu0 0.0
  %2004 = vmatprep.subr.mxu0 0.0
  %2005 = vmatpush1.msra.mxu0 %v1459
  %2006 = vmatprep.subr.mxu0 0.0
  %2007 = vmatpush1.msra.mxu0 %v1458
  %2008 = vmatprep.subr.mxu0 0.0
  %2009 = vmatpush1.msra.mxu0 %v1457
  %2010 = vmatprep.subr.mxu0 0.0
  %2011 = vmatpush1.msra.mxu0 %v1456
  %2012 = vmatprep.subr.mxu0 0.0
  %2013 = vmatpush2.msra.mxu0 0.0
  %2014 = vmatprep.subr.mxu0 0.0
  %2015 = vmatpush2.msra.mxu0 0.0
  %2016 = vmatprep.subr.mxu0 0.0
  %2017 = vmatpush2.msra.mxu0 0.0
  %2018 = vmatprep.subr.mxu0 0.0
  %2019 = vmatpush2.msra.mxu0 0.0
  %2020 = vmatprep.subr.mxu0 0.0
  %2021 = vmatpush2.msra.mxu0 0.0
  %2022 = vmatprep.subr.mxu0 0.0
  %2023 = vmatpush2.msra.mxu0 0.0
  %2024 = vmatprep.subr.mxu0 0.0
  %2025 = vmatpush2.msra.mxu0 0.0
  %2026 = vmatprep.subr.mxu0 0.0
  %2027 = vmatpush2.msra.mxu0 0.0
  %2028 = vmatprep.subr.mxu0 0.0
  %2029 = vmatpush2.msra.mxu0 0.0
  %2030 = vmatprep.subr.mxu0 0.0
  %2031 = vmatpush2.msra.mxu0 0.0
  %2032 = vmatprep.subr.mxu0 0.0
  %2033 = vmatpush2.msra.mxu0 0.0
  %2034 = vmatprep.subr.mxu0 0.0
  %2035 = vmatpush2.msra.mxu0 0.0
  %2036 = vmatprep.subr.mxu0 0.0
  %2037 = vmatpush2.msra.mxu0 0.0
  %2038 = vmatprep.subr.mxu0 0.0
  %2039 = vmatpush2.msra.mxu0 0.0
  %2040 = vmatprep.subr.mxu0 0.0
  %2041 = vmatpush2.msra.mxu0 0.0
  %2042 = vmatprep.subr.mxu0 0.0
  %2043 = vmatpush2.msra.mxu0 0.0
  %2044 = vmatprep.mubr.f32.mxu0 0.0
  %2045 = vmatmul.mubr.f32.gmra.mxu0 %v1978
  %v2046 = vpop.f32.mrf.mxu0
  %v2047 = vadd.f32 %v1464, %v2046
  %v2048 = vpop.f32.mrf.mxu0
  %2049 = vdwg.mxu0
  %v2052 = vunpack.c.l.s4 1983009808
  %v2053 = vunpack.c.0.s8 %v2052
  %v2054 = vlaneseq
  %v2055 = vshrl.u32 %v2054, 7
  %v2056 = vsub.s32 %v2053, %v2055
  %v2057 = vrot.slane %v2047, %v2056
  %2058 = vrot.lane.b32.xlu0 %v2057, 32
  %v2059 = vpop.permute.xlu0 %2058
  %2061 = vst.msk [vmem:[#allocation3 + $0x2] sm:$0x3] %vm267, %v2059
  %v2062 = vxor.u32 %v2047, 2147483648
  %v2063 = vmul.f32 %v2062, 1.442695
  %v2064 = vpow.pop %v2063
  %v2065 = vadd.f32 %v2064, 1.0
  %v2066 = vrcp.pop %v2065
  %v2067 = vmul.f32 1.0, %v2066
  %v2068 = vmul.f32 %v2067, %v1469
  %2070 = vrot.lane.b32.xlu0 %v2068, 64
  %v2071 = vpop.permute.xlu0 %2070
  %v2073 = vadd.f32 %v2047, %v2071
  %v2074 = vtanh.pop %v2073
  %v2075 = vsub.f32 1.0, %v2067
  %2077 = vrot.lane.b32.xlu0 %v2074, 96
  %v2078 = vpop.permute.xlu0 %2077
  %v2080 = vmul.f32 %v2075, %v2078
  %2082 = vrot.lane.b32.xlu0 %v2080, 96
  %v2083 = vpop.permute.xlu0 %2082
  %v2084 = vsel %vm1376, %v2083, 0
  %2086 = vmatprep.subr.mxu0 0.0
  %2087 = vmatpush1.msra.mxu0 0.0
  %2088 = vmatprep.subr.mxu0 0.0
  %2089 = vmatpush1.msra.mxu0 0.0
  %2090 = vmatprep.subr.mxu0 0.0
  %2091 = vmatpush1.msra.mxu0 0.0
  %2092 = vmatprep.subr.mxu0 0.0
  %2093 = vmatpush1.msra.mxu0 0.0
  %2094 = vmatprep.subr.mxu0 0.0
  %2095 = vmatpush1.msra.mxu0 0.0
  %2096 = vmatprep.subr.mxu0 0.0
  %2097 = vmatpush1.msra.mxu0 0.0
  %2098 = vmatprep.subr.mxu0 0.0
  %2099 = vmatpush1.msra.mxu0 0.0
  %2100 = vmatprep.subr.mxu0 0.0
  %2101 = vmatpush1.msra.mxu0 0.0
  %2102 = vmatprep.subr.mxu0 0.0
  %2103 = vmatpush1.msra.mxu0 0.0
  %2104 = vmatprep.subr.mxu0 0.0
  %2105 = vmatpush1.msra.mxu0 0.0
  %2106 = vmatprep.subr.mxu0 0.0
  %2107 = vmatpush1.msra.mxu0 0.0
  %2108 = vmatprep.subr.mxu0 0.0
  %2109 = vmatpush1.msra.mxu0 0.0
  %2110 = vmatprep.subr.mxu0 0.0
  %2111 = vmatpush1.msra.mxu0 %v1459
  %2112 = vmatprep.subr.mxu0 0.0
  %2113 = vmatpush1.msra.mxu0 %v1458
  %2114 = vmatprep.subr.mxu0 0.0
  %2115 = vmatpush1.msra.mxu0 %v1457
  %2116 = vmatprep.subr.mxu0 0.0
  %2117 = vmatpush1.msra.mxu0 %v1456
  %2118 = vmatprep.subr.mxu0 0.0
  %2119 = vmatpush2.msra.mxu0 0.0
  %2120 = vmatprep.subr.mxu0 0.0
  %2121 = vmatpush2.msra.mxu0 0.0
  %2122 = vmatprep.subr.mxu0 0.0
  %2123 = vmatpush2.msra.mxu0 0.0
  %2124 = vmatprep.subr.mxu0 0.0
  %2125 = vmatpush2.msra.mxu0 0.0
  %2126 = vmatprep.subr.mxu0 0.0
  %2127 = vmatpush2.msra.mxu0 0.0
  %2128 = vmatprep.subr.mxu0 0.0
  %2129 = vmatpush2.msra.mxu0 0.0
  %2130 = vmatprep.subr.mxu0 0.0
  %2131 = vmatpush2.msra.mxu0 0.0
  %2132 = vmatprep.subr.mxu0 0.0
  %2133 = vmatpush2.msra.mxu0 0.0
  %2134 = vmatprep.subr.mxu0 0.0
  %2135 = vmatpush2.msra.mxu0 0.0
  %2136 = vmatprep.subr.mxu0 0.0
  %2137 = vmatpush2.msra.mxu0 0.0
  %2138 = vmatprep.subr.mxu0 0.0
  %2139 = vmatpush2.msra.mxu0 0.0
  %2140 = vmatprep.subr.mxu0 0.0
  %2141 = vmatpush2.msra.mxu0 0.0
  %2142 = vmatprep.subr.mxu0 0.0
  %2143 = vmatpush2.msra.mxu0 0.0
  %2144 = vmatprep.subr.mxu0 0.0
  %2145 = vmatpush2.msra.mxu0 0.0
  %2146 = vmatprep.subr.mxu0 0.0
  %2147 = vmatpush2.msra.mxu0 0.0
  %2148 = vmatprep.subr.mxu0 0.0
  %2149 = vmatpush2.msra.mxu0 0.0
  %2150 = vmatprep.mubr.f32.mxu0 0.0
  %2151 = vmatmul.mubr.f32.gmra.mxu0 %v2084
  %v2152 = vpop.f32.mrf.mxu0
  %v2153 = vadd.f32 %v1464, %v2152
  %v2154 = vpop.f32.mrf.mxu0
  %2155 = vdwg.mxu0
  %v2158 = vunpack.c.l.s4 1983009808
  %v2159 = vunpack.c.0.s8 %v2158
  %v2160 = vlaneseq
  %v2161 = vshrl.u32 %v2160, 7
  %v2162 = vsub.s32 %v2159, %v2161
  %v2163 = vrot.slane %v2153, %v2162
  %2164 = vrot.lane.b32.xlu0 %v2163, 64
  %v2165 = vpop.permute.xlu0 %2164
  %2167 = vst.msk [vmem:[#allocation3 + $0x2] sm:$0x3] %vm392, %v2165
  %v2168 = vxor.u32 %v2153, 2147483648
  %v2169 = vmul.f32 %v2168, 1.442695
  %v2170 = vpow.pop %v2169
  %v2171 = vadd.f32 %v2170, 1.0
  %v2172 = vrcp.pop %v2171
  %v2173 = vmul.f32 1.0, %v2172
  %v2174 = vmul.f32 %v2173, %v1469
  %2176 = vrot.lane.b32.xlu0 %v2174, 64
  %v2177 = vpop.permute.xlu0 %2176
  %v2179 = vadd.f32 %v2153, %v2177
  %v2180 = vtanh.pop %v2179
  %v2181 = vsub.f32 1.0, %v2173
  %2183 = vrot.lane.b32.xlu0 %v2180, 96
  %v2184 = vpop.permute.xlu0 %2183
  %v2186 = vmul.f32 %v2181, %v2184
  %2188 = vrot.lane.b32.xlu0 %v2186, 96
  %v2189 = vpop.permute.xlu0 %2188
  %v2190 = vsel %vm1376, %v2189, 0
  %2192 = vmatprep.subr.mxu0 0.0
  %2193 = vmatpush1.msra.mxu0 0.0
  %2194 = vmatprep.subr.mxu0 0.0
  %2195 = vmatpush1.msra.mxu0 0.0
  %2196 = vmatprep.subr.mxu0 0.0
  %2197 = vmatpush1.msra.mxu0 0.0
  %2198 = vmatprep.subr.mxu0 0.0
  %2199 = vmatpush1.msra.mxu0 0.0
  %2200 = vmatprep.subr.mxu0 0.0
  %2201 = vmatpush1.msra.mxu0 0.0
  %2202 = vmatprep.subr.mxu0 0.0
  %2203 = vmatpush1.msra.mxu0 0.0
  %2204 = vmatprep.subr.mxu0 0.0
  %2205 = vmatpush1.msra.mxu0 0.0
  %2206 = vmatprep.subr.mxu0 0.0
  %2207 = vmatpush1.msra.mxu0 0.0
  %2208 = vmatprep.subr.mxu0 0.0
  %2209 = vmatpush1.msra.mxu0 0.0
  %2210 = vmatprep.subr.mxu0 0.0
  %2211 = vmatpush1.msra.mxu0 0.0
  %2212 = vmatprep.subr.mxu0 0.0
  %2213 = vmatpush1.msra.mxu0 0.0
  %2214 = vmatprep.subr.mxu0 0.0
  %2215 = vmatpush1.msra.mxu0 0.0
  %2216 = vmatprep.subr.mxu0 0.0
  %2217 = vmatpush1.msra.mxu0 %v1459
  %2218 = vmatprep.subr.mxu0 0.0
  %2219 = vmatpush1.msra.mxu0 %v1458
  %2220 = vmatprep.subr.mxu0 0.0
  %2221 = vmatpush1.msra.mxu0 %v1457
  %2222 = vmatprep.subr.mxu0 0.0
  %2223 = vmatpush1.msra.mxu0 %v1456
  %2224 = vmatprep.subr.mxu0 0.0
  %2225 = vmatpush2.msra.mxu0 0.0
  %2226 = vmatprep.subr.mxu0 0.0
  %2227 = vmatpush2.msra.mxu0 0.0
  %2228 = vmatprep.subr.mxu0 0.0
  %2229 = vmatpush2.msra.mxu0 0.0
  %2230 = vmatprep.subr.mxu0 0.0
  %2231 = vmatpush2.msra.mxu0 0.0
  %2232 = vmatprep.subr.mxu0 0.0
  %2233 = vmatpush2.msra.mxu0 0.0
  %2234 = vmatprep.subr.mxu0 0.0
  %2235 = vmatpush2.msra.mxu0 0.0
  %2236 = vmatprep.subr.mxu0 0.0
  %2237 = vmatpush2.msra.mxu0 0.0
  %2238 = vmatprep.subr.mxu0 0.0
  %2239 = vmatpush2.msra.mxu0 0.0
  %2240 = vmatprep.subr.mxu0 0.0
  %2241 = vmatpush2.msra.mxu0 0.0
  %2242 = vmatprep.subr.mxu0 0.0
  %2243 = vmatpush2.msra.mxu0 0.0
  %2244 = vmatprep.subr.mxu0 0.0
  %2245 = vmatpush2.msra.mxu0 0.0
  %2246 = vmatprep.subr.mxu0 0.0
  %2247 = vmatpush2.msra.mxu0 0.0
  %2248 = vmatprep.subr.mxu0 0.0
  %2249 = vmatpush2.msra.mxu0 0.0
  %2250 = vmatprep.subr.mxu0 0.0
  %2251 = vmatpush2.msra.mxu0 0.0
  %2252 = vmatprep.subr.mxu0 0.0
  %2253 = vmatpush2.msra.mxu0 0.0
  %2254 = vmatprep.subr.mxu0 0.0
  %2255 = vmatpush2.msra.mxu0 0.0
  %2256 = vmatprep.mubr.f32.mxu0 0.0
  %2257 = vmatmul.mubr.f32.gmra.mxu0 %v2190
  %v2258 = vpop.f32.mrf.mxu0
  %v2259 = vadd.f32 %v1464, %v2258
  %v2260 = vpop.f32.mrf.mxu0
  %2261 = vdwg.mxu0
  %v2264 = vunpack.c.l.s4 1983009808
  %v2265 = vunpack.c.0.s8 %v2264
  %v2266 = vlaneseq
  %v2267 = vshrl.u32 %v2266, 7
  %v2268 = vsub.s32 %v2265, %v2267
  %v2269 = vrot.slane %v2259, %v2268
  %2270 = vrot.lane.b32.xlu0 %v2269, 96
  %v2271 = vpop.permute.xlu0 %2270
  %2273 = vst.msk [vmem:[#allocation3 + $0x2] sm:$0x3] %vm387, %v2271
  %v2274 = vxor.u32 %v2259, 2147483648
  %v2275 = vmul.f32 %v2274, 1.442695
  %v2276 = vpow.pop %v2275
  %v2277 = vadd.f32 %v2276, 1.0
  %v2278 = vrcp.pop %v2277
  %v2279 = vmul.f32 1.0, %v2278
  %v2280 = vmul.f32 %v2279, %v1469
  %2282 = vrot.lane.b32.xlu0 %v2280, 64
  %v2283 = vpop.permute.xlu0 %2282
  %v2285 = vadd.f32 %v2259, %v2283
  %v2286 = vtanh.pop %v2285
  %v2287 = vsub.f32 1.0, %v2279
  %2289 = vrot.lane.b32.xlu0 %v2286, 96
  %v2290 = vpop.permute.xlu0 %2289
  %v2292 = vmul.f32 %v2287, %v2290
  %2294 = vrot.lane.b32.xlu0 %v2292, 96
  %v2295 = vpop.permute.xlu0 %2294
  %v2296 = vsel %vm1376, %v2295, 0
  %2298 = vmatprep.subr.mxu0 0.0
  %2299 = vmatpush1.msra.mxu0 0.0
  %2300 = vmatprep.subr.mxu0 0.0
  %2301 = vmatpush1.msra.mxu0 0.0
  %2302 = vmatprep.subr.mxu0 0.0
  %2303 = vmatpush1.msra.mxu0 0.0
  %2304 = vmatprep.subr.mxu0 0.0
  %2305 = vmatpush1.msra.mxu0 0.0
  %2306 = vmatprep.subr.mxu0 0.0
  %2307 = vmatpush1.msra.mxu0 0.0
  %2308 = vmatprep.subr.mxu0 0.0
  %2309 = vmatpush1.msra.mxu0 0.0
  %2310 = vmatprep.subr.mxu0 0.0
  %2311 = vmatpush1.msra.mxu0 0.0
  %2312 = vmatprep.subr.mxu0 0.0
  %2313 = vmatpush1.msra.mxu0 0.0
  %2314 = vmatprep.subr.mxu0 0.0
  %2315 = vmatpush1.msra.mxu0 0.0
  %2316 = vmatprep.subr.mxu0 0.0
  %2317 = vmatpush1.msra.mxu0 0.0
  %2318 = vmatprep.subr.mxu0 0.0
  %2319 = vmatpush1.msra.mxu0 0.0
  %2320 = vmatprep.subr.mxu0 0.0
  %2321 = vmatpush1.msra.mxu0 0.0
  %2322 = vmatprep.subr.mxu0 0.0
  %2323 = vmatpush1.msra.mxu0 %v1459
  %2324 = vmatprep.subr.mxu0 0.0
  %2325 = vmatpush1.msra.mxu0 %v1458
  %2326 = vmatprep.subr.mxu0 0.0
  %2327 = vmatpush1.msra.mxu0 %v1457
  %2328 = vmatprep.subr.mxu0 0.0
  %2329 = vmatpush1.msra.mxu0 %v1456
  %2330 = vmatprep.subr.mxu0 0.0
  %2331 = vmatpush2.msra.mxu0 0.0
  %2332 = vmatprep.subr.mxu0 0.0
  %2333 = vmatpush2.msra.mxu0 0.0
  %2334 = vmatprep.subr.mxu0 0.0
  %2335 = vmatpush2.msra.mxu0 0.0
  %2336 = vmatprep.subr.mxu0 0.0
  %2337 = vmatpush2.msra.mxu0 0.0
  %2338 = vmatprep.subr.mxu0 0.0
  %2339 = vmatpush2.msra.mxu0 0.0
  %2340 = vmatprep.subr.mxu0 0.0
  %2341 = vmatpush2.msra.mxu0 0.0
  %2342 = vmatprep.subr.mxu0 0.0
  %2343 = vmatpush2.msra.mxu0 0.0
  %2344 = vmatprep.subr.mxu0 0.0
  %2345 = vmatpush2.msra.mxu0 0.0
  %2346 = vmatprep.subr.mxu0 0.0
  %2347 = vmatpush2.msra.mxu0 0.0
  %2348 = vmatprep.subr.mxu0 0.0
  %2349 = vmatpush2.msra.mxu0 0.0
  %2350 = vmatprep.subr.mxu0 0.0
  %2351 = vmatpush2.msra.mxu0 0.0
  %2352 = vmatprep.subr.mxu0 0.0
  %2353 = vmatpush2.msra.mxu0 0.0
  %2354 = vmatprep.subr.mxu0 0.0
  %2355 = vmatpush2.msra.mxu0 0.0
  %2356 = vmatprep.subr.mxu0 0.0
  %2357 = vmatpush2.msra.mxu0 0.0
  %2358 = vmatprep.subr.mxu0 0.0
  %2359 = vmatpush2.msra.mxu0 0.0
  %2360 = vmatprep.subr.mxu0 0.0
  %2361 = vmatpush2.msra.mxu0 0.0
  %2362 = vmatprep.mubr.f32.mxu0 0.0
  %2363 = vmatmul.mubr.f32.gmra.mxu0 %v2296
  %v2364 = vpop.f32.mrf.mxu0
  %v2365 = vadd.f32 0.0, %v2364
  %v2366 = vpop.f32.mrf.mxu0
  %2367 = vdwg.mxu0
  %2368 = vst.msk [vmem:[#allocation3 + $0x2] sm:$0x3] %vm269, %v2365
  %s2369 = scalar_lea.vmem %s3, 257
  %v2370 = vld [vmem:[%s2369] ss:$8 sm:$0x3]
  %v2372 = vlaneseq
  %v2373 = vshrl.u32 %v2372, 7
  %v2374 = vsub.s32 0, %v2373
  %v2375 = vrot.slane %v2370, %v2374
  %v2376 = vlaneseq
  %v2377 = vshrl.u32 %v2376, 7
  %v2378 = vsub.s32 1, %v2377
  %v2379 = vrot.slane %v2370, %v2378
  %v2380 = vld [vmem:[#allocation3] sm:$0xf]
  %v2381 = vcombine.low %v2375, %v2379
  %v2383 = vunpack.c.l.s4 1983009808
  %v2384 = vunpack.c.0.s8 %v2383
  %v2385 = vlaneseq
  %v2386 = vshrl.u32 %v2385, 7
  %v2387 = vsub.s32 %v2384, %v2386
  %v2388 = vrot.slane %v2381, %v2387
  %v2390 = vadd.f32 %v2380, %v2388
  %v2391 = vxor.u32 %v2390, 2147483648
  %v2392 = vmul.f32 %v2391, 1.442695
  %v2393 = vpow.pop %v2392
  %v2394 = vadd.f32 %v2393, 1.0
  %v2395 = vrcp.pop %v2394
  %v2396 = vmul.f32 1.0, %v2395
  %2397 = vst [vmem:[%s7] sm:$0xf] %v2396
  %2398 = vrot.lane.b32.xlu0 %v1359, 64
  %v2399 = vpop.permute.xlu0 %2398
  %v2401 = vsel %vm75, %v1347, %v2399
  %vm2402 = vcmask 785408
  %v2403 = vsel %vm2402, %v2401, 0.0
  %2404 = vst [vmem:[%s8] sm:$0x3] %v2403
  // Predicated region
  $region30: #{vae_jazz_forward.1} parent=0 // pred_check
    _
  $region31: #{vae_jazz_forward.1} parent=0 // pred_check_branch
    %2406 = sbr.rel (0) target = $region33
  $region32: #{vae_jazz_forward.1} parent=0 // pred_region
    _
  $region33: #{vae_jazz_forward.1} parent=0 // pred_fallthru
    _
  // Predicated region
  $region34: #{vae_jazz_forward.1} parent=0 // pred_check
    _
  $region35: #{vae_jazz_forward.1} parent=0 // pred_check_branch
    %2408 = sbr.rel (0) target = $region37
  $region36: #{vae_jazz_forward.1} parent=0 // pred_region
    _
  $region37: #{vae_jazz_forward.1} parent=0 // pred_fallthru
    _
  // Predicated region
  $region38: #{vae_jazz_forward.1} parent=0 // pred_check
    _
  $region39: #{vae_jazz_forward.1} parent=0 // pred_check_branch
    %2410 = sbr.rel (0) target = $region41
  $region40: #{vae_jazz_forward.1} parent=0 // pred_region
    _
  $region41: #{vae_jazz_forward.1} parent=0 // pred_fallthru
    _
  // Predicated region
  $region42: #{vae_jazz_forward.1} parent=0 // pred_check
    _
  $region43: #{vae_jazz_forward.1} parent=0 // pred_check_branch
    %2412 = sbr.rel (0) target = $region45
  $region44: #{vae_jazz_forward.1} parent=0 // pred_region
    _
  $region45: #{vae_jazz_forward.1} parent=0 // pred_fallthru
    _

</llo_original>
